<compile_context>
chip_gen: v5e
topology: v5e:2x2
jax: 0.10.0
libtpu: 0.0.40
codegen_flags: <defaults>
</compile_context>

<pallas_src>
import jax
import jax.numpy as jnp
from jax.experimental import pallas as pl
from jax.experimental.pallas import tpu as pltpu


def _double_conv_kernel(x_ref, w1_ref, b1_ref, w2_ref, b2_ref, o_ref,
                        xpad_ref, ypad_ref):
    # x_ref  : (1, H, W, Cin)        bf16 input tile (one batch element, NHWC)
    # w1_ref : (9*Cin, Cm)           bf16, rows ordered (kh, kw, ci)
    # b1_ref : (1, Cm)               f32
    # w2_ref : (9*Cm, Co)            bf16, rows ordered (kh, kw, cm)
    # b2_ref : (1, Co)               f32
    # o_ref  : (1, H, W, Co)         f32 output tile
    # xpad_ref: (H+2, W+2, Cin) f32 scratch, ypad_ref: (H+2, W+2, Cm) f32 scratch
    H, W, Cin = x_ref.shape[1], x_ref.shape[2], x_ref.shape[3]
    Cm = w1_ref.shape[1]
    Co = w2_ref.shape[1]

    # ---- stage 1: conv3x3 (padding done in VMEM, no HBM pre-pad) + ReLU ----
    xpad_ref[...] = jnp.zeros_like(xpad_ref)
    xpad_ref[1:H + 1, 1:W + 1, :] = x_ref[0].astype(xpad_ref.dtype)

    acc1 = jnp.zeros((H * W, Cm), jnp.float32)
    for t in range(9):                      # 9-tap accumulate, no im2col tensor
        kh, kw = t // 3, t % 3
        p = xpad_ref[kh:kh + H, kw:kw + W, :].reshape(H * W, Cin)
        acc1 = acc1 + jnp.dot(p.astype(jnp.bfloat16),
                              w1_ref[t * Cin:(t + 1) * Cin, :],
                              preferred_element_type=jnp.float32)
    y = jnp.maximum(acc1 + b1_ref[...], 0.0)        # f32 bias + ReLU

    # ---- intermediate stays on-chip: write into padded VMEM scratch ----
    ypad_ref[...] = jnp.zeros_like(ypad_ref)
    ypad_ref[1:H + 1, 1:W + 1, :] = y.reshape(H, W, Cm)

    # ---- stage 2: conv3x3 (pad=1) + ReLU ----
    acc2 = jnp.zeros((H * W, Co), jnp.float32)
    for t in range(9):
        kh, kw = t // 3, t % 3
        p = ypad_ref[kh:kh + H, kw:kw + W, :].reshape(H * W, Cm)
        acc2 = acc2 + jnp.dot(p.astype(jnp.bfloat16),
                              w2_ref[t * Cm:(t + 1) * Cm, :],
                              preferred_element_type=jnp.float32)
    out = jnp.maximum(acc2 + b2_ref[...], 0.0)
    o_ref[...] = out.reshape(1, H, W, Co).astype(o_ref.dtype)


def _round_up(v, m):
    return ((v + m - 1) // m) * m


def _flatten_w1(w, cm_pad):
    # torch (Cmid, Cin, 3, 3) -> (9*Cin, Cm_pad), rows ordered (kh, kw, ci).
    cmid, cin = w.shape[0], w.shape[1]
    wf = jnp.transpose(w, (2, 3, 1, 0)).reshape(9 * cin, cmid)
    return jnp.pad(wf, ((0, 0), (0, cm_pad - cmid)))


def _flatten_w2(w, cm_pad, co_pad):
    # torch (Cout, Cmid, 3, 3) -> (9*Cm_pad, Co_pad); each tap owns a Cm_pad row block.
    cout, cmid = w.shape[0], w.shape[1]
    wf = jnp.transpose(w, (2, 3, 1, 0))                      # (3, 3, Cmid, Cout)
    wf = jnp.pad(wf, ((0, 0), (0, 0), (0, cm_pad - cmid), (0, co_pad - cout)))
    return wf.reshape(9 * cm_pad, co_pad)


def double_conv(x_nchw, params):
    """Forward pass equivalent to DoubleConv.forward. Input/output are NCHW."""
    N, Cin, H, W = x_nchw.shape
    Cmid = params["b1"].shape[0]
    Cout = params["b2"].shape[0]
    Cm = _round_up(Cmid, 128)   # lane-dense intermediate / matmul N-dim
    Co = _round_up(Cout, 128)   # lane-dense output store

    # NCHW -> NHWC + bf16 cast (halves input DMA bytes); a fully-NHWC pipeline would
    # drop the transposes entirely.
    x = jnp.transpose(x_nchw, (0, 2, 3, 1)).astype(jnp.bfloat16)
    w1 = _flatten_w1(params["w1"], Cm).astype(jnp.bfloat16)
    w2 = _flatten_w2(params["w2"], Cm, Co).astype(jnp.bfloat16)
    b1 = jnp.pad(params["b1"], (0, Cm - Cmid)).reshape(1, Cm).astype(jnp.float32)
    b2 = jnp.pad(params["b2"], (0, Co - Cout)).reshape(1, Co).astype(jnp.float32)

    out = pl.pallas_call(
        _double_conv_kernel,
        out_shape=jax.ShapeDtypeStruct((N, H, W, Co), jnp.float32),
        grid_spec=pltpu.PrefetchScalarGridSpec(
            num_scalar_prefetch=0,
            grid=(N,),
            in_specs=[
                pl.BlockSpec((1, H, W, Cin), lambda n: (n, 0, 0, 0)),
                pl.BlockSpec((9 * Cin, Cm), lambda n: (0, 0)),
                pl.BlockSpec((1, Cm), lambda n: (0, 0)),
                pl.BlockSpec((9 * Cm, Co), lambda n: (0, 0)),
                pl.BlockSpec((1, Co), lambda n: (0, 0)),
            ],
            out_specs=pl.BlockSpec((1, H, W, Co), lambda n: (n, 0, 0, 0)),
            scratch_shapes=[
                pltpu.VMEM((H + 2, W + 2, Cin), jnp.float32),  # padded input tile
                pltpu.VMEM((H + 2, W + 2, Cm), jnp.float32),   # fused intermediate
            ],
        ),
        compiler_params=pltpu.CompilerParams(
            dimension_semantics=("parallel",),
            vmem_limit_bytes=64 * 1024 * 1024,
        ),
    )(x, w1, b1, w2, b2)

    # drop channel padding, back to NCHW (cheap at these sizes)
    return jnp.transpose(out[..., :Cout], (0, 3, 1, 2))


def init_double_conv_params(key, in_channels, out_channels):
    """Deterministic synthetic init mirroring the nn.Conv2d shapes."""
    k1, k2, k3, k4 = jax.random.split(key, 4)
    s1 = 1.0 / (in_channels * 9) ** 0.5
    s2 = 1.0 / (out_channels * 9) ** 0.5
    w1 = jax.random.uniform(k1, (out_channels, in_channels, 3, 3), jnp.float32, -s1, s1)
    b1 = jax.random.uniform(k2, (out_channels,), jnp.float32, -s1, s1)
    w2 = jax.random.uniform(k3, (out_channels, out_channels, 3, 3), jnp.float32, -s2, s2)
    b2 = jax.random.uniform(k4, (out_channels,), jnp.float32, -s2, s2)
    return {"w1": w1, "b1": b1, "w2": w2, "b2": b2}


def _reference_double_conv(x_nchw, params):
    """Pure-JAX reference with the same bf16 rounding of matmul operands as the kernel."""
    def r(t):
        return t.astype(jnp.bfloat16).astype(jnp.float32)

    def conv_relu(z, w, b):
        y = jax.lax.conv_general_dilated(
            r(z), r(w), window_strides=(1, 1), padding=((1, 1), (1, 1)),
            dimension_numbers=("NCHW", "OIHW", "NCHW"))
        return jnp.maximum(y + b.reshape(1, -1, 1, 1), 0.0)

    return conv_relu(conv_relu(x_nchw, params["w1"], params["b1"]),
                     params["w2"], params["b2"])


if __name__ == "__main__":
    key = jax.random.PRNGKey(0)
    kx, kp = jax.random.split(key)

    N, Cin, H, W = 2, 4, 16, 16
    Cout = 8

    x = jax.random.normal(kx, (N, Cin, H, W), dtype=jnp.float32)
    params = init_double_conv_params(kp, Cin, Cout)

    out = jax.block_until_ready(double_conv(x, params))
    ref = jax.block_until_ready(_reference_double_conv(x, params))

    assert out.shape == (N, Cout, H, W), out.shape
    assert bool(jnp.all(out >= 0.0))                       # ReLU output is non-negative
    max_err = float(jnp.max(jnp.abs(out - ref)))
    assert max_err < 5e-3, f"max abs error vs reference: {max_err}"
    print("KERNEL_OK")
</pallas_src>

<mosaic_0001>
module attributes {stable_mosaic.version = 11 : i64} {
  func.func @_double_conv_kernel(%arg0: i32, %arg1: memref<1x16x16x4xbf16, #tpu.memory_space<vmem>>, %arg2: memref<36x128xbf16, #tpu.memory_space<vmem>>, %arg3: memref<1x128xf32, #tpu.memory_space<vmem>>, %arg4: memref<1152x128xbf16, #tpu.memory_space<vmem>>, %arg5: memref<1x128xf32, #tpu.memory_space<vmem>>, %arg6: memref<1x16x16x128xf32, #tpu.memory_space<vmem>>, %arg7: memref<18x18x4xf32, #tpu.memory_space<vmem>>, %arg8: memref<18x18x128xf32, #tpu.memory_space<vmem>>) attributes {dimension_semantics = [#tpu.dimension_semantics<parallel>], iteration_bounds = array<i64: 2>, scalar_prefetch = 0 : i64, scratch_operands = 2 : i64, tpu.core_type = #tpu.core_type<tc>, window_params = [{transform_indices = @transform_0, window_bounds = array<i64: 1, 16, 16, 4>}, {pipeline_mode = #tpu.pipeline_mode<synchronous>, transform_indices = @transform_1, window_bounds = array<i64: 36, 128>}, {pipeline_mode = #tpu.pipeline_mode<synchronous>, transform_indices = @transform_2, window_bounds = array<i64: 1, 128>}, {pipeline_mode = #tpu.pipeline_mode<synchronous>, transform_indices = @transform_3, window_bounds = array<i64: 1152, 128>}, {pipeline_mode = #tpu.pipeline_mode<synchronous>, transform_indices = @transform_4, window_bounds = array<i64: 1, 128>}, {transform_indices = @transform_5, window_bounds = array<i64: 1, 16, 16, 128>}]} {
    %cst = arith.constant 0.000000e+00 : f32
    %0 = vector.broadcast %cst : f32 to vector<18x18x4xf32>
    %c0 = arith.constant 0 : index
    %c0_0 = arith.constant 0 : index
    %c0_1 = arith.constant 0 : index
    %1 = vector.load %arg7[%c0, %c0_0, %c0_1] : memref<18x18x4xf32, #tpu.memory_space<vmem>>, vector<18x18x4xf32>
    tpu.vector_store %arg7[%c0, %c0_0, %c0_1], %0 {strides = array<i32>} : memref<18x18x4xf32, #tpu.memory_space<vmem>>, vector<18x18x4xf32>,
    %c0_2 = arith.constant 0 : index
    %c0_3 = arith.constant 0 : index
    %c0_4 = arith.constant 0 : index
    %c0_5 = arith.constant 0 : index
    %2 = vector.load %arg1[%c0_2, %c0_3, %c0_4, %c0_5] : memref<1x16x16x4xbf16, #tpu.memory_space<vmem>>, vector<1x16x16x4xbf16>
    %3 = vector.shape_cast %2 : vector<1x16x16x4xbf16> to vector<16x16x4xbf16>
    %4 = arith.extf %3 : vector<16x16x4xbf16> to vector<16x16x4xf32>
    %c1 = arith.constant 1 : index
    %c1_6 = arith.constant 1 : index
    %c0_7 = arith.constant 0 : index
    %5 = vector.load %arg7[%c1, %c1_6, %c0_7] : memref<18x18x4xf32, #tpu.memory_space<vmem>>, vector<16x16x4xf32>
    tpu.vector_store %arg7[%c1, %c1_6, %c0_7], %4 {strides = array<i32>} : memref<18x18x4xf32, #tpu.memory_space<vmem>>, vector<16x16x4xf32>,
    %cst_8 = arith.constant 0.000000e+00 : f32
    %6 = vector.broadcast %cst_8 : f32 to vector<256x128xf32>
    %c0_9 = arith.constant 0 : index
    %c0_10 = arith.constant 0 : index
    %c0_11 = arith.constant 0 : index
    %7 = vector.load %arg7[%c0_9, %c0_10, %c0_11] : memref<18x18x4xf32, #tpu.memory_space<vmem>>, vector<16x16x4xf32>
    %8 = vector.shape_cast %7 : vector<16x16x4xf32> to vector<256x4xf32>
    %9 = arith.truncf %8 : vector<256x4xf32> to vector<256x4xbf16>
    %c0_12 = arith.constant 0 : index
    %c0_13 = arith.constant 0 : index
    %10 = vector.load %arg2[%c0_12, %c0_13] : memref<36x128xbf16, #tpu.memory_space<vmem>>, vector<4x128xbf16>
    %cst_14 = arith.constant dense<0.000000e+00> : vector<256x128xf32>
    %11 = tpu.matmul %9, %10, %cst_14 {dimension_numbers = #tpu.dot_dimension_numbers<[1], [0], [0], [1], [0, 0, 1, 1], [], []>} : vector<256x4xbf16>, vector<4x128xbf16>, vector<256x128xf32> -> vector<256x128xf32>
    %12 = arith.addf %6, %11 : vector<256x128xf32>
    %c0_15 = arith.constant 0 : index
    %c1_16 = arith.constant 1 : index
    %c0_17 = arith.constant 0 : index
    %13 = vector.load %arg7[%c0_15, %c1_16, %c0_17] : memref<18x18x4xf32, #tpu.memory_space<vmem>>, vector<16x16x4xf32>
    %14 = vector.shape_cast %13 : vector<16x16x4xf32> to vector<256x4xf32>
    %15 = arith.truncf %14 : vector<256x4xf32> to vector<256x4xbf16>
    %c4 = arith.constant 4 : index
    %c0_18 = arith.constant 0 : index
    %16 = vector.load %arg2[%c4, %c0_18] : memref<36x128xbf16, #tpu.memory_space<vmem>>, vector<4x128xbf16>
    %cst_19 = arith.constant dense<0.000000e+00> : vector<256x128xf32>
    %17 = tpu.matmul %15, %16, %cst_19 {dimension_numbers = #tpu.dot_dimension_numbers<[1], [0], [0], [1], [0, 0, 1, 1], [], []>} : vector<256x4xbf16>, vector<4x128xbf16>, vector<256x128xf32> -> vector<256x128xf32>
    %18 = arith.addf %12, %17 : vector<256x128xf32>
    %c0_20 = arith.constant 0 : index
    %c2 = arith.constant 2 : index
    %c0_21 = arith.constant 0 : index
    %19 = vector.load %arg7[%c0_20, %c2, %c0_21] : memref<18x18x4xf32, #tpu.memory_space<vmem>>, vector<16x16x4xf32>
    %20 = vector.shape_cast %19 : vector<16x16x4xf32> to vector<256x4xf32>
    %21 = arith.truncf %20 : vector<256x4xf32> to vector<256x4xbf16>
    %c8 = arith.constant 8 : index
    %c0_22 = arith.constant 0 : index
    %22 = vector.load %arg2[%c8, %c0_22] : memref<36x128xbf16, #tpu.memory_space<vmem>>, vector<4x128xbf16>
    %cst_23 = arith.constant dense<0.000000e+00> : vector<256x128xf32>
    %23 = tpu.matmul %21, %22, %cst_23 {dimension_numbers = #tpu.dot_dimension_numbers<[1], [0], [0], [1], [0, 0, 1, 1], [], []>} : vector<256x4xbf16>, vector<4x128xbf16>, vector<256x128xf32> -> vector<256x128xf32>
    %24 = arith.addf %18, %23 : vector<256x128xf32>
    %c1_24 = arith.constant 1 : index
    %c0_25 = arith.constant 0 : index
    %c0_26 = arith.constant 0 : index
    %25 = vector.load %arg7[%c1_24, %c0_25, %c0_26] : memref<18x18x4xf32, #tpu.memory_space<vmem>>, vector<16x16x4xf32>
    %26 = vector.shape_cast %25 : vector<16x16x4xf32> to vector<256x4xf32>
    %27 = arith.truncf %26 : vector<256x4xf32> to vector<256x4xbf16>
    %c12 = arith.constant 12 : index
    %c0_27 = arith.constant 0 : index
    %28 = vector.load %arg2[%c12, %c0_27] : memref<36x128xbf16, #tpu.memory_space<vmem>>, vector<4x128xbf16>
    %cst_28 = arith.constant dense<0.000000e+00> : vector<256x128xf32>
    %29 = tpu.matmul %27, %28, %cst_28 {dimension_numbers = #tpu.dot_dimension_numbers<[1], [0], [0], [1], [0, 0, 1, 1], [], []>} : vector<256x4xbf16>, vector<4x128xbf16>, vector<256x128xf32> -> vector<256x128xf32>
    %30 = arith.addf %24, %29 : vector<256x128xf32>
    %c1_29 = arith.constant 1 : index
    %c1_30 = arith.constant 1 : index
    %c0_31 = arith.constant 0 : index
    %31 = vector.load %arg7[%c1_29, %c1_30, %c0_31] : memref<18x18x4xf32, #tpu.memory_space<vmem>>, vector<16x16x4xf32>
    %32 = vector.shape_cast %31 : vector<16x16x4xf32> to vector<256x4xf32>
    %33 = arith.truncf %32 : vector<256x4xf32> to vector<256x4xbf16>
    %c16 = arith.constant 16 : index
    %c0_32 = arith.constant 0 : index
    %34 = vector.load %arg2[%c16, %c0_32] : memref<36x128xbf16, #tpu.memory_space<vmem>>, vector<4x128xbf16>
    %cst_33 = arith.constant dense<0.000000e+00> : vector<256x128xf32>
    %35 = tpu.matmul %33, %34, %cst_33 {dimension_numbers = #tpu.dot_dimension_numbers<[1], [0], [0], [1], [0, 0, 1, 1], [], []>} : vector<256x4xbf16>, vector<4x128xbf16>, vector<256x128xf32> -> vector<256x128xf32>
    %36 = arith.addf %30, %35 : vector<256x128xf32>
    %c1_34 = arith.constant 1 : index
    %c2_35 = arith.constant 2 : index
    %c0_36 = arith.constant 0 : index
    %37 = vector.load %arg7[%c1_34, %c2_35, %c0_36] : memref<18x18x4xf32, #tpu.memory_space<vmem>>, vector<16x16x4xf32>
    %38 = vector.shape_cast %37 : vector<16x16x4xf32> to vector<256x4xf32>
    %39 = arith.truncf %38 : vector<256x4xf32> to vector<256x4xbf16>
    %c20 = arith.constant 20 : index
    %c0_37 = arith.constant 0 : index
    %40 = vector.load %arg2[%c20, %c0_37] : memref<36x128xbf16, #tpu.memory_space<vmem>>, vector<4x128xbf16>
    %cst_38 = arith.constant dense<0.000000e+00> : vector<256x128xf32>
    %41 = tpu.matmul %39, %40, %cst_38 {dimension_numbers = #tpu.dot_dimension_numbers<[1], [0], [0], [1], [0, 0, 1, 1], [], []>} : vector<256x4xbf16>, vector<4x128xbf16>, vector<256x128xf32> -> vector<256x128xf32>
    %42 = arith.addf %36, %41 : vector<256x128xf32>
    %c2_39 = arith.constant 2 : index
    %c0_40 = arith.constant 0 : index
    %c0_41 = arith.constant 0 : index
    %43 = vector.load %arg7[%c2_39, %c0_40, %c0_41] : memref<18x18x4xf32, #tpu.memory_space<vmem>>, vector<16x16x4xf32>
    %44 = vector.shape_cast %43 : vector<16x16x4xf32> to vector<256x4xf32>
    %45 = arith.truncf %44 : vector<256x4xf32> to vector<256x4xbf16>
    %c24 = arith.constant 24 : index
    %c0_42 = arith.constant 0 : index
    %46 = vector.load %arg2[%c24, %c0_42] : memref<36x128xbf16, #tpu.memory_space<vmem>>, vector<4x128xbf16>
    %cst_43 = arith.constant dense<0.000000e+00> : vector<256x128xf32>
    %47 = tpu.matmul %45, %46, %cst_43 {dimension_numbers = #tpu.dot_dimension_numbers<[1], [0], [0], [1], [0, 0, 1, 1], [], []>} : vector<256x4xbf16>, vector<4x128xbf16>, vector<256x128xf32> -> vector<256x128xf32>
    %48 = arith.addf %42, %47 : vector<256x128xf32>
    %c2_44 = arith.constant 2 : index
    %c1_45 = arith.constant 1 : index
    %c0_46 = arith.constant 0 : index
    %49 = vector.load %arg7[%c2_44, %c1_45, %c0_46] : memref<18x18x4xf32, #tpu.memory_space<vmem>>, vector<16x16x4xf32>
    %50 = vector.shape_cast %49 : vector<16x16x4xf32> to vector<256x4xf32>
    %51 = arith.truncf %50 : vector<256x4xf32> to vector<256x4xbf16>
    %c28 = arith.constant 28 : index
    %c0_47 = arith.constant 0 : index
    %52 = vector.load %arg2[%c28, %c0_47] : memref<36x128xbf16, #tpu.memory_space<vmem>>, vector<4x128xbf16>
    %cst_48 = arith.constant dense<0.000000e+00> : vector<256x128xf32>
    %53 = tpu.matmul %51, %52, %cst_48 {dimension_numbers = #tpu.dot_dimension_numbers<[1], [0], [0], [1], [0, 0, 1, 1], [], []>} : vector<256x4xbf16>, vector<4x128xbf16>, vector<256x128xf32> -> vector<256x128xf32>
    %54 = arith.addf %48, %53 : vector<256x128xf32>
    %c2_49 = arith.constant 2 : index
    %c2_50 = arith.constant 2 : index
    %c0_51 = arith.constant 0 : index
    %55 = vector.load %arg7[%c2_49, %c2_50, %c0_51] : memref<18x18x4xf32, #tpu.memory_space<vmem>>, vector<16x16x4xf32>
    %56 = vector.shape_cast %55 : vector<16x16x4xf32> to vector<256x4xf32>
    %57 = arith.truncf %56 : vector<256x4xf32> to vector<256x4xbf16>
    %c32 = arith.constant 32 : index
    %c0_52 = arith.constant 0 : index
    %58 = vector.load %arg2[%c32, %c0_52] : memref<36x128xbf16, #tpu.memory_space<vmem>>, vector<4x128xbf16>
    %cst_53 = arith.constant dense<0.000000e+00> : vector<256x128xf32>
    %59 = tpu.matmul %57, %58, %cst_53 {dimension_numbers = #tpu.dot_dimension_numbers<[1], [0], [0], [1], [0, 0, 1, 1], [], []>} : vector<256x4xbf16>, vector<4x128xbf16>, vector<256x128xf32> -> vector<256x128xf32>
    %60 = arith.addf %54, %59 : vector<256x128xf32>
    %c0_54 = arith.constant 0 : index
    %c0_55 = arith.constant 0 : index
    %61 = vector.load %arg3[%c0_54, %c0_55] : memref<1x128xf32, #tpu.memory_space<vmem>>, vector<1x128xf32>
    %62 = vector.broadcast %61 : vector<1x128xf32> to vector<256x128xf32>
    %63 = arith.addf %60, %62 : vector<256x128xf32>
    %cst_56 = arith.constant 0.000000e+00 : f32
    %64 = vector.broadcast %cst_56 : f32 to vector<256x128xf32>
    %65 = arith.maximumf %63, %64 : vector<256x128xf32>
    %cst_57 = arith.constant 0.000000e+00 : f32
    %66 = vector.broadcast %cst_57 : f32 to vector<18x18x128xf32>
    %c0_58 = arith.constant 0 : index
    %c0_59 = arith.constant 0 : index
    %c0_60 = arith.constant 0 : index
    %67 = vector.load %arg8[%c0_58, %c0_59, %c0_60] : memref<18x18x128xf32, #tpu.memory_space<vmem>>, vector<18x18x128xf32>
    tpu.vector_store %arg8[%c0_58, %c0_59, %c0_60], %66 {strides = array<i32>} : memref<18x18x128xf32, #tpu.memory_space<vmem>>, vector<18x18x128xf32>,
    %68 = vector.shape_cast %65 : vector<256x128xf32> to vector<16x16x128xf32>
    %c1_61 = arith.constant 1 : index
    %c1_62 = arith.constant 1 : index
    %c0_63 = arith.constant 0 : index
    %69 = vector.load %arg8[%c1_61, %c1_62, %c0_63] : memref<18x18x128xf32, #tpu.memory_space<vmem>>, vector<16x16x128xf32>
    tpu.vector_store %arg8[%c1_61, %c1_62, %c0_63], %68 {strides = array<i32>} : memref<18x18x128xf32, #tpu.memory_space<vmem>>, vector<16x16x128xf32>,
    %cst_64 = arith.constant 0.000000e+00 : f32
    %70 = vector.broadcast %cst_64 : f32 to vector<256x128xf32>
    %c0_65 = arith.constant 0 : index
    %c0_66 = arith.constant 0 : index
    %c0_67 = arith.constant 0 : index
    %71 = vector.load %arg8[%c0_65, %c0_66, %c0_67] : memref<18x18x128xf32, #tpu.memory_space<vmem>>, vector<16x16x128xf32>
    %72 = vector.shape_cast %71 : vector<16x16x128xf32> to vector<256x128xf32>
    %73 = arith.truncf %72 : vector<256x128xf32> to vector<256x128xbf16>
    %c0_68 = arith.constant 0 : index
    %c0_69 = arith.constant 0 : index
    %74 = vector.load %arg4[%c0_68, %c0_69] : memref<1152x128xbf16, #tpu.memory_space<vmem>>, vector<128x128xbf16>
    %cst_70 = arith.constant dense<0.000000e+00> : vector<256x128xf32>
    %75 = tpu.matmul %73, %74, %cst_70 {dimension_numbers = #tpu.dot_dimension_numbers<[1], [0], [0], [1], [0, 0, 1, 1], [], []>} : vector<256x128xbf16>, vector<128x128xbf16>, vector<256x128xf32> -> vector<256x128xf32>
    %76 = arith.addf %70, %75 : vector<256x128xf32>
    %c0_71 = arith.constant 0 : index
    %c1_72 = arith.constant 1 : index
    %c0_73 = arith.constant 0 : index
    %77 = vector.load %arg8[%c0_71, %c1_72, %c0_73] : memref<18x18x128xf32, #tpu.memory_space<vmem>>, vector<16x16x128xf32>
    %78 = vector.shape_cast %77 : vector<16x16x128xf32> to vector<256x128xf32>
    %79 = arith.truncf %78 : vector<256x128xf32> to vector<256x128xbf16>
    %c128 = arith.constant 128 : index
    %c0_74 = arith.constant 0 : index
    %80 = vector.load %arg4[%c128, %c0_74] : memref<1152x128xbf16, #tpu.memory_space<vmem>>, vector<128x128xbf16>
    %cst_75 = arith.constant dense<0.000000e+00> : vector<256x128xf32>
    %81 = tpu.matmul %79, %80, %cst_75 {dimension_numbers = #tpu.dot_dimension_numbers<[1], [0], [0], [1], [0, 0, 1, 1], [], []>} : vector<256x128xbf16>, vector<128x128xbf16>, vector<256x128xf32> -> vector<256x128xf32>
    %82 = arith.addf %76, %81 : vector<256x128xf32>
    %c0_76 = arith.constant 0 : index
    %c2_77 = arith.constant 2 : index
    %c0_78 = arith.constant 0 : index
    %83 = vector.load %arg8[%c0_76, %c2_77, %c0_78] : memref<18x18x128xf32, #tpu.memory_space<vmem>>, vector<16x16x128xf32>
    %84 = vector.shape_cast %83 : vector<16x16x128xf32> to vector<256x128xf32>
    %85 = arith.truncf %84 : vector<256x128xf32> to vector<256x128xbf16>
    %c256 = arith.constant 256 : index
    %c0_79 = arith.constant 0 : index
    %86 = vector.load %arg4[%c256, %c0_79] : memref<1152x128xbf16, #tpu.memory_space<vmem>>, vector<128x128xbf16>
    %cst_80 = arith.constant dense<0.000000e+00> : vector<256x128xf32>
    %87 = tpu.matmul %85, %86, %cst_80 {dimension_numbers = #tpu.dot_dimension_numbers<[1], [0], [0], [1], [0, 0, 1, 1], [], []>} : vector<256x128xbf16>, vector<128x128xbf16>, vector<256x128xf32> -> vector<256x128xf32>
    %88 = arith.addf %82, %87 : vector<256x128xf32>
    %c1_81 = arith.constant 1 : index
    %c0_82 = arith.constant 0 : index
    %c0_83 = arith.constant 0 : index
    %89 = vector.load %arg8[%c1_81, %c0_82, %c0_83] : memref<18x18x128xf32, #tpu.memory_space<vmem>>, vector<16x16x128xf32>
    %90 = vector.shape_cast %89 : vector<16x16x128xf32> to vector<256x128xf32>
    %91 = arith.truncf %90 : vector<256x128xf32> to vector<256x128xbf16>
    %c384 = arith.constant 384 : index
    %c0_84 = arith.constant 0 : index
    %92 = vector.load %arg4[%c384, %c0_84] : memref<1152x128xbf16, #tpu.memory_space<vmem>>, vector<128x128xbf16>
    %cst_85 = arith.constant dense<0.000000e+00> : vector<256x128xf32>
    %93 = tpu.matmul %91, %92, %cst_85 {dimension_numbers = #tpu.dot_dimension_numbers<[1], [0], [0], [1], [0, 0, 1, 1], [], []>} : vector<256x128xbf16>, vector<128x128xbf16>, vector<256x128xf32> -> vector<256x128xf32>
    %94 = arith.addf %88, %93 : vector<256x128xf32>
    %c1_86 = arith.constant 1 : index
    %c1_87 = arith.constant 1 : index
    %c0_88 = arith.constant 0 : index
    %95 = vector.load %arg8[%c1_86, %c1_87, %c0_88] : memref<18x18x128xf32, #tpu.memory_space<vmem>>, vector<16x16x128xf32>
    %96 = vector.shape_cast %95 : vector<16x16x128xf32> to vector<256x128xf32>
    %97 = arith.truncf %96 : vector<256x128xf32> to vector<256x128xbf16>
    %c512 = arith.constant 512 : index
    %c0_89 = arith.constant 0 : index
    %98 = vector.load %arg4[%c512, %c0_89] : memref<1152x128xbf16, #tpu.memory_space<vmem>>, vector<128x128xbf16>
    %cst_90 = arith.constant dense<0.000000e+00> : vector<256x128xf32>
    %99 = tpu.matmul %97, %98, %cst_90 {dimension_numbers = #tpu.dot_dimension_numbers<[1], [0], [0], [1], [0, 0, 1, 1], [], []>} : vector<256x128xbf16>, vector<128x128xbf16>, vector<256x128xf32> -> vector<256x128xf32>
    %100 = arith.addf %94, %99 : vector<256x128xf32>
    %c1_91 = arith.constant 1 : index
    %c2_92 = arith.constant 2 : index
    %c0_93 = arith.constant 0 : index
    %101 = vector.load %arg8[%c1_91, %c2_92, %c0_93] : memref<18x18x128xf32, #tpu.memory_space<vmem>>, vector<16x16x128xf32>
    %102 = vector.shape_cast %101 : vector<16x16x128xf32> to vector<256x128xf32>
    %103 = arith.truncf %102 : vector<256x128xf32> to vector<256x128xbf16>
    %c640 = arith.constant 640 : index
    %c0_94 = arith.constant 0 : index
    %104 = vector.load %arg4[%c640, %c0_94] : memref<1152x128xbf16, #tpu.memory_space<vmem>>, vector<128x128xbf16>
    %cst_95 = arith.constant dense<0.000000e+00> : vector<256x128xf32>
    %105 = tpu.matmul %103, %104, %cst_95 {dimension_numbers = #tpu.dot_dimension_numbers<[1], [0], [0], [1], [0, 0, 1, 1], [], []>} : vector<256x128xbf16>, vector<128x128xbf16>, vector<256x128xf32> -> vector<256x128xf32>
    %106 = arith.addf %100, %105 : vector<256x128xf32>
    %c2_96 = arith.constant 2 : index
    %c0_97 = arith.constant 0 : index
    %c0_98 = arith.constant 0 : index
    %107 = vector.load %arg8[%c2_96, %c0_97, %c0_98] : memref<18x18x128xf32, #tpu.memory_space<vmem>>, vector<16x16x128xf32>
    %108 = vector.shape_cast %107 : vector<16x16x128xf32> to vector<256x128xf32>
    %109 = arith.truncf %108 : vector<256x128xf32> to vector<256x128xbf16>
    %c768 = arith.constant 768 : index
    %c0_99 = arith.constant 0 : index
    %110 = vector.load %arg4[%c768, %c0_99] : memref<1152x128xbf16, #tpu.memory_space<vmem>>, vector<128x128xbf16>
    %cst_100 = arith.constant dense<0.000000e+00> : vector<256x128xf32>
    %111 = tpu.matmul %109, %110, %cst_100 {dimension_numbers = #tpu.dot_dimension_numbers<[1], [0], [0], [1], [0, 0, 1, 1], [], []>} : vector<256x128xbf16>, vector<128x128xbf16>, vector<256x128xf32> -> vector<256x128xf32>
    %112 = arith.addf %106, %111 : vector<256x128xf32>
    %c2_101 = arith.constant 2 : index
    %c1_102 = arith.constant 1 : index
    %c0_103 = arith.constant 0 : index
    %113 = vector.load %arg8[%c2_101, %c1_102, %c0_103] : memref<18x18x128xf32, #tpu.memory_space<vmem>>, vector<16x16x128xf32>
    %114 = vector.shape_cast %113 : vector<16x16x128xf32> to vector<256x128xf32>
    %115 = arith.truncf %114 : vector<256x128xf32> to vector<256x128xbf16>
    %c896 = arith.constant 896 : index
    %c0_104 = arith.constant 0 : index
    %116 = vector.load %arg4[%c896, %c0_104] : memref<1152x128xbf16, #tpu.memory_space<vmem>>, vector<128x128xbf16>
    %cst_105 = arith.constant dense<0.000000e+00> : vector<256x128xf32>
    %117 = tpu.matmul %115, %116, %cst_105 {dimension_numbers = #tpu.dot_dimension_numbers<[1], [0], [0], [1], [0, 0, 1, 1], [], []>} : vector<256x128xbf16>, vector<128x128xbf16>, vector<256x128xf32> -> vector<256x128xf32>
    %118 = arith.addf %112, %117 : vector<256x128xf32>
    %c2_106 = arith.constant 2 : index
    %c2_107 = arith.constant 2 : index
    %c0_108 = arith.constant 0 : index
    %119 = vector.load %arg8[%c2_106, %c2_107, %c0_108] : memref<18x18x128xf32, #tpu.memory_space<vmem>>, vector<16x16x128xf32>
    %120 = vector.shape_cast %119 : vector<16x16x128xf32> to vector<256x128xf32>
    %121 = arith.truncf %120 : vector<256x128xf32> to vector<256x128xbf16>
    %c1024 = arith.constant 1024 : index
    %c0_109 = arith.constant 0 : index
    %122 = vector.load %arg4[%c1024, %c0_109] : memref<1152x128xbf16, #tpu.memory_space<vmem>>, vector<128x128xbf16>
    %cst_110 = arith.constant dense<0.000000e+00> : vector<256x128xf32>
    %123 = tpu.matmul %121, %122, %cst_110 {dimension_numbers = #tpu.dot_dimension_numbers<[1], [0], [0], [1], [0, 0, 1, 1], [], []>} : vector<256x128xbf16>, vector<128x128xbf16>, vector<256x128xf32> -> vector<256x128xf32>
    %124 = arith.addf %118, %123 : vector<256x128xf32>
    %c0_111 = arith.constant 0 : index
    %c0_112 = arith.constant 0 : index
    %125 = vector.load %arg5[%c0_111, %c0_112] : memref<1x128xf32, #tpu.memory_space<vmem>>, vector<1x128xf32>
    %126 = vector.broadcast %125 : vector<1x128xf32> to vector<256x128xf32>
    %127 = arith.addf %124, %126 : vector<256x128xf32>
    %cst_113 = arith.constant 0.000000e+00 : f32
    %128 = vector.broadcast %cst_113 : f32 to vector<256x128xf32>
    %129 = arith.maximumf %127, %128 : vector<256x128xf32>
    %130 = vector.shape_cast %129 : vector<256x128xf32> to vector<1x16x16x128xf32>
    %c0_114 = arith.constant 0 : index
    %c0_115 = arith.constant 0 : index
    %c0_116 = arith.constant 0 : index
    %c0_117 = arith.constant 0 : index
    %131 = vector.load %arg6[%c0_114, %c0_115, %c0_116, %c0_117] : memref<1x16x16x128xf32, #tpu.memory_space<vmem>>, vector<1x16x16x128xf32>
    tpu.vector_store %arg6[%c0_114, %c0_115, %c0_116, %c0_117], %130 {strides = array<i32>} : memref<1x16x16x128xf32, #tpu.memory_space<vmem>>, vector<1x16x16x128xf32>,
    return
  }
  func.func @transform_0(%arg0: i32) -> (i32, i32, i32, i32) {
    %c0_i32 = arith.constant 0 : i32
    %c0_i32_0 = arith.constant 0 : i32
    %c0_i32_1 = arith.constant 0 : i32
    %c0_i32_2 = arith.constant 0 : i32
    return %arg0, %c0_i32, %c0_i32_0, %c0_i32_1 : i32, i32, i32, i32
  }
  func.func @transform_1(%arg0: i32) -> (i32, i32) {
    %c0_i32 = arith.constant 0 : i32
    %c0_i32_0 = arith.constant 0 : i32
    %c0_i32_1 = arith.constant 0 : i32
    return %c0_i32, %c0_i32_0 : i32, i32
  }
  func.func @transform_2(%arg0: i32) -> (i32, i32) {
    %c0_i32 = arith.constant 0 : i32
    %c0_i32_0 = arith.constant 0 : i32
    %c0_i32_1 = arith.constant 0 : i32
    return %c0_i32, %c0_i32_0 : i32, i32
  }
  func.func @transform_3(%arg0: i32) -> (i32, i32) {
    %c0_i32 = arith.constant 0 : i32
    %c0_i32_0 = arith.constant 0 : i32
    %c0_i32_1 = arith.constant 0 : i32
    return %c0_i32, %c0_i32_0 : i32, i32
  }
  func.func @transform_4(%arg0: i32) -> (i32, i32) {
    %c0_i32 = arith.constant 0 : i32
    %c0_i32_0 = arith.constant 0 : i32
    %c0_i32_1 = arith.constant 0 : i32
    return %c0_i32, %c0_i32_0 : i32, i32
  }
  func.func @transform_5(%arg0: i32) -> (i32, i32, i32, i32) {
    %c0_i32 = arith.constant 0 : i32
    %c0_i32_0 = arith.constant 0 : i32
    %c0_i32_1 = arith.constant 0 : i32
    %c0_i32_2 = arith.constant 0 : i32
    return %arg0, %c0_i32, %c0_i32_0, %c0_i32_1 : i32, i32, i32, i32
  }
}

</mosaic_0001>

<llo_original>
// kernel: tpu_custom_call.1
$region0: #{tpu_custom_call.1}
  #allocation0 [shape = 'u32[]', space=smem, size = 0x4, offset = 0x4, fixed_abs, tag = 'smem constant byte address 0x4 - core index']
  #allocation1 [shape = 'u32[72,128]{1,0:T(1,128)}', space=vmem, size = 0x9000, scoped, tag = 'internal scratch']
  #allocation2 [shape = 'f32[18,18,4]{2,1,0:T(8,128)}', space=vmem, size = 0x36000, scoped, tag = 'scratch operand']
  #allocation3 [shape = 'f32[18,18,128]{2,1,0:T(8,128)}', space=vmem, size = 0x36000, scoped, tag = 'scratch operand']
  %s0 = inlined_call_operand.vmem [shape: bf16[2,16,16,4], index: 0, kind: input, shape index: {}]
  %s1 = inlined_call_operand.vmem [shape: bf16[36,128], index: 1, kind: input, shape index: {}]
  %s2 = inlined_call_operand.vmem [shape: f32[1,128], index: 2, kind: input, shape index: {}]
  %s3 = inlined_call_operand.hbm [shape: bf16[1152,128], index: 3, kind: input, shape index: {}]
  %s4 = inlined_call_operand.vmem [shape: f32[1,128], index: 4, kind: input, shape index: {}]
  %s5 = inlined_call_operand.hbm [shape: f32[2,16,16,128], index: 5, kind: output, shape index: {}]
  %s6 = sld [smem:[#allocation0]]
  $region57: #{tpu_custom_call.1} parent=0
    _
  %s8 = ssub.s32 1, %s6
  %s9 = scalar_select 0, %s8, %s6
  $region1: #{tpu_custom_call.1} parent=0
    #allocation4 [shape = 'u8[294912]{0}', space=vmem, size = 0x48000, scoped, tag = 'input window, operand 3, single buffered']
    #allocation5 [shape = 's32[2]{0}', space=sflag, size = 0x8, scoped, tag = 'scoped memory for tpu_custom_call.1']
    #allocation6 [shape = 's32[2]{0}', space=sflag, size = 0x8, scoped, tag = 'scoped memory for tpu_custom_call.1']
    #allocation7 [shape = 'u8[262144]{0}', space=vmem, size = 0x40000, scoped, tag = 'output window, operand 0']
    %10 = vsyncpa [#allocation5], 0
    %11 = vsyncpa [#allocation6], 0
    %s12 = scalar_lea.sflag [#allocation6], 1
    %13 = vsyncpa %s12, 0
    loop: start=0, step=1, limit=4
    $region2: #{tpu_custom_call.1} parent=1 // loop_pre_header
      _
    $region3: #{tpu_custom_call.1} parent=1 // loop_header
      %s15 = sphi 0, %s19
      %p16 = scmp.ge.s32.totalorder %s15, 4
      %s25 = sphi 0, %s27
      %s28 = sphi 0, %s25
      %s29 = sphi 0, %s28
      %s45 = sphi 0, %s29
      %s49 = sphi 0, %s49
      %s51 = sphi 0, %s49
      %s52 = sphi 0, %s51
      %s66 = sphi 0, %s52
      %s70 = sphi 0, %s70
      %s72 = sphi 0, %s70
      %s73 = sphi 0, %s72
      %s87 = sphi 0, %s73
      %s91 = sphi 0, %s91
      %s93 = sphi 0, %s91
      %s94 = sphi 0, %s93
      %s108 = sphi 0, %s94
      %s112 = sphi 0, %s112
      %s114 = sphi 0, %s112
      %s115 = sphi 0, %s114
      %s129 = sphi 0, %s115
      %s135 = sphi 0, %s137
      %s138 = sphi 0, %s135
      %s139 = sphi 0, %s138
      %s155 = sphi 0, %s139
    $region4: #{tpu_custom_call.1} parent=1 // loop_header_branch
      %18 = sbr.rel (%p16) target = $region8
    $region5: #{tpu_custom_call.1} parent=1 // loop_body
      %s20 = ssub.s32 %s15, 1
      %s21 = ssub.s32 %s15, 2
      %s22 = sadd.s32 %s15, 1
      %s23 = ssub.s32 %s15, %s22
      %p24 = scmp.eq.s32.totalorder %s23, 0
      %s26 = sadd.s32 %s25, 1
      %s27 = scalar_select %p24, %s25, %s26
      %p30 = pneg %p24
      %p31 = scmp.eq.s32.totalorder %s15, 1
      %p32 = por %p30, %p31
      %p33 = scmp.ne.s32.totalorder %s25, %s28
      %p34 = scmp.eq.s32.totalorder %s15, 0
      %p35 = por %p33, %p34
      %p36 = scmp.ne.s32.totalorder %s25, %s28
      %p37 = scmp.eq.s32.totalorder %s20, 1
      %p38 = por %p36, %p37
      %p39 = scmp.ne.s32.totalorder %s28, %s29
      %p40 = scmp.eq.s32.totalorder %s20, 0
      %p41 = por %p39, %p40
      %p42 = scmp.ne.s32.totalorder %s28, %s29
      %p43 = scmp.eq.s32.totalorder %s21, 1
      %p44 = por %p42, %p43
      %p46 = scmp.ne.s32.totalorder %s29, %s45
      %p47 = scmp.eq.s32.totalorder %s21, 0
      %p48 = por %p46, %p47
      %s50 = sadd.s32 %s49, 1
      %p53 = scmp.eq.s32.totalorder %s15, 1
      %p54 = scmp.ne.s32.totalorder %s49, %s51
      %p55 = scmp.eq.s32.totalorder %s15, 0
      %p56 = por %p54, %p55
      %p57 = scmp.ne.s32.totalorder %s49, %s51
      %p58 = scmp.eq.s32.totalorder %s20, 1
      %p59 = por %p57, %p58
      %p60 = scmp.ne.s32.totalorder %s51, %s52
      %p61 = scmp.eq.s32.totalorder %s20, 0
      %p62 = por %p60, %p61
      %p63 = scmp.ne.s32.totalorder %s51, %s52
      %p64 = scmp.eq.s32.totalorder %s21, 1
      %p65 = por %p63, %p64
      %p67 = scmp.ne.s32.totalorder %s52, %s66
      %p68 = scmp.eq.s32.totalorder %s21, 0
      %p69 = por %p67, %p68
      %s71 = sadd.s32 %s70, 1
      %p74 = scmp.eq.s32.totalorder %s15, 1
      %p75 = scmp.ne.s32.totalorder %s70, %s72
      %p76 = scmp.eq.s32.totalorder %s15, 0
      %p77 = por %p75, %p76
      %p78 = scmp.ne.s32.totalorder %s70, %s72
      %p79 = scmp.eq.s32.totalorder %s20, 1
      %p80 = por %p78, %p79
      %p81 = scmp.ne.s32.totalorder %s72, %s73
      %p82 = scmp.eq.s32.totalorder %s20, 0
      %p83 = por %p81, %p82
      %p84 = scmp.ne.s32.totalorder %s72, %s73
      %p85 = scmp.eq.s32.totalorder %s21, 1
      %p86 = por %p84, %p85
      %p88 = scmp.ne.s32.totalorder %s73, %s87
      %p89 = scmp.eq.s32.totalorder %s21, 0
      %p90 = por %p88, %p89
      %s92 = sadd.s32 %s91, 1
      %p95 = scmp.eq.s32.totalorder %s15, 1
      %p96 = scmp.ne.s32.totalorder %s91, %s93
      %p97 = scmp.eq.s32.totalorder %s15, 0
      %p98 = por %p96, %p97
      %p99 = scmp.ne.s32.totalorder %s91, %s93
      %p100 = scmp.eq.s32.totalorder %s20, 1
      %p101 = por %p99, %p100
      %p102 = scmp.ne.s32.totalorder %s93, %s94
      %p103 = scmp.eq.s32.totalorder %s20, 0
      %p104 = por %p102, %p103
      %p105 = scmp.ne.s32.totalorder %s93, %s94
      %p106 = scmp.eq.s32.totalorder %s21, 1
      %p107 = por %p105, %p106
      %p109 = scmp.ne.s32.totalorder %s94, %s108
      %p110 = scmp.eq.s32.totalorder %s21, 0
      %p111 = por %p109, %p110
      %s113 = sadd.s32 %s112, 1
      %p116 = scmp.eq.s32.totalorder %s15, 1
      %p117 = scmp.ne.s32.totalorder %s112, %s114
      %p118 = scmp.eq.s32.totalorder %s15, 0
      %p119 = por %p117, %p118
      %p120 = scmp.ne.s32.totalorder %s112, %s114
      %p121 = scmp.eq.s32.totalorder %s20, 1
      %p122 = por %p120, %p121
      %p123 = scmp.ne.s32.totalorder %s114, %s115
      %p124 = scmp.eq.s32.totalorder %s20, 0
      %p125 = por %p123, %p124
      %p126 = scmp.ne.s32.totalorder %s114, %s115
      %p127 = scmp.eq.s32.totalorder %s21, 1
      %p128 = por %p126, %p127
      %p130 = scmp.ne.s32.totalorder %s115, %s129
      %p131 = scmp.eq.s32.totalorder %s21, 0
      %p132 = por %p130, %p131
      %s133 = ssub.s32 %s15, %s22
      %p134 = scmp.eq.s32.totalorder %s133, 0
      %s136 = sadd.s32 %s135, 1
      %s137 = scalar_select %p134, %s135, %s136
      %p140 = pneg %p134
      %p141 = scmp.eq.s32.totalorder %s15, 1
      %p142 = por %p140, %p141
      %p143 = scmp.ne.s32.totalorder %s135, %s138
      %p144 = scmp.eq.s32.totalorder %s15, 0
      %p145 = por %p143, %p144
      %p146 = scmp.ne.s32.totalorder %s135, %s138
      %p147 = scmp.eq.s32.totalorder %s20, 1
      %p148 = por %p146, %p147
      %p149 = scmp.ne.s32.totalorder %s138, %s139
      %p150 = scmp.eq.s32.totalorder %s20, 0
      %p151 = por %p149, %p150
      %p152 = scmp.ne.s32.totalorder %s138, %s139
      %p153 = scmp.eq.s32.totalorder %s21, 1
      %p154 = por %p152, %p153
      %p156 = scmp.ne.s32.totalorder %s139, %s155
      %p157 = scmp.eq.s32.totalorder %s21, 0
      %p158 = por %p156, %p157
      %p159 = scmp.le.s32.totalorder 1, %s15
      %p160 = scmp.lt.s32.totalorder %s15, 3
      %p161 = pnand %p159, %p160
      %p162 = pneg %p161
      // Predicated region
      $region9: #{tpu_custom_call.1} parent=5 // pred_check
        _
      $region10: #{tpu_custom_call.1} parent=5 // pred_check_branch
        %164 = sbr.rel (%p161) target = $region12
      $region11: #{tpu_custom_call.1} parent=5 // pred_region
        %s165 = ssub.s32 %s15, 1
        // Predicated region
        $region13: #{tpu_custom_call.1} parent=11 // pred_check
          %p166 = pneg %p62
        $region14: #{tpu_custom_call.1} parent=11 // pred_check_branch
          %168 = sbr.rel (%p166) target = $region16
        $region15: #{tpu_custom_call.1} parent=11 // pred_region
          _
        $region16: #{tpu_custom_call.1} parent=11 // pred_fallthru
          _
        // Predicated region
        $region17: #{tpu_custom_call.1} parent=11 // pred_check
          %p169 = pneg %p83
        $region18: #{tpu_custom_call.1} parent=11 // pred_check_branch
          %171 = sbr.rel (%p169) target = $region20
        $region19: #{tpu_custom_call.1} parent=11 // pred_region
          _
        $region20: #{tpu_custom_call.1} parent=11 // pred_fallthru
          _
        // Predicated region
        $region21: #{tpu_custom_call.1} parent=11 // pred_check
          %p172 = pneg %p104
        $region22: #{tpu_custom_call.1} parent=11 // pred_check_branch
          %174 = sbr.rel (%p172) target = $region24
        $region23: #{tpu_custom_call.1} parent=11 // pred_region
          %176 = vsyncadd [#allocation5], 0
          %s177 = sshll.u32 %s3, 4
          %s178 = int_to_ptr.hbm [resolvable:$true] %s177
          %s179 = sshll.u32 [#allocation4], 4
          %s180 = int_to_ptr.vmem [resolvable:$true] %s179
          %185 = dma.hbm_to_vmem [thread:$0]  %s178, 9216, %s180, [#allocation5], 64, 64, 4
        $region24: #{tpu_custom_call.1} parent=11 // pred_fallthru
          _
        // Predicated region
        $region25: #{tpu_custom_call.1} parent=11 // pred_check
          %p186 = pneg %p125
        $region26: #{tpu_custom_call.1} parent=11 // pred_check_branch
          %188 = sbr.rel (%p186) target = $region28
        $region27: #{tpu_custom_call.1} parent=11 // pred_region
          _
        $region28: #{tpu_custom_call.1} parent=11 // pred_fallthru
          _
      $region12: #{tpu_custom_call.1} parent=5 // pred_fallthru
        _
      %p189 = scmp.lt.s32.totalorder %s15, 2
      // Predicated region
      $region29: #{tpu_custom_call.1} parent=5 // pred_check
        %p190 = pneg %p189
      $region30: #{tpu_custom_call.1} parent=5 // pred_check_branch
        %192 = sbr.rel (%p190) target = $region32
      $region31: #{tpu_custom_call.1} parent=5 // pred_region
        // Predicated region
        $region33: #{tpu_custom_call.1} parent=31 // pred_check
          %p193 = pneg %p35
        $region34: #{tpu_custom_call.1} parent=31 // pred_check_branch
          %195 = sbr.rel (%p193) target = $region36
        $region35: #{tpu_custom_call.1} parent=31 // pred_region
          %p196 = scmp.lt.s32.totalorder %s15, 1
          %s197 = scalar_select %p196, %s15, 1
          %s198 = smul.addr %s197, 32
          %s199 = smul.addr %s198, 4
          %s200 = scalar_lea.vmem %s0, %s199
        $region36: #{tpu_custom_call.1} parent=31 // pred_fallthru
          _
      $region32: #{tpu_custom_call.1} parent=5 // pred_fallthru
        _
      %p201 = scmp.le.s32.totalorder 1, %s15
      %p202 = scmp.lt.s32.totalorder %s15, 3
      %p203 = pnand %p201, %p202
      %p204 = pneg %p203
      // Predicated region
      $region37: #{tpu_custom_call.1} parent=5 // pred_check
        _
      $region38: #{tpu_custom_call.1} parent=5 // pred_check_branch
        %206 = sbr.rel (%p203) target = $region40
      $region39: #{tpu_custom_call.1} parent=5 // pred_region
        %s207 = ssub.s32 %s15, 1
        // Predicated region
        $region41: #{tpu_custom_call.1} parent=39 // pred_check
          %p208 = pneg %p104
        $region42: #{tpu_custom_call.1} parent=39 // pred_check_branch
          %210 = sbr.rel (%p208) target = $region44
        $region43: #{tpu_custom_call.1} parent=39 // pred_region
          %212 = dma.done [#allocation5], 9216
        $region44: #{tpu_custom_call.1} parent=39 // pred_fallthru
          _
        %p213 = scmp.lt.s32.totalorder %s20, 1
        %s214 = scalar_select %p213, %s20, 1
        %s215 = smul.addr %s214, 32
        %s216 = smul.addr %s215, 4
        %s217 = scalar_lea.vmem %s0, %s216
        %p218 = pneg %p41
        %p219 = pneg %p38
        %p220 = pneg %p62
        %p221 = pneg %p59
        %p222 = pneg %p83
        %p223 = pneg %p80
        %p224 = pneg %p104
        %p225 = pneg %p101
        %p226 = pneg %p125
        %p227 = pneg %p122
        %p228 = pneg %p151
        %p229 = pneg %p148
        %s230 = sand.u32 %s138, 1
        %s231 = scalar_lea.sflag [#allocation6], %s230
        %s232 = sand.u32 %s138, 1
        %s233 = smul.addr %s232, 256
        %s234 = scalar_lea.vmem [#allocation7], %s233
        %p235 = scmp.lt.s32.totalorder %s20, 1
        %s236 = scalar_select %p235, %s20, 1
        %s237 = smul.addr %s236, 32
        %s238 = smul.addr %s237, 4
        %s239 = scalar_lea.vmem %s0, %s238
        %vm241 = vcmask 31744
        %242 = vst.msk [vmem:[#allocation2] sm:$0xff] %vm241, 0.0
        %243 = vst.msk [vmem:[#allocation2 + $0x8] sm:$0xff] %vm241, 0.0
        %vm244 = vcmask 25600
        %245 = vst.msk [vmem:[#allocation2 + $0x10] sm:$0x3] %vm244, 0.0
        %246 = vst.msk [vmem:[#allocation2 + $0x18] sm:$0xff] %vm241, 0.0
        %247 = vst.msk [vmem:[#allocation2 + $0x20] sm:$0xff] %vm241, 0.0
        %248 = vst.msk [vmem:[#allocation2 + $0x28] sm:$0x3] %vm244, 0.0
        %249 = vst.msk [vmem:[#allocation2 + $0x30] sm:$0xff] %vm241, 0.0
        %250 = vst.msk [vmem:[#allocation2 + $0x38] sm:$0xff] %vm241, 0.0
        %251 = vst.msk [vmem:[#allocation2 + $0x40] sm:$0x3] %vm244, 0.0
        %252 = vst.msk [vmem:[#allocation2 + $0x48] sm:$0xff] %vm241, 0.0
        %253 = vst.msk [vmem:[#allocation2 + $0x50] sm:$0xff] %vm241, 0.0
        %254 = vst.msk [vmem:[#allocation2 + $0x58] sm:$0x3] %vm244, 0.0
        %255 = vst.msk [vmem:[#allocation2 + $0x60] sm:$0xff] %vm241, 0.0
        %256 = vst.msk [vmem:[#allocation2 + $0x68] sm:$0xff] %vm241, 0.0
        %257 = vst.msk [vmem:[#allocation2 + $0x70] sm:$0x3] %vm244, 0.0
        %258 = vst.msk [vmem:[#allocation2 + $0x78] sm:$0xff] %vm241, 0.0
        %259 = vst.msk [vmem:[#allocation2 + $0x80] sm:$0xff] %vm241, 0.0
        %260 = vst.msk [vmem:[#allocation2 + $0x88] sm:$0x3] %vm244, 0.0
        %261 = vst.msk [vmem:[#allocation2 + $0x90] sm:$0xff] %vm241, 0.0
        %262 = vst.msk [vmem:[#allocation2 + $0x98] sm:$0xff] %vm241, 0.0
        %263 = vst.msk [vmem:[#allocation2 + $0xa0] sm:$0x3] %vm244, 0.0
        %264 = vst.msk [vmem:[#allocation2 + $0xa8] sm:$0xff] %vm241, 0.0
        %265 = vst.msk [vmem:[#allocation2 + $0xb0] sm:$0xff] %vm241, 0.0
        %266 = vst.msk [vmem:[#allocation2 + $0xb8] sm:$0x3] %vm244, 0.0
        %267 = vst.msk [vmem:[#allocation2 + $0xc0] sm:$0xff] %vm241, 0.0
        %268 = vst.msk [vmem:[#allocation2 + $0xc8] sm:$0xff] %vm241, 0.0
        %269 = vst.msk [vmem:[#allocation2 + $0xd0] sm:$0x3] %vm244, 0.0
        %270 = vst.msk [vmem:[#allocation2 + $0xd8] sm:$0xff] %vm241, 0.0
        %271 = vst.msk [vmem:[#allocation2 + $0xe0] sm:$0xff] %vm241, 0.0
        %272 = vst.msk [vmem:[#allocation2 + $0xe8] sm:$0x3] %vm244, 0.0
        %273 = vst.msk [vmem:[#allocation2 + $0xf0] sm:$0xff] %vm241, 0.0
        %274 = vst.msk [vmem:[#allocation2 + $0xf8] sm:$0xff] %vm241, 0.0
        %275 = vst.msk [vmem:[#allocation2 + $0x100] sm:$0x3] %vm244, 0.0
        %276 = vst.msk [vmem:[#allocation2 + $0x108] sm:$0xff] %vm241, 0.0
        %277 = vst.msk [vmem:[#allocation2 + $0x110] sm:$0xff] %vm241, 0.0
        %278 = vst.msk [vmem:[#allocation2 + $0x118] sm:$0x3] %vm244, 0.0
        %279 = vst.msk [vmem:[#allocation2 + $0x120] sm:$0xff] %vm241, 0.0
        %280 = vst.msk [vmem:[#allocation2 + $0x128] sm:$0xff] %vm241, 0.0
        %281 = vst.msk [vmem:[#allocation2 + $0x130] sm:$0x3] %vm244, 0.0
        %282 = vst.msk [vmem:[#allocation2 + $0x138] sm:$0xff] %vm241, 0.0
        %283 = vst.msk [vmem:[#allocation2 + $0x140] sm:$0xff] %vm241, 0.0
        %284 = vst.msk [vmem:[#allocation2 + $0x148] sm:$0x3] %vm244, 0.0
        %285 = vst.msk [vmem:[#allocation2 + $0x150] sm:$0xff] %vm241, 0.0
        %286 = vst.msk [vmem:[#allocation2 + $0x158] sm:$0xff] %vm241, 0.0
        %287 = vst.msk [vmem:[#allocation2 + $0x160] sm:$0x3] %vm244, 0.0
        %288 = vst.msk [vmem:[#allocation2 + $0x168] sm:$0xff] %vm241, 0.0
        %289 = vst.msk [vmem:[#allocation2 + $0x170] sm:$0xff] %vm241, 0.0
        %290 = vst.msk [vmem:[#allocation2 + $0x178] sm:$0x3] %vm244, 0.0
        %291 = vst.msk [vmem:[#allocation2 + $0x180] sm:$0xff] %vm241, 0.0
        %292 = vst.msk [vmem:[#allocation2 + $0x188] sm:$0xff] %vm241, 0.0
        %293 = vst.msk [vmem:[#allocation2 + $0x190] sm:$0x3] %vm244, 0.0
        %294 = vst.msk [vmem:[#allocation2 + $0x198] sm:$0xff] %vm241, 0.0
        %295 = vst.msk [vmem:[#allocation2 + $0x1a0] sm:$0xff] %vm241, 0.0
        %296 = vst.msk [vmem:[#allocation2 + $0x1a8] sm:$0x3] %vm244, 0.0
        %v297 = vld [vmem:[%s239] sm:$0xf]
        %v298 = vld [vmem:[%s239 + $0x4] sm:$0xf]
        %v299 = vld [vmem:[%s239 + $0x8] sm:$0xf]
        %v300 = vld [vmem:[%s239 + $0xc] sm:$0xf]
        %v301 = vld [vmem:[%s239 + $0x10] sm:$0xf]
        %v302 = vld [vmem:[%s239 + $0x14] sm:$0xf]
        %v303 = vld [vmem:[%s239 + $0x18] sm:$0xf]
        %v304 = vld [vmem:[%s239 + $0x1c] sm:$0xf]
        %v305 = vld [vmem:[%s239 + $0x20] sm:$0xf]
        %v306 = vld [vmem:[%s239 + $0x24] sm:$0xf]
        %v307 = vld [vmem:[%s239 + $0x28] sm:$0xf]
        %v308 = vld [vmem:[%s239 + $0x2c] sm:$0xf]
        %v309 = vld [vmem:[%s239 + $0x30] sm:$0xf]
        %v310 = vld [vmem:[%s239 + $0x34] sm:$0xf]
        %v311 = vld [vmem:[%s239 + $0x38] sm:$0xf]
        %v312 = vld [vmem:[%s239 + $0x3c] sm:$0xf]
        %v313 = vld [vmem:[%s239 + $0x40] sm:$0xf]
        %v314 = vld [vmem:[%s239 + $0x44] sm:$0xf]
        %v315 = vld [vmem:[%s239 + $0x48] sm:$0xf]
        %v316 = vld [vmem:[%s239 + $0x4c] sm:$0xf]
        %v317 = vld [vmem:[%s239 + $0x50] sm:$0xf]
        %v318 = vld [vmem:[%s239 + $0x54] sm:$0xf]
        %v319 = vld [vmem:[%s239 + $0x58] sm:$0xf]
        %v320 = vld [vmem:[%s239 + $0x5c] sm:$0xf]
        %v321 = vld [vmem:[%s239 + $0x60] sm:$0xf]
        %v322 = vld [vmem:[%s239 + $0x64] sm:$0xf]
        %v323 = vld [vmem:[%s239 + $0x68] sm:$0xf]
        %v324 = vld [vmem:[%s239 + $0x6c] sm:$0xf]
        %v325 = vld [vmem:[%s239 + $0x70] sm:$0xf]
        %v326 = vld [vmem:[%s239 + $0x74] sm:$0xf]
        %v327 = vld [vmem:[%s239 + $0x78] sm:$0xf]
        %v328 = vld [vmem:[%s239 + $0x7c] sm:$0xf]
        %v329 = vunpack.c.l.bf16 %v297
        %v330 = vunpack.c.l.bf16 %v298
        %v331 = vunpack.c.l.bf16 %v299
        %v332 = vunpack.c.l.bf16 %v300
        %v333 = vunpack.c.l.bf16 %v301
        %v334 = vunpack.c.l.bf16 %v302
        %v335 = vunpack.c.l.bf16 %v303
        %v336 = vunpack.c.l.bf16 %v304
        %v337 = vunpack.c.l.bf16 %v305
        %v338 = vunpack.c.l.bf16 %v306
        %v339 = vunpack.c.l.bf16 %v307
        %v340 = vunpack.c.l.bf16 %v308
        %v341 = vunpack.c.l.bf16 %v309
        %v342 = vunpack.c.l.bf16 %v310
        %v343 = vunpack.c.l.bf16 %v311
        %v344 = vunpack.c.l.bf16 %v312
        %v345 = vunpack.c.l.bf16 %v313
        %v346 = vunpack.c.l.bf16 %v314
        %v347 = vunpack.c.l.bf16 %v315
        %v348 = vunpack.c.l.bf16 %v316
        %v349 = vunpack.c.l.bf16 %v317
        %v350 = vunpack.c.l.bf16 %v318
        %v351 = vunpack.c.l.bf16 %v319
        %v352 = vunpack.c.l.bf16 %v320
        %v353 = vunpack.c.l.bf16 %v321
        %v354 = vunpack.c.l.bf16 %v322
        %v355 = vunpack.c.l.bf16 %v323
        %v356 = vunpack.c.l.bf16 %v324
        %v357 = vunpack.c.l.bf16 %v325
        %v358 = vunpack.c.l.bf16 %v326
        %v359 = vunpack.c.l.bf16 %v327
        %v360 = vunpack.c.l.bf16 %v328
        %s361 = scalar_lea.vmem [#allocation2], 24
        %362 = vst.msk [vmem:[%s361 + $0x1] sm:$0xff] %vm241, %v329
        %363 = vst.msk [vmem:[%s361 + $0x9] sm:$0xff] %vm241, %v330
        %364 = vst.msk [vmem:[%s361 + $0x19] sm:$0xff] %vm241, %v331
        %365 = vst.msk [vmem:[%s361 + $0x21] sm:$0xff] %vm241, %v332
        %366 = vst.msk [vmem:[%s361 + $0x31] sm:$0xff] %vm241, %v333
        %367 = vst.msk [vmem:[%s361 + $0x39] sm:$0xff] %vm241, %v334
        %368 = vst.msk [vmem:[%s361 + $0x49] sm:$0xff] %vm241, %v335
        %369 = vst.msk [vmem:[%s361 + $0x51] sm:$0xff] %vm241, %v336
        %370 = vst.msk [vmem:[%s361 + $0x61] sm:$0xff] %vm241, %v337
        %371 = vst.msk [vmem:[%s361 + $0x69] sm:$0xff] %vm241, %v338
        %372 = vst.msk [vmem:[%s361 + $0x79] sm:$0xff] %vm241, %v339
        %373 = vst.msk [vmem:[%s361 + $0x81] sm:$0xff] %vm241, %v340
        %374 = vst.msk [vmem:[%s361 + $0x91] sm:$0xff] %vm241, %v341
        %375 = vst.msk [vmem:[%s361 + $0x99] sm:$0xff] %vm241, %v342
        %376 = vst.msk [vmem:[%s361 + $0xa9] sm:$0xff] %vm241, %v343
        %377 = vst.msk [vmem:[%s361 + $0xb1] sm:$0xff] %vm241, %v344
        %378 = vst.msk [vmem:[%s361 + $0xc1] sm:$0xff] %vm241, %v345
        %379 = vst.msk [vmem:[%s361 + $0xc9] sm:$0xff] %vm241, %v346
        %380 = vst.msk [vmem:[%s361 + $0xd9] sm:$0xff] %vm241, %v347
        %381 = vst.msk [vmem:[%s361 + $0xe1] sm:$0xff] %vm241, %v348
        %382 = vst.msk [vmem:[%s361 + $0xf1] sm:$0xff] %vm241, %v349
        %383 = vst.msk [vmem:[%s361 + $0xf9] sm:$0xff] %vm241, %v350
        %384 = vst.msk [vmem:[%s361 + $0x109] sm:$0xff] %vm241, %v351
        %385 = vst.msk [vmem:[%s361 + $0x111] sm:$0xff] %vm241, %v352
        %386 = vst.msk [vmem:[%s361 + $0x121] sm:$0xff] %vm241, %v353
        %387 = vst.msk [vmem:[%s361 + $0x129] sm:$0xff] %vm241, %v354
        %388 = vst.msk [vmem:[%s361 + $0x139] sm:$0xff] %vm241, %v355
        %389 = vst.msk [vmem:[%s361 + $0x141] sm:$0xff] %vm241, %v356
        %390 = vst.msk [vmem:[%s361 + $0x151] sm:$0xff] %vm241, %v357
        %391 = vst.msk [vmem:[%s361 + $0x159] sm:$0xff] %vm241, %v358
        %392 = vst.msk [vmem:[%s361 + $0x169] sm:$0xff] %vm241, %v359
        %393 = vst.msk [vmem:[%s361 + $0x171] sm:$0xff] %vm241, %v360
        %v394 = vld [vmem:[#allocation2] sm:$0xff]
        %v395 = vld [vmem:[#allocation2 + $0x8] sm:$0xff]
        %v396 = vld [vmem:[#allocation2 + $0x18] sm:$0xff]
        %v397 = vld [vmem:[#allocation2 + $0x20] sm:$0xff]
        %v398 = vld [vmem:[#allocation2 + $0x30] sm:$0xff]
        %v399 = vld [vmem:[#allocation2 + $0x38] sm:$0xff]
        %v400 = vld [vmem:[#allocation2 + $0x48] sm:$0xff]
        %v401 = vld [vmem:[#allocation2 + $0x50] sm:$0xff]
        %v402 = vld [vmem:[#allocation2 + $0x60] sm:$0xff]
        %v403 = vld [vmem:[#allocation2 + $0x68] sm:$0xff]
        %v404 = vld [vmem:[#allocation2 + $0x78] sm:$0xff]
        %v405 = vld [vmem:[#allocation2 + $0x80] sm:$0xff]
        %v406 = vld [vmem:[#allocation2 + $0x90] sm:$0xff]
        %v407 = vld [vmem:[#allocation2 + $0x98] sm:$0xff]
        %v408 = vld [vmem:[#allocation2 + $0xa8] sm:$0xff]
        %v409 = vld [vmem:[#allocation2 + $0xb0] sm:$0xff]
        %v410 = vld [vmem:[#allocation2 + $0xc0] sm:$0xff]
        %v411 = vld [vmem:[#allocation2 + $0xc8] sm:$0xff]
        %v412 = vld [vmem:[#allocation2 + $0xd8] sm:$0xff]
        %v413 = vld [vmem:[#allocation2 + $0xe0] sm:$0xff]
        %v414 = vld [vmem:[#allocation2 + $0xf0] sm:$0xff]
        %v415 = vld [vmem:[#allocation2 + $0xf8] sm:$0xff]
        %v416 = vld [vmem:[#allocation2 + $0x108] sm:$0xff]
        %v417 = vld [vmem:[#allocation2 + $0x110] sm:$0xff]
        %v418 = vld [vmem:[#allocation2 + $0x120] sm:$0xff]
        %v419 = vld [vmem:[#allocation2 + $0x128] sm:$0xff]
        %v420 = vld [vmem:[#allocation2 + $0x138] sm:$0xff]
        %v421 = vld [vmem:[#allocation2 + $0x140] sm:$0xff]
        %v422 = vld [vmem:[#allocation2 + $0x150] sm:$0xff]
        %v423 = vld [vmem:[#allocation2 + $0x158] sm:$0xff]
        %v424 = vld [vmem:[#allocation2 + $0x168] sm:$0xff]
        %v425 = vld [vmem:[#allocation2 + $0x170] sm:$0xff]
        %v426 = vpack.c.bf16 %v395, %v394
        %v427 = vpack.c.bf16 %v397, %v396
        %v428 = vpack.c.bf16 %v399, %v398
        %v429 = vpack.c.bf16 %v401, %v400
        %v430 = vpack.c.bf16 %v403, %v402
        %v431 = vpack.c.bf16 %v405, %v404
        %v432 = vpack.c.bf16 %v407, %v406
        %v433 = vpack.c.bf16 %v409, %v408
        %v434 = vpack.c.bf16 %v411, %v410
        %v435 = vpack.c.bf16 %v413, %v412
        %v436 = vpack.c.bf16 %v415, %v414
        %v437 = vpack.c.bf16 %v417, %v416
        %v438 = vpack.c.bf16 %v419, %v418
        %v439 = vpack.c.bf16 %v421, %v420
        %v440 = vpack.c.bf16 %v423, %v422
        %v441 = vpack.c.bf16 %v425, %v424
        %v442 = vld [vmem:[%s1] sm:$0x3]
        %v443 = vld [vmem:[#allocation2 + $0x1] sm:$0xff]
        %v444 = vld [vmem:[#allocation2 + $0x9] sm:$0xff]
        %v445 = vld [vmem:[#allocation2 + $0x19] sm:$0xff]
        %v446 = vld [vmem:[#allocation2 + $0x21] sm:$0xff]
        %v447 = vld [vmem:[#allocation2 + $0x31] sm:$0xff]
        %v448 = vld [vmem:[#allocation2 + $0x39] sm:$0xff]
        %v449 = vld [vmem:[#allocation2 + $0x49] sm:$0xff]
        %v450 = vld [vmem:[#allocation2 + $0x51] sm:$0xff]
        %v451 = vld [vmem:[#allocation2 + $0x61] sm:$0xff]
        %v452 = vld [vmem:[#allocation2 + $0x69] sm:$0xff]
        %v453 = vld [vmem:[#allocation2 + $0x79] sm:$0xff]
        %v454 = vld [vmem:[#allocation2 + $0x81] sm:$0xff]
        %v455 = vld [vmem:[#allocation2 + $0x91] sm:$0xff]
        %v456 = vld [vmem:[#allocation2 + $0x99] sm:$0xff]
        %v457 = vld [vmem:[#allocation2 + $0xa9] sm:$0xff]
        %v458 = vld [vmem:[#allocation2 + $0xb1] sm:$0xff]
        %v459 = vld [vmem:[#allocation2 + $0xc1] sm:$0xff]
        %v460 = vld [vmem:[#allocation2 + $0xc9] sm:$0xff]
        %v461 = vld [vmem:[#allocation2 + $0xd9] sm:$0xff]
        %v462 = vld [vmem:[#allocation2 + $0xe1] sm:$0xff]
        %v463 = vld [vmem:[#allocation2 + $0xf1] sm:$0xff]
        %v464 = vld [vmem:[#allocation2 + $0xf9] sm:$0xff]
        %v465 = vld [vmem:[#allocation2 + $0x109] sm:$0xff]
        %v466 = vld [vmem:[#allocation2 + $0x111] sm:$0xff]
        %v467 = vld [vmem:[#allocation2 + $0x121] sm:$0xff]
        %v468 = vld [vmem:[#allocation2 + $0x129] sm:$0xff]
        %v469 = vld [vmem:[#allocation2 + $0x139] sm:$0xff]
        %v470 = vld [vmem:[#allocation2 + $0x141] sm:$0xff]
        %v471 = vld [vmem:[#allocation2 + $0x151] sm:$0xff]
        %v472 = vld [vmem:[#allocation2 + $0x159] sm:$0xff]
        %v473 = vld [vmem:[#allocation2 + $0x169] sm:$0xff]
        %v474 = vld [vmem:[#allocation2 + $0x171] sm:$0xff]
        %v475 = vpack.c.bf16 %v444, %v443
        %v476 = vpack.c.bf16 %v446, %v445
        %v477 = vpack.c.bf16 %v448, %v447
        %v478 = vpack.c.bf16 %v450, %v449
        %v479 = vpack.c.bf16 %v452, %v451
        %v480 = vpack.c.bf16 %v454, %v453
        %v481 = vpack.c.bf16 %v456, %v455
        %v482 = vpack.c.bf16 %v458, %v457
        %v483 = vpack.c.bf16 %v460, %v459
        %v484 = vpack.c.bf16 %v462, %v461
        %v485 = vpack.c.bf16 %v464, %v463
        %v486 = vpack.c.bf16 %v466, %v465
        %v487 = vpack.c.bf16 %v468, %v467
        %v488 = vpack.c.bf16 %v470, %v469
        %v489 = vpack.c.bf16 %v472, %v471
        %v490 = vpack.c.bf16 %v474, %v473
        %v491 = vld [vmem:[%s1] sm:$0xc]
        %v493 = vunpack.c.l.b16 %v491
        %v494 = vpack.c.b16 %v493, %v493
        %v495 = vrot.slane %v494, 2
        %v497 = vsel %vm241, %v475, 0
        %v500 = vsel %vm241, %v476, 0
        %v503 = vsel %vm241, %v477, 0
        %v506 = vsel %vm241, %v478, 0
        %v509 = vsel %vm241, %v479, 0
        %v512 = vsel %vm241, %v480, 0
        %v515 = vsel %vm241, %v481, 0
        %v518 = vsel %vm241, %v482, 0
        %v521 = vsel %vm241, %v483, 0
        %v524 = vsel %vm241, %v484, 0
        %v527 = vsel %vm241, %v485, 0
        %v530 = vsel %vm241, %v486, 0
        %v533 = vsel %vm241, %v487, 0
        %v536 = vsel %vm241, %v488, 0
        %v539 = vsel %vm241, %v489, 0
        %v542 = vsel %vm241, %v490, 0
        %vm544 = vcmask 1041408
        %v546 = vsel %vm544, %v495, 0
        %548 = vmatpush.bf16.msra.mxu0 0
        %549 = vmatpush.bf16.msra.mxu0 0
        %550 = vmatpush.bf16.msra.mxu0 0
        %551 = vmatpush.bf16.msra.mxu0 0
        %552 = vmatpush.bf16.msra.mxu0 0
        %553 = vmatpush.bf16.msra.mxu0 0
        %554 = vmatpush.bf16.msra.mxu0 0
        %555 = vmatpush.bf16.msra.mxu0 %v546
        %556 = vmatmul.bf16.gmra.mxu0 %v497
        %v557 = vpop.f32.mrf.mxu0
        %v558 = vadd.f32 0.0, %v557
        %v559 = vpop.f32.mrf.mxu0
        %v560 = vadd.f32 0.0, %v559
        %561 = vmatmul.bf16.gmra.mxu0 %v500
        %v562 = vpop.f32.mrf.mxu0
        %v563 = vadd.f32 0.0, %v562
        %v564 = vpop.f32.mrf.mxu0
        %v565 = vadd.f32 0.0, %v564
        %566 = vmatmul.bf16.gmra.mxu0 %v503
        %v567 = vpop.f32.mrf.mxu0
        %v568 = vadd.f32 0.0, %v567
        %v569 = vpop.f32.mrf.mxu0
        %v570 = vadd.f32 0.0, %v569
        %571 = vmatmul.bf16.gmra.mxu0 %v506
        %v572 = vpop.f32.mrf.mxu0
        %v573 = vadd.f32 0.0, %v572
        %v574 = vpop.f32.mrf.mxu0
        %v575 = vadd.f32 0.0, %v574
        %576 = vmatmul.bf16.gmra.mxu0 %v509
        %v577 = vpop.f32.mrf.mxu0
        %v578 = vadd.f32 0.0, %v577
        %v579 = vpop.f32.mrf.mxu0
        %v580 = vadd.f32 0.0, %v579
        %581 = vmatmul.bf16.gmra.mxu0 %v512
        %v582 = vpop.f32.mrf.mxu0
        %v583 = vadd.f32 0.0, %v582
        %v584 = vpop.f32.mrf.mxu0
        %v585 = vadd.f32 0.0, %v584
        %586 = vmatmul.bf16.gmra.mxu0 %v515
        %v587 = vpop.f32.mrf.mxu0
        %v588 = vadd.f32 0.0, %v587
        %v589 = vpop.f32.mrf.mxu0
        %v590 = vadd.f32 0.0, %v589
        %591 = vmatmul.bf16.gmra.mxu0 %v518
        %v592 = vpop.f32.mrf.mxu0
        %v593 = vadd.f32 0.0, %v592
        %v594 = vpop.f32.mrf.mxu0
        %v595 = vadd.f32 0.0, %v594
        %596 = vmatmul.bf16.gmra.mxu0 %v521
        %v597 = vpop.f32.mrf.mxu0
        %v598 = vadd.f32 0.0, %v597
        %v599 = vpop.f32.mrf.mxu0
        %v600 = vadd.f32 0.0, %v599
        %601 = vmatmul.bf16.gmra.mxu0 %v524
        %v602 = vpop.f32.mrf.mxu0
        %v603 = vadd.f32 0.0, %v602
        %v604 = vpop.f32.mrf.mxu0
        %v605 = vadd.f32 0.0, %v604
        %606 = vmatmul.bf16.gmra.mxu0 %v527
        %v607 = vpop.f32.mrf.mxu0
        %v608 = vadd.f32 0.0, %v607
        %v609 = vpop.f32.mrf.mxu0
        %v610 = vadd.f32 0.0, %v609
        %611 = vmatmul.bf16.gmra.mxu0 %v530
        %v612 = vpop.f32.mrf.mxu0
        %v613 = vadd.f32 0.0, %v612
        %v614 = vpop.f32.mrf.mxu0
        %v615 = vadd.f32 0.0, %v614
        %616 = vmatmul.bf16.gmra.mxu0 %v533
        %v617 = vpop.f32.mrf.mxu0
        %v618 = vadd.f32 0.0, %v617
        %v619 = vpop.f32.mrf.mxu0
        %v620 = vadd.f32 0.0, %v619
        %621 = vmatmul.bf16.gmra.mxu0 %v536
        %v622 = vpop.f32.mrf.mxu0
        %v623 = vadd.f32 0.0, %v622
        %v624 = vpop.f32.mrf.mxu0
        %v625 = vadd.f32 0.0, %v624
        %626 = vmatmul.bf16.gmra.mxu0 %v539
        %v627 = vpop.f32.mrf.mxu0
        %v628 = vadd.f32 0.0, %v627
        %v629 = vpop.f32.mrf.mxu0
        %v630 = vadd.f32 0.0, %v629
        %631 = vmatmul.bf16.gmra.mxu0 %v542
        %v632 = vpop.f32.mrf.mxu0
        %v633 = vadd.f32 0.0, %v632
        %v634 = vpop.f32.mrf.mxu0
        %v635 = vadd.f32 0.0, %v634
        %636 = vdwg.mxu0
        %v638 = vsel %vm241, %v426, 0
        %v641 = vsel %vm241, %v427, 0
        %v644 = vsel %vm241, %v428, 0
        %v647 = vsel %vm241, %v429, 0
        %v650 = vsel %vm241, %v430, 0
        %v653 = vsel %vm241, %v431, 0
        %v656 = vsel %vm241, %v432, 0
        %v659 = vsel %vm241, %v433, 0
        %v662 = vsel %vm241, %v434, 0
        %v665 = vsel %vm241, %v435, 0
        %v668 = vsel %vm241, %v436, 0
        %v671 = vsel %vm241, %v437, 0
        %v674 = vsel %vm241, %v438, 0
        %v677 = vsel %vm241, %v439, 0
        %v680 = vsel %vm241, %v440, 0
        %v683 = vsel %vm241, %v441, 0
        %v686 = vsel %vm544, %v442, 0
        %688 = vmatpush.bf16.msra.mxu0 0
        %689 = vmatpush.bf16.msra.mxu0 0
        %690 = vmatpush.bf16.msra.mxu0 0
        %691 = vmatpush.bf16.msra.mxu0 0
        %692 = vmatpush.bf16.msra.mxu0 0
        %693 = vmatpush.bf16.msra.mxu0 0
        %694 = vmatpush.bf16.msra.mxu0 0
        %695 = vmatpush.bf16.msra.mxu0 %v686
        %696 = vmatmul.bf16.gmra.mxu0 %v638
        %v697 = vpop.f32.mrf.mxu0
        %v698 = vadd.f32 %v558, %v697
        %v699 = vpop.f32.mrf.mxu0
        %v700 = vadd.f32 %v560, %v699
        %701 = vmatmul.bf16.gmra.mxu0 %v641
        %v702 = vpop.f32.mrf.mxu0
        %v703 = vadd.f32 %v563, %v702
        %v704 = vpop.f32.mrf.mxu0
        %v705 = vadd.f32 %v565, %v704
        %706 = vmatmul.bf16.gmra.mxu0 %v644
        %v707 = vpop.f32.mrf.mxu0
        %v708 = vadd.f32 %v568, %v707
        %v709 = vpop.f32.mrf.mxu0
        %v710 = vadd.f32 %v570, %v709
        %711 = vmatmul.bf16.gmra.mxu0 %v647
        %v712 = vpop.f32.mrf.mxu0
        %v713 = vadd.f32 %v573, %v712
        %v714 = vpop.f32.mrf.mxu0
        %v715 = vadd.f32 %v575, %v714
        %716 = vmatmul.bf16.gmra.mxu0 %v650
        %v717 = vpop.f32.mrf.mxu0
        %v718 = vadd.f32 %v578, %v717
        %v719 = vpop.f32.mrf.mxu0
        %v720 = vadd.f32 %v580, %v719
        %721 = vmatmul.bf16.gmra.mxu0 %v653
        %v722 = vpop.f32.mrf.mxu0
        %v723 = vadd.f32 %v583, %v722
        %v724 = vpop.f32.mrf.mxu0
        %v725 = vadd.f32 %v585, %v724
        %726 = vmatmul.bf16.gmra.mxu0 %v656
        %v727 = vpop.f32.mrf.mxu0
        %v728 = vadd.f32 %v588, %v727
        %v729 = vpop.f32.mrf.mxu0
        %v730 = vadd.f32 %v590, %v729
        %731 = vmatmul.bf16.gmra.mxu0 %v659
        %v732 = vpop.f32.mrf.mxu0
        %v733 = vadd.f32 %v593, %v732
        %v734 = vpop.f32.mrf.mxu0
        %v735 = vadd.f32 %v595, %v734
        %736 = vmatmul.bf16.gmra.mxu0 %v662
        %v737 = vpop.f32.mrf.mxu0
        %v738 = vadd.f32 %v598, %v737
        %v739 = vpop.f32.mrf.mxu0
        %v740 = vadd.f32 %v600, %v739
        %741 = vmatmul.bf16.gmra.mxu0 %v665
        %v742 = vpop.f32.mrf.mxu0
        %v743 = vadd.f32 %v603, %v742
        %v744 = vpop.f32.mrf.mxu0
        %v745 = vadd.f32 %v605, %v744
        %746 = vmatmul.bf16.gmra.mxu0 %v668
        %v747 = vpop.f32.mrf.mxu0
        %v748 = vadd.f32 %v608, %v747
        %v749 = vpop.f32.mrf.mxu0
        %v750 = vadd.f32 %v610, %v749
        %751 = vmatmul.bf16.gmra.mxu0 %v671
        %v752 = vpop.f32.mrf.mxu0
        %v753 = vadd.f32 %v613, %v752
        %v754 = vpop.f32.mrf.mxu0
        %v755 = vadd.f32 %v615, %v754
        %756 = vmatmul.bf16.gmra.mxu0 %v674
        %v757 = vpop.f32.mrf.mxu0
        %v758 = vadd.f32 %v618, %v757
        %v759 = vpop.f32.mrf.mxu0
        %v760 = vadd.f32 %v620, %v759
        %761 = vmatmul.bf16.gmra.mxu0 %v677
        %v762 = vpop.f32.mrf.mxu0
        %v763 = vadd.f32 %v623, %v762
        %v764 = vpop.f32.mrf.mxu0
        %v765 = vadd.f32 %v625, %v764
        %766 = vmatmul.bf16.gmra.mxu0 %v680
        %v767 = vpop.f32.mrf.mxu0
        %v768 = vadd.f32 %v628, %v767
        %v769 = vpop.f32.mrf.mxu0
        %v770 = vadd.f32 %v630, %v769
        %771 = vmatmul.bf16.gmra.mxu0 %v683
        %v772 = vpop.f32.mrf.mxu0
        %v773 = vadd.f32 %v633, %v772
        %v774 = vpop.f32.mrf.mxu0
        %v775 = vadd.f32 %v635, %v774
        %776 = vdwg.mxu0
        %v777 = vld [vmem:[#allocation2 + $0x2] sm:$0xff]
        %v778 = vld [vmem:[#allocation2 + $0xa] sm:$0xff]
        %v779 = vld [vmem:[#allocation2 + $0x1a] sm:$0xff]
        %v780 = vld [vmem:[#allocation2 + $0x22] sm:$0xff]
        %v781 = vld [vmem:[#allocation2 + $0x32] sm:$0xff]
        %v782 = vld [vmem:[#allocation2 + $0x3a] sm:$0xff]
        %v783 = vld [vmem:[#allocation2 + $0x4a] sm:$0xff]
        %v784 = vld [vmem:[#allocation2 + $0x52] sm:$0xff]
        %v785 = vld [vmem:[#allocation2 + $0x62] sm:$0xff]
        %v786 = vld [vmem:[#allocation2 + $0x6a] sm:$0xff]
        %v787 = vld [vmem:[#allocation2 + $0x7a] sm:$0xff]
        %v788 = vld [vmem:[#allocation2 + $0x82] sm:$0xff]
        %v789 = vld [vmem:[#allocation2 + $0x92] sm:$0xff]
        %v790 = vld [vmem:[#allocation2 + $0x9a] sm:$0xff]
        %v791 = vld [vmem:[#allocation2 + $0xaa] sm:$0xff]
        %v792 = vld [vmem:[#allocation2 + $0xb2] sm:$0xff]
        %v793 = vld [vmem:[#allocation2 + $0xc2] sm:$0xff]
        %v794 = vld [vmem:[#allocation2 + $0xca] sm:$0xff]
        %v795 = vld [vmem:[#allocation2 + $0xda] sm:$0xff]
        %v796 = vld [vmem:[#allocation2 + $0xe2] sm:$0xff]
        %v797 = vld [vmem:[#allocation2 + $0xf2] sm:$0xff]
        %v798 = vld [vmem:[#allocation2 + $0xfa] sm:$0xff]
        %v799 = vld [vmem:[#allocation2 + $0x10a] sm:$0xff]
        %v800 = vld [vmem:[#allocation2 + $0x112] sm:$0xff]
        %v801 = vld [vmem:[#allocation2 + $0x122] sm:$0xff]
        %v802 = vld [vmem:[#allocation2 + $0x12a] sm:$0xff]
        %v803 = vld [vmem:[#allocation2 + $0x13a] sm:$0xff]
        %v804 = vld [vmem:[#allocation2 + $0x142] sm:$0xff]
        %v805 = vld [vmem:[#allocation2 + $0x152] sm:$0xff]
        %v806 = vld [vmem:[#allocation2 + $0x15a] sm:$0xff]
        %v807 = vld [vmem:[#allocation2 + $0x16a] sm:$0xff]
        %v808 = vld [vmem:[#allocation2 + $0x172] sm:$0xff]
        %v809 = vpack.c.bf16 %v778, %v777
        %v810 = vpack.c.bf16 %v780, %v779
        %v811 = vpack.c.bf16 %v782, %v781
        %v812 = vpack.c.bf16 %v784, %v783
        %v813 = vpack.c.bf16 %v786, %v785
        %v814 = vpack.c.bf16 %v788, %v787
        %v815 = vpack.c.bf16 %v790, %v789
        %v816 = vpack.c.bf16 %v792, %v791
        %v817 = vpack.c.bf16 %v794, %v793
        %v818 = vpack.c.bf16 %v796, %v795
        %v819 = vpack.c.bf16 %v798, %v797
        %v820 = vpack.c.bf16 %v800, %v799
        %v821 = vpack.c.bf16 %v802, %v801
        %v822 = vpack.c.bf16 %v804, %v803
        %v823 = vpack.c.bf16 %v806, %v805
        %v824 = vpack.c.bf16 %v808, %v807
        %v825 = vld [vmem:[%s1 + $0x4] sm:$0x3]
        %v827 = vsel %vm241, %v809, 0
        %v830 = vsel %vm241, %v810, 0
        %v833 = vsel %vm241, %v811, 0
        %v836 = vsel %vm241, %v812, 0
        %v839 = vsel %vm241, %v813, 0
        %v842 = vsel %vm241, %v814, 0
        %v845 = vsel %vm241, %v815, 0
        %v848 = vsel %vm241, %v816, 0
        %v851 = vsel %vm241, %v817, 0
        %v854 = vsel %vm241, %v818, 0
        %v857 = vsel %vm241, %v819, 0
        %v860 = vsel %vm241, %v820, 0
        %v863 = vsel %vm241, %v821, 0
        %v866 = vsel %vm241, %v822, 0
        %v869 = vsel %vm241, %v823, 0
        %v872 = vsel %vm241, %v824, 0
        %v875 = vsel %vm544, %v825, 0
        %877 = vmatpush.bf16.msra.mxu0 0
        %878 = vmatpush.bf16.msra.mxu0 0
        %879 = vmatpush.bf16.msra.mxu0 0
        %880 = vmatpush.bf16.msra.mxu0 0
        %881 = vmatpush.bf16.msra.mxu0 0
        %882 = vmatpush.bf16.msra.mxu0 0
        %883 = vmatpush.bf16.msra.mxu0 0
        %884 = vmatpush.bf16.msra.mxu0 %v875
        %885 = vmatmul.bf16.gmra.mxu0 %v827
        %v886 = vpop.f32.mrf.mxu0
        %v887 = vadd.f32 0.0, %v886
        %v888 = vpop.f32.mrf.mxu0
        %v889 = vadd.f32 0.0, %v888
        %890 = vmatmul.bf16.gmra.mxu0 %v830
        %v891 = vpop.f32.mrf.mxu0
        %v892 = vadd.f32 0.0, %v891
        %v893 = vpop.f32.mrf.mxu0
        %v894 = vadd.f32 0.0, %v893
        %895 = vmatmul.bf16.gmra.mxu0 %v833
        %v896 = vpop.f32.mrf.mxu0
        %v897 = vadd.f32 0.0, %v896
        %v898 = vpop.f32.mrf.mxu0
        %v899 = vadd.f32 0.0, %v898
        %900 = vmatmul.bf16.gmra.mxu0 %v836
        %v901 = vpop.f32.mrf.mxu0
        %v902 = vadd.f32 0.0, %v901
        %v903 = vpop.f32.mrf.mxu0
        %v904 = vadd.f32 0.0, %v903
        %905 = vmatmul.bf16.gmra.mxu0 %v839
        %v906 = vpop.f32.mrf.mxu0
        %v907 = vadd.f32 0.0, %v906
        %v908 = vpop.f32.mrf.mxu0
        %v909 = vadd.f32 0.0, %v908
        %910 = vmatmul.bf16.gmra.mxu0 %v842
        %v911 = vpop.f32.mrf.mxu0
        %v912 = vadd.f32 0.0, %v911
        %v913 = vpop.f32.mrf.mxu0
        %v914 = vadd.f32 0.0, %v913
        %915 = vmatmul.bf16.gmra.mxu0 %v845
        %v916 = vpop.f32.mrf.mxu0
        %v917 = vadd.f32 0.0, %v916
        %v918 = vpop.f32.mrf.mxu0
        %v919 = vadd.f32 0.0, %v918
        %920 = vmatmul.bf16.gmra.mxu0 %v848
        %v921 = vpop.f32.mrf.mxu0
        %v922 = vadd.f32 0.0, %v921
        %v923 = vpop.f32.mrf.mxu0
        %v924 = vadd.f32 0.0, %v923
        %925 = vmatmul.bf16.gmra.mxu0 %v851
        %v926 = vpop.f32.mrf.mxu0
        %v927 = vadd.f32 0.0, %v926
        %v928 = vpop.f32.mrf.mxu0
        %v929 = vadd.f32 0.0, %v928
        %930 = vmatmul.bf16.gmra.mxu0 %v854
        %v931 = vpop.f32.mrf.mxu0
        %v932 = vadd.f32 0.0, %v931
        %v933 = vpop.f32.mrf.mxu0
        %v934 = vadd.f32 0.0, %v933
        %935 = vmatmul.bf16.gmra.mxu0 %v857
        %v936 = vpop.f32.mrf.mxu0
        %v937 = vadd.f32 0.0, %v936
        %v938 = vpop.f32.mrf.mxu0
        %v939 = vadd.f32 0.0, %v938
        %940 = vmatmul.bf16.gmra.mxu0 %v860
        %v941 = vpop.f32.mrf.mxu0
        %v942 = vadd.f32 0.0, %v941
        %v943 = vpop.f32.mrf.mxu0
        %v944 = vadd.f32 0.0, %v943
        %945 = vmatmul.bf16.gmra.mxu0 %v863
        %v946 = vpop.f32.mrf.mxu0
        %v947 = vadd.f32 0.0, %v946
        %v948 = vpop.f32.mrf.mxu0
        %v949 = vadd.f32 0.0, %v948
        %950 = vmatmul.bf16.gmra.mxu0 %v866
        %v951 = vpop.f32.mrf.mxu0
        %v952 = vadd.f32 0.0, %v951
        %v953 = vpop.f32.mrf.mxu0
        %v954 = vadd.f32 0.0, %v953
        %955 = vmatmul.bf16.gmra.mxu0 %v869
        %v956 = vpop.f32.mrf.mxu0
        %v957 = vadd.f32 0.0, %v956
        %v958 = vpop.f32.mrf.mxu0
        %v959 = vadd.f32 0.0, %v958
        %960 = vmatmul.bf16.gmra.mxu0 %v872
        %v961 = vpop.f32.mrf.mxu0
        %v962 = vadd.f32 0.0, %v961
        %v963 = vpop.f32.mrf.mxu0
        %v964 = vadd.f32 0.0, %v963
        %965 = vdwg.mxu0
        %v966 = vadd.f32 %v698, %v887
        %v967 = vadd.f32 %v700, %v889
        %v968 = vadd.f32 %v703, %v892
        %v969 = vadd.f32 %v705, %v894
        %v970 = vadd.f32 %v708, %v897
        %v971 = vadd.f32 %v710, %v899
        %v972 = vadd.f32 %v713, %v902
        %v973 = vadd.f32 %v715, %v904
        %v974 = vadd.f32 %v718, %v907
        %v975 = vadd.f32 %v720, %v909
        %v976 = vadd.f32 %v723, %v912
        %v977 = vadd.f32 %v725, %v914
        %v978 = vadd.f32 %v728, %v917
        %v979 = vadd.f32 %v730, %v919
        %v980 = vadd.f32 %v733, %v922
        %v981 = vadd.f32 %v735, %v924
        %v982 = vadd.f32 %v738, %v927
        %v983 = vadd.f32 %v740, %v929
        %v984 = vadd.f32 %v743, %v932
        %v985 = vadd.f32 %v745, %v934
        %v986 = vadd.f32 %v748, %v937
        %v987 = vadd.f32 %v750, %v939
        %v988 = vadd.f32 %v753, %v942
        %v989 = vadd.f32 %v755, %v944
        %v990 = vadd.f32 %v758, %v947
        %v991 = vadd.f32 %v760, %v949
        %v992 = vadd.f32 %v763, %v952
        %v993 = vadd.f32 %v765, %v954
        %v994 = vadd.f32 %v768, %v957
        %v995 = vadd.f32 %v770, %v959
        %v996 = vadd.f32 %v773, %v962
        %v997 = vadd.f32 %v775, %v964
        %v998 = vld [vmem:[%s361] sm:$0xff]
        %v999 = vld [vmem:[%s361 + $0x8] sm:$0xff]
        %v1000 = vld [vmem:[%s361 + $0x18] sm:$0xff]
        %v1001 = vld [vmem:[%s361 + $0x20] sm:$0xff]
        %v1002 = vld [vmem:[%s361 + $0x30] sm:$0xff]
        %v1003 = vld [vmem:[%s361 + $0x38] sm:$0xff]
        %v1004 = vld [vmem:[%s361 + $0x48] sm:$0xff]
        %v1005 = vld [vmem:[%s361 + $0x50] sm:$0xff]
        %v1006 = vld [vmem:[%s361 + $0x60] sm:$0xff]
        %v1007 = vld [vmem:[%s361 + $0x68] sm:$0xff]
        %v1008 = vld [vmem:[%s361 + $0x78] sm:$0xff]
        %v1009 = vld [vmem:[%s361 + $0x80] sm:$0xff]
        %v1010 = vld [vmem:[%s361 + $0x90] sm:$0xff]
        %v1011 = vld [vmem:[%s361 + $0x98] sm:$0xff]
        %v1012 = vld [vmem:[%s361 + $0xa8] sm:$0xff]
        %v1013 = vld [vmem:[%s361 + $0xb0] sm:$0xff]
        %v1014 = vld [vmem:[%s361 + $0xc0] sm:$0xff]
        %v1015 = vld [vmem:[%s361 + $0xc8] sm:$0xff]
        %v1016 = vld [vmem:[%s361 + $0xd8] sm:$0xff]
        %v1017 = vld [vmem:[%s361 + $0xe0] sm:$0xff]
        %v1018 = vld [vmem:[%s361 + $0xf0] sm:$0xff]
        %v1019 = vld [vmem:[%s361 + $0xf8] sm:$0xff]
        %v1020 = vld [vmem:[%s361 + $0x108] sm:$0xff]
        %v1021 = vld [vmem:[%s361 + $0x110] sm:$0xff]
        %v1022 = vld [vmem:[%s361 + $0x120] sm:$0xff]
        %v1023 = vld [vmem:[%s361 + $0x128] sm:$0xff]
        %v1024 = vld [vmem:[%s361 + $0x138] sm:$0xff]
        %v1025 = vld [vmem:[%s361 + $0x140] sm:$0xff]
        %v1026 = vld [vmem:[%s361 + $0x150] sm:$0xff]
        %v1027 = vld [vmem:[%s361 + $0x158] sm:$0xff]
        %v1028 = vld [vmem:[%s361 + $0x168] sm:$0xff]
        %v1029 = vld [vmem:[%s361 + $0x170] sm:$0xff]
        %v1030 = vpack.c.bf16 %v999, %v998
        %v1031 = vpack.c.bf16 %v1001, %v1000
        %v1032 = vpack.c.bf16 %v1003, %v1002
        %v1033 = vpack.c.bf16 %v1005, %v1004
        %v1034 = vpack.c.bf16 %v1007, %v1006
        %v1035 = vpack.c.bf16 %v1009, %v1008
        %v1036 = vpack.c.bf16 %v1011, %v1010
        %v1037 = vpack.c.bf16 %v1013, %v1012
        %v1038 = vpack.c.bf16 %v1015, %v1014
        %v1039 = vpack.c.bf16 %v1017, %v1016
        %v1040 = vpack.c.bf16 %v1019, %v1018
        %v1041 = vpack.c.bf16 %v1021, %v1020
        %v1042 = vpack.c.bf16 %v1023, %v1022
        %v1043 = vpack.c.bf16 %v1025, %v1024
        %v1044 = vpack.c.bf16 %v1027, %v1026
        %v1045 = vpack.c.bf16 %v1029, %v1028
        %v1046 = vld [vmem:[%s1 + $0x4] sm:$0xc]
        %v1048 = vunpack.c.l.b16 %v1046
        %v1049 = vpack.c.b16 %v1048, %v1048
        %v1050 = vrot.slane %v1049, 2
        %v1052 = vsel %vm241, %v1030, 0
        %v1055 = vsel %vm241, %v1031, 0
        %v1058 = vsel %vm241, %v1032, 0
        %v1061 = vsel %vm241, %v1033, 0
        %v1064 = vsel %vm241, %v1034, 0
        %v1067 = vsel %vm241, %v1035, 0
        %v1070 = vsel %vm241, %v1036, 0
        %v1073 = vsel %vm241, %v1037, 0
        %v1076 = vsel %vm241, %v1038, 0
        %v1079 = vsel %vm241, %v1039, 0
        %v1082 = vsel %vm241, %v1040, 0
        %v1085 = vsel %vm241, %v1041, 0
        %v1088 = vsel %vm241, %v1042, 0
        %v1091 = vsel %vm241, %v1043, 0
        %v1094 = vsel %vm241, %v1044, 0
        %v1097 = vsel %vm241, %v1045, 0
        %v1100 = vsel %vm544, %v1050, 0
        %1102 = vmatpush.bf16.msra.mxu0 0
        %1103 = vmatpush.bf16.msra.mxu0 0
        %1104 = vmatpush.bf16.msra.mxu0 0
        %1105 = vmatpush.bf16.msra.mxu0 0
        %1106 = vmatpush.bf16.msra.mxu0 0
        %1107 = vmatpush.bf16.msra.mxu0 0
        %1108 = vmatpush.bf16.msra.mxu0 0
        %1109 = vmatpush.bf16.msra.mxu0 %v1100
        %1110 = vmatmul.bf16.gmra.mxu0 %v1052
        %v1111 = vpop.f32.mrf.mxu0
        %v1112 = vadd.f32 0.0, %v1111
        %v1113 = vpop.f32.mrf.mxu0
        %v1114 = vadd.f32 0.0, %v1113
        %1115 = vmatmul.bf16.gmra.mxu0 %v1055
        %v1116 = vpop.f32.mrf.mxu0
        %v1117 = vadd.f32 0.0, %v1116
        %v1118 = vpop.f32.mrf.mxu0
        %v1119 = vadd.f32 0.0, %v1118
        %1120 = vmatmul.bf16.gmra.mxu0 %v1058
        %v1121 = vpop.f32.mrf.mxu0
        %v1122 = vadd.f32 0.0, %v1121
        %v1123 = vpop.f32.mrf.mxu0
        %v1124 = vadd.f32 0.0, %v1123
        %1125 = vmatmul.bf16.gmra.mxu0 %v1061
        %v1126 = vpop.f32.mrf.mxu0
        %v1127 = vadd.f32 0.0, %v1126
        %v1128 = vpop.f32.mrf.mxu0
        %v1129 = vadd.f32 0.0, %v1128
        %1130 = vmatmul.bf16.gmra.mxu0 %v1064
        %v1131 = vpop.f32.mrf.mxu0
        %v1132 = vadd.f32 0.0, %v1131
        %v1133 = vpop.f32.mrf.mxu0
        %v1134 = vadd.f32 0.0, %v1133
        %1135 = vmatmul.bf16.gmra.mxu0 %v1067
        %v1136 = vpop.f32.mrf.mxu0
        %v1137 = vadd.f32 0.0, %v1136
        %v1138 = vpop.f32.mrf.mxu0
        %v1139 = vadd.f32 0.0, %v1138
        %1140 = vmatmul.bf16.gmra.mxu0 %v1070
        %v1141 = vpop.f32.mrf.mxu0
        %v1142 = vadd.f32 0.0, %v1141
        %v1143 = vpop.f32.mrf.mxu0
        %v1144 = vadd.f32 0.0, %v1143
        %1145 = vmatmul.bf16.gmra.mxu0 %v1073
        %v1146 = vpop.f32.mrf.mxu0
        %v1147 = vadd.f32 0.0, %v1146
        %v1148 = vpop.f32.mrf.mxu0
        %v1149 = vadd.f32 0.0, %v1148
        %1150 = vmatmul.bf16.gmra.mxu0 %v1076
        %v1151 = vpop.f32.mrf.mxu0
        %v1152 = vadd.f32 0.0, %v1151
        %v1153 = vpop.f32.mrf.mxu0
        %v1154 = vadd.f32 0.0, %v1153
        %1155 = vmatmul.bf16.gmra.mxu0 %v1079
        %v1156 = vpop.f32.mrf.mxu0
        %v1157 = vadd.f32 0.0, %v1156
        %v1158 = vpop.f32.mrf.mxu0
        %v1159 = vadd.f32 0.0, %v1158
        %1160 = vmatmul.bf16.gmra.mxu0 %v1082
        %v1161 = vpop.f32.mrf.mxu0
        %v1162 = vadd.f32 0.0, %v1161
        %v1163 = vpop.f32.mrf.mxu0
        %v1164 = vadd.f32 0.0, %v1163
        %1165 = vmatmul.bf16.gmra.mxu0 %v1085
        %v1166 = vpop.f32.mrf.mxu0
        %v1167 = vadd.f32 0.0, %v1166
        %v1168 = vpop.f32.mrf.mxu0
        %v1169 = vadd.f32 0.0, %v1168
        %1170 = vmatmul.bf16.gmra.mxu0 %v1088
        %v1171 = vpop.f32.mrf.mxu0
        %v1172 = vadd.f32 0.0, %v1171
        %v1173 = vpop.f32.mrf.mxu0
        %v1174 = vadd.f32 0.0, %v1173
        %1175 = vmatmul.bf16.gmra.mxu0 %v1091
        %v1176 = vpop.f32.mrf.mxu0
        %v1177 = vadd.f32 0.0, %v1176
        %v1178 = vpop.f32.mrf.mxu0
        %v1179 = vadd.f32 0.0, %v1178
        %1180 = vmatmul.bf16.gmra.mxu0 %v1094
        %v1181 = vpop.f32.mrf.mxu0
        %v1182 = vadd.f32 0.0, %v1181
        %v1183 = vpop.f32.mrf.mxu0
        %v1184 = vadd.f32 0.0, %v1183
        %1185 = vmatmul.bf16.gmra.mxu0 %v1097
        %v1186 = vpop.f32.mrf.mxu0
        %v1187 = vadd.f32 0.0, %v1186
        %v1188 = vpop.f32.mrf.mxu0
        %v1189 = vadd.f32 0.0, %v1188
        %1190 = vdwg.mxu0
        %v1191 = vadd.f32 %v966, %v1112
        %v1192 = vadd.f32 %v967, %v1114
        %v1193 = vadd.f32 %v968, %v1117
        %v1194 = vadd.f32 %v969, %v1119
        %v1195 = vadd.f32 %v970, %v1122
        %v1196 = vadd.f32 %v971, %v1124
        %v1197 = vadd.f32 %v972, %v1127
        %v1198 = vadd.f32 %v973, %v1129
        %v1199 = vadd.f32 %v974, %v1132
        %v1200 = vadd.f32 %v975, %v1134
        %v1201 = vadd.f32 %v976, %v1137
        %v1202 = vadd.f32 %v977, %v1139
        %v1203 = vadd.f32 %v978, %v1142
        %v1204 = vadd.f32 %v979, %v1144
        %v1205 = vadd.f32 %v980, %v1147
        %v1206 = vadd.f32 %v981, %v1149
        %v1207 = vadd.f32 %v982, %v1152
        %v1208 = vadd.f32 %v983, %v1154
        %v1209 = vadd.f32 %v984, %v1157
        %v1210 = vadd.f32 %v985, %v1159
        %v1211 = vadd.f32 %v986, %v1162
        %v1212 = vadd.f32 %v987, %v1164
        %v1213 = vadd.f32 %v988, %v1167
        %v1214 = vadd.f32 %v989, %v1169
        %v1215 = vadd.f32 %v990, %v1172
        %v1216 = vadd.f32 %v991, %v1174
        %v1217 = vadd.f32 %v992, %v1177
        %v1218 = vadd.f32 %v993, %v1179
        %v1219 = vadd.f32 %v994, %v1182
        %v1220 = vadd.f32 %v995, %v1184
        %v1221 = vadd.f32 %v996, %v1187
        %v1222 = vadd.f32 %v997, %v1189
        %v1223 = vld [vmem:[%s361 + $0x1] sm:$0xff]
        %v1224 = vld [vmem:[%s361 + $0x9] sm:$0xff]
        %v1225 = vld [vmem:[%s361 + $0x19] sm:$0xff]
        %v1226 = vld [vmem:[%s361 + $0x21] sm:$0xff]
        %v1227 = vld [vmem:[%s361 + $0x31] sm:$0xff]
        %v1228 = vld [vmem:[%s361 + $0x39] sm:$0xff]
        %v1229 = vld [vmem:[%s361 + $0x49] sm:$0xff]
        %v1230 = vld [vmem:[%s361 + $0x51] sm:$0xff]
        %v1231 = vld [vmem:[%s361 + $0x61] sm:$0xff]
        %v1232 = vld [vmem:[%s361 + $0x69] sm:$0xff]
        %v1233 = vld [vmem:[%s361 + $0x79] sm:$0xff]
        %v1234 = vld [vmem:[%s361 + $0x81] sm:$0xff]
        %v1235 = vld [vmem:[%s361 + $0x91] sm:$0xff]
        %v1236 = vld [vmem:[%s361 + $0x99] sm:$0xff]
        %v1237 = vld [vmem:[%s361 + $0xa9] sm:$0xff]
        %v1238 = vld [vmem:[%s361 + $0xb1] sm:$0xff]
        %v1239 = vld [vmem:[%s361 + $0xc1] sm:$0xff]
        %v1240 = vld [vmem:[%s361 + $0xc9] sm:$0xff]
        %v1241 = vld [vmem:[%s361 + $0xd9] sm:$0xff]
        %v1242 = vld [vmem:[%s361 + $0xe1] sm:$0xff]
        %v1243 = vld [vmem:[%s361 + $0xf1] sm:$0xff]
        %v1244 = vld [vmem:[%s361 + $0xf9] sm:$0xff]
        %v1245 = vld [vmem:[%s361 + $0x109] sm:$0xff]
        %v1246 = vld [vmem:[%s361 + $0x111] sm:$0xff]
        %v1247 = vld [vmem:[%s361 + $0x121] sm:$0xff]
        %v1248 = vld [vmem:[%s361 + $0x129] sm:$0xff]
        %v1249 = vld [vmem:[%s361 + $0x139] sm:$0xff]
        %v1250 = vld [vmem:[%s361 + $0x141] sm:$0xff]
        %v1251 = vld [vmem:[%s361 + $0x151] sm:$0xff]
        %v1252 = vld [vmem:[%s361 + $0x159] sm:$0xff]
        %v1253 = vld [vmem:[%s361 + $0x169] sm:$0xff]
        %v1254 = vld [vmem:[%s361 + $0x171] sm:$0xff]
        %v1255 = vpack.c.bf16 %v1224, %v1223
        %v1256 = vpack.c.bf16 %v1226, %v1225
        %v1257 = vpack.c.bf16 %v1228, %v1227
        %v1258 = vpack.c.bf16 %v1230, %v1229
        %v1259 = vpack.c.bf16 %v1232, %v1231
        %v1260 = vpack.c.bf16 %v1234, %v1233
        %v1261 = vpack.c.bf16 %v1236, %v1235
        %v1262 = vpack.c.bf16 %v1238, %v1237
        %v1263 = vpack.c.bf16 %v1240, %v1239
        %v1264 = vpack.c.bf16 %v1242, %v1241
        %v1265 = vpack.c.bf16 %v1244, %v1243
        %v1266 = vpack.c.bf16 %v1246, %v1245
        %v1267 = vpack.c.bf16 %v1248, %v1247
        %v1268 = vpack.c.bf16 %v1250, %v1249
        %v1269 = vpack.c.bf16 %v1252, %v1251
        %v1270 = vpack.c.bf16 %v1254, %v1253
        %v1271 = vld [vmem:[%s1 + $0x8] sm:$0x3]
        %v1273 = vsel %vm241, %v1255, 0
        %v1276 = vsel %vm241, %v1256, 0
        %v1279 = vsel %vm241, %v1257, 0
        %v1282 = vsel %vm241, %v1258, 0
        %v1285 = vsel %vm241, %v1259, 0
        %v1288 = vsel %vm241, %v1260, 0
        %v1291 = vsel %vm241, %v1261, 0
        %v1294 = vsel %vm241, %v1262, 0
        %v1297 = vsel %vm241, %v1263, 0
        %v1300 = vsel %vm241, %v1264, 0
        %v1303 = vsel %vm241, %v1265, 0
        %v1306 = vsel %vm241, %v1266, 0
        %v1309 = vsel %vm241, %v1267, 0
        %v1312 = vsel %vm241, %v1268, 0
        %v1315 = vsel %vm241, %v1269, 0
        %v1318 = vsel %vm241, %v1270, 0
        %v1321 = vsel %vm544, %v1271, 0
        %1323 = vmatpush.bf16.msra.mxu0 0
        %1324 = vmatpush.bf16.msra.mxu0 0
        %1325 = vmatpush.bf16.msra.mxu0 0
        %1326 = vmatpush.bf16.msra.mxu0 0
        %1327 = vmatpush.bf16.msra.mxu0 0
        %1328 = vmatpush.bf16.msra.mxu0 0
        %1329 = vmatpush.bf16.msra.mxu0 0
        %1330 = vmatpush.bf16.msra.mxu0 %v1321
        %1331 = vmatmul.bf16.gmra.mxu0 %v1273
        %v1332 = vpop.f32.mrf.mxu0
        %v1333 = vadd.f32 0.0, %v1332
        %v1334 = vpop.f32.mrf.mxu0
        %v1335 = vadd.f32 0.0, %v1334
        %1336 = vmatmul.bf16.gmra.mxu0 %v1276
        %v1337 = vpop.f32.mrf.mxu0
        %v1338 = vadd.f32 0.0, %v1337
        %v1339 = vpop.f32.mrf.mxu0
        %v1340 = vadd.f32 0.0, %v1339
        %1341 = vmatmul.bf16.gmra.mxu0 %v1279
        %v1342 = vpop.f32.mrf.mxu0
        %v1343 = vadd.f32 0.0, %v1342
        %v1344 = vpop.f32.mrf.mxu0
        %v1345 = vadd.f32 0.0, %v1344
        %1346 = vmatmul.bf16.gmra.mxu0 %v1282
        %v1347 = vpop.f32.mrf.mxu0
        %v1348 = vadd.f32 0.0, %v1347
        %v1349 = vpop.f32.mrf.mxu0
        %v1350 = vadd.f32 0.0, %v1349
        %1351 = vmatmul.bf16.gmra.mxu0 %v1285
        %v1352 = vpop.f32.mrf.mxu0
        %v1353 = vadd.f32 0.0, %v1352
        %v1354 = vpop.f32.mrf.mxu0
        %v1355 = vadd.f32 0.0, %v1354
        %1356 = vmatmul.bf16.gmra.mxu0 %v1288
        %v1357 = vpop.f32.mrf.mxu0
        %v1358 = vadd.f32 0.0, %v1357
        %v1359 = vpop.f32.mrf.mxu0
        %v1360 = vadd.f32 0.0, %v1359
        %1361 = vmatmul.bf16.gmra.mxu0 %v1291
        %v1362 = vpop.f32.mrf.mxu0
        %v1363 = vadd.f32 0.0, %v1362
        %v1364 = vpop.f32.mrf.mxu0
        %v1365 = vadd.f32 0.0, %v1364
        %1366 = vmatmul.bf16.gmra.mxu0 %v1294
        %v1367 = vpop.f32.mrf.mxu0
        %v1368 = vadd.f32 0.0, %v1367
        %v1369 = vpop.f32.mrf.mxu0
        %v1370 = vadd.f32 0.0, %v1369
        %1371 = vmatmul.bf16.gmra.mxu0 %v1297
        %v1372 = vpop.f32.mrf.mxu0
        %v1373 = vadd.f32 0.0, %v1372
        %v1374 = vpop.f32.mrf.mxu0
        %v1375 = vadd.f32 0.0, %v1374
        %1376 = vmatmul.bf16.gmra.mxu0 %v1300
        %v1377 = vpop.f32.mrf.mxu0
        %v1378 = vadd.f32 0.0, %v1377
        %v1379 = vpop.f32.mrf.mxu0
        %v1380 = vadd.f32 0.0, %v1379
        %1381 = vmatmul.bf16.gmra.mxu0 %v1303
        %v1382 = vpop.f32.mrf.mxu0
        %v1383 = vadd.f32 0.0, %v1382
        %v1384 = vpop.f32.mrf.mxu0
        %v1385 = vadd.f32 0.0, %v1384
        %1386 = vmatmul.bf16.gmra.mxu0 %v1306
        %v1387 = vpop.f32.mrf.mxu0
        %v1388 = vadd.f32 0.0, %v1387
        %v1389 = vpop.f32.mrf.mxu0
        %v1390 = vadd.f32 0.0, %v1389
        %1391 = vmatmul.bf16.gmra.mxu0 %v1309
        %v1392 = vpop.f32.mrf.mxu0
        %v1393 = vadd.f32 0.0, %v1392
        %v1394 = vpop.f32.mrf.mxu0
        %v1395 = vadd.f32 0.0, %v1394
        %1396 = vmatmul.bf16.gmra.mxu0 %v1312
        %v1397 = vpop.f32.mrf.mxu0
        %v1398 = vadd.f32 0.0, %v1397
        %v1399 = vpop.f32.mrf.mxu0
        %v1400 = vadd.f32 0.0, %v1399
        %1401 = vmatmul.bf16.gmra.mxu0 %v1315
        %v1402 = vpop.f32.mrf.mxu0
        %v1403 = vadd.f32 0.0, %v1402
        %v1404 = vpop.f32.mrf.mxu0
        %v1405 = vadd.f32 0.0, %v1404
        %1406 = vmatmul.bf16.gmra.mxu0 %v1318
        %v1407 = vpop.f32.mrf.mxu0
        %v1408 = vadd.f32 0.0, %v1407
        %v1409 = vpop.f32.mrf.mxu0
        %v1410 = vadd.f32 0.0, %v1409
        %1411 = vdwg.mxu0
        %v1412 = vadd.f32 %v1191, %v1333
        %v1413 = vadd.f32 %v1192, %v1335
        %v1414 = vadd.f32 %v1193, %v1338
        %v1415 = vadd.f32 %v1194, %v1340
        %v1416 = vadd.f32 %v1195, %v1343
        %v1417 = vadd.f32 %v1196, %v1345
        %v1418 = vadd.f32 %v1197, %v1348
        %v1419 = vadd.f32 %v1198, %v1350
        %v1420 = vadd.f32 %v1199, %v1353
        %v1421 = vadd.f32 %v1200, %v1355
        %v1422 = vadd.f32 %v1201, %v1358
        %v1423 = vadd.f32 %v1202, %v1360
        %v1424 = vadd.f32 %v1203, %v1363
        %v1425 = vadd.f32 %v1204, %v1365
        %v1426 = vadd.f32 %v1205, %v1368
        %v1427 = vadd.f32 %v1206, %v1370
        %v1428 = vadd.f32 %v1207, %v1373
        %v1429 = vadd.f32 %v1208, %v1375
        %v1430 = vadd.f32 %v1209, %v1378
        %v1431 = vadd.f32 %v1210, %v1380
        %v1432 = vadd.f32 %v1211, %v1383
        %v1433 = vadd.f32 %v1212, %v1385
        %v1434 = vadd.f32 %v1213, %v1388
        %v1435 = vadd.f32 %v1214, %v1390
        %v1436 = vadd.f32 %v1215, %v1393
        %v1437 = vadd.f32 %v1216, %v1395
        %v1438 = vadd.f32 %v1217, %v1398
        %v1439 = vadd.f32 %v1218, %v1400
        %v1440 = vadd.f32 %v1219, %v1403
        %v1441 = vadd.f32 %v1220, %v1405
        %v1442 = vadd.f32 %v1221, %v1408
        %v1443 = vadd.f32 %v1222, %v1410
        %v1444 = vld [vmem:[%s361 + $0x2] sm:$0xff]
        %v1445 = vld [vmem:[%s361 + $0xa] sm:$0xff]
        %v1446 = vld [vmem:[%s361 + $0x1a] sm:$0xff]
        %v1447 = vld [vmem:[%s361 + $0x22] sm:$0xff]
        %v1448 = vld [vmem:[%s361 + $0x32] sm:$0xff]
        %v1449 = vld [vmem:[%s361 + $0x3a] sm:$0xff]
        %v1450 = vld [vmem:[%s361 + $0x4a] sm:$0xff]
        %v1451 = vld [vmem:[%s361 + $0x52] sm:$0xff]
        %v1452 = vld [vmem:[%s361 + $0x62] sm:$0xff]
        %v1453 = vld [vmem:[%s361 + $0x6a] sm:$0xff]
        %v1454 = vld [vmem:[%s361 + $0x7a] sm:$0xff]
        %v1455 = vld [vmem:[%s361 + $0x82] sm:$0xff]
        %v1456 = vld [vmem:[%s361 + $0x92] sm:$0xff]
        %v1457 = vld [vmem:[%s361 + $0x9a] sm:$0xff]
        %v1458 = vld [vmem:[%s361 + $0xaa] sm:$0xff]
        %v1459 = vld [vmem:[%s361 + $0xb2] sm:$0xff]
        %v1460 = vld [vmem:[%s361 + $0xc2] sm:$0xff]
        %v1461 = vld [vmem:[%s361 + $0xca] sm:$0xff]
        %v1462 = vld [vmem:[%s361 + $0xda] sm:$0xff]
        %v1463 = vld [vmem:[%s361 + $0xe2] sm:$0xff]
        %v1464 = vld [vmem:[%s361 + $0xf2] sm:$0xff]
        %v1465 = vld [vmem:[%s361 + $0xfa] sm:$0xff]
        %v1466 = vld [vmem:[%s361 + $0x10a] sm:$0xff]
        %v1467 = vld [vmem:[%s361 + $0x112] sm:$0xff]
        %v1468 = vld [vmem:[%s361 + $0x122] sm:$0xff]
        %v1469 = vld [vmem:[%s361 + $0x12a] sm:$0xff]
        %v1470 = vld [vmem:[%s361 + $0x13a] sm:$0xff]
        %v1471 = vld [vmem:[%s361 + $0x142] sm:$0xff]
        %v1472 = vld [vmem:[%s361 + $0x152] sm:$0xff]
        %v1473 = vld [vmem:[%s361 + $0x15a] sm:$0xff]
        %v1474 = vld [vmem:[%s361 + $0x16a] sm:$0xff]
        %v1475 = vld [vmem:[%s361 + $0x172] sm:$0xff]
        %v1476 = vpack.c.bf16 %v1445, %v1444
        %v1477 = vpack.c.bf16 %v1447, %v1446
        %v1478 = vpack.c.bf16 %v1449, %v1448
        %v1479 = vpack.c.bf16 %v1451, %v1450
        %v1480 = vpack.c.bf16 %v1453, %v1452
        %v1481 = vpack.c.bf16 %v1455, %v1454
        %v1482 = vpack.c.bf16 %v1457, %v1456
        %v1483 = vpack.c.bf16 %v1459, %v1458
        %v1484 = vpack.c.bf16 %v1461, %v1460
        %v1485 = vpack.c.bf16 %v1463, %v1462
        %v1486 = vpack.c.bf16 %v1465, %v1464
        %v1487 = vpack.c.bf16 %v1467, %v1466
        %v1488 = vpack.c.bf16 %v1469, %v1468
        %v1489 = vpack.c.bf16 %v1471, %v1470
        %v1490 = vpack.c.bf16 %v1473, %v1472
        %v1491 = vpack.c.bf16 %v1475, %v1474
        %v1492 = vld [vmem:[%s1 + $0x8] sm:$0xc]
        %v1494 = vunpack.c.l.b16 %v1492
        %v1495 = vpack.c.b16 %v1494, %v1494
        %v1496 = vrot.slane %v1495, 2
        %v1498 = vsel %vm241, %v1476, 0
        %v1501 = vsel %vm241, %v1477, 0
        %v1504 = vsel %vm241, %v1478, 0
        %v1507 = vsel %vm241, %v1479, 0
        %v1510 = vsel %vm241, %v1480, 0
        %v1513 = vsel %vm241, %v1481, 0
        %v1516 = vsel %vm241, %v1482, 0
        %v1519 = vsel %vm241, %v1483, 0
        %v1522 = vsel %vm241, %v1484, 0
        %v1525 = vsel %vm241, %v1485, 0
        %v1528 = vsel %vm241, %v1486, 0
        %v1531 = vsel %vm241, %v1487, 0
        %v1534 = vsel %vm241, %v1488, 0
        %v1537 = vsel %vm241, %v1489, 0
        %v1540 = vsel %vm241, %v1490, 0
        %v1543 = vsel %vm241, %v1491, 0
        %v1546 = vsel %vm544, %v1496, 0
        %1548 = vmatpush.bf16.msra.mxu0 0
        %1549 = vmatpush.bf16.msra.mxu0 0
        %1550 = vmatpush.bf16.msra.mxu0 0
        %1551 = vmatpush.bf16.msra.mxu0 0
        %1552 = vmatpush.bf16.msra.mxu0 0
        %1553 = vmatpush.bf16.msra.mxu0 0
        %1554 = vmatpush.bf16.msra.mxu0 0
        %1555 = vmatpush.bf16.msra.mxu0 %v1546
        %1556 = vmatmul.bf16.gmra.mxu0 %v1498
        %v1557 = vpop.f32.mrf.mxu0
        %v1558 = vadd.f32 0.0, %v1557
        %v1559 = vpop.f32.mrf.mxu0
        %v1560 = vadd.f32 0.0, %v1559
        %1561 = vmatmul.bf16.gmra.mxu0 %v1501
        %v1562 = vpop.f32.mrf.mxu0
        %v1563 = vadd.f32 0.0, %v1562
        %v1564 = vpop.f32.mrf.mxu0
        %v1565 = vadd.f32 0.0, %v1564
        %1566 = vmatmul.bf16.gmra.mxu0 %v1504
        %v1567 = vpop.f32.mrf.mxu0
        %v1568 = vadd.f32 0.0, %v1567
        %v1569 = vpop.f32.mrf.mxu0
        %v1570 = vadd.f32 0.0, %v1569
        %1571 = vmatmul.bf16.gmra.mxu0 %v1507
        %v1572 = vpop.f32.mrf.mxu0
        %v1573 = vadd.f32 0.0, %v1572
        %v1574 = vpop.f32.mrf.mxu0
        %v1575 = vadd.f32 0.0, %v1574
        %1576 = vmatmul.bf16.gmra.mxu0 %v1510
        %v1577 = vpop.f32.mrf.mxu0
        %v1578 = vadd.f32 0.0, %v1577
        %v1579 = vpop.f32.mrf.mxu0
        %v1580 = vadd.f32 0.0, %v1579
        %1581 = vmatmul.bf16.gmra.mxu0 %v1513
        %v1582 = vpop.f32.mrf.mxu0
        %v1583 = vadd.f32 0.0, %v1582
        %v1584 = vpop.f32.mrf.mxu0
        %v1585 = vadd.f32 0.0, %v1584
        %1586 = vmatmul.bf16.gmra.mxu0 %v1516
        %v1587 = vpop.f32.mrf.mxu0
        %v1588 = vadd.f32 0.0, %v1587
        %v1589 = vpop.f32.mrf.mxu0
        %v1590 = vadd.f32 0.0, %v1589
        %1591 = vmatmul.bf16.gmra.mxu0 %v1519
        %v1592 = vpop.f32.mrf.mxu0
        %v1593 = vadd.f32 0.0, %v1592
        %v1594 = vpop.f32.mrf.mxu0
        %v1595 = vadd.f32 0.0, %v1594
        %1596 = vmatmul.bf16.gmra.mxu0 %v1522
        %v1597 = vpop.f32.mrf.mxu0
        %v1598 = vadd.f32 0.0, %v1597
        %v1599 = vpop.f32.mrf.mxu0
        %v1600 = vadd.f32 0.0, %v1599
        %1601 = vmatmul.bf16.gmra.mxu0 %v1525
        %v1602 = vpop.f32.mrf.mxu0
        %v1603 = vadd.f32 0.0, %v1602
        %v1604 = vpop.f32.mrf.mxu0
        %v1605 = vadd.f32 0.0, %v1604
        %1606 = vmatmul.bf16.gmra.mxu0 %v1528
        %v1607 = vpop.f32.mrf.mxu0
        %v1608 = vadd.f32 0.0, %v1607
        %v1609 = vpop.f32.mrf.mxu0
        %v1610 = vadd.f32 0.0, %v1609
        %1611 = vmatmul.bf16.gmra.mxu0 %v1531
        %v1612 = vpop.f32.mrf.mxu0
        %v1613 = vadd.f32 0.0, %v1612
        %v1614 = vpop.f32.mrf.mxu0
        %v1615 = vadd.f32 0.0, %v1614
        %1616 = vmatmul.bf16.gmra.mxu0 %v1534
        %v1617 = vpop.f32.mrf.mxu0
        %v1618 = vadd.f32 0.0, %v1617
        %v1619 = vpop.f32.mrf.mxu0
        %v1620 = vadd.f32 0.0, %v1619
        %1621 = vmatmul.bf16.gmra.mxu0 %v1537
        %v1622 = vpop.f32.mrf.mxu0
        %v1623 = vadd.f32 0.0, %v1622
        %v1624 = vpop.f32.mrf.mxu0
        %v1625 = vadd.f32 0.0, %v1624
        %1626 = vmatmul.bf16.gmra.mxu0 %v1540
        %v1627 = vpop.f32.mrf.mxu0
        %v1628 = vadd.f32 0.0, %v1627
        %v1629 = vpop.f32.mrf.mxu0
        %v1630 = vadd.f32 0.0, %v1629
        %1631 = vmatmul.bf16.gmra.mxu0 %v1543
        %v1632 = vpop.f32.mrf.mxu0
        %v1633 = vadd.f32 0.0, %v1632
        %v1634 = vpop.f32.mrf.mxu0
        %v1635 = vadd.f32 0.0, %v1634
        %1636 = vdwg.mxu0
        %v1637 = vadd.f32 %v1412, %v1558
        %v1638 = vadd.f32 %v1413, %v1560
        %v1639 = vadd.f32 %v1414, %v1563
        %v1640 = vadd.f32 %v1415, %v1565
        %v1641 = vadd.f32 %v1416, %v1568
        %v1642 = vadd.f32 %v1417, %v1570
        %v1643 = vadd.f32 %v1418, %v1573
        %v1644 = vadd.f32 %v1419, %v1575
        %v1645 = vadd.f32 %v1420, %v1578
        %v1646 = vadd.f32 %v1421, %v1580
        %v1647 = vadd.f32 %v1422, %v1583
        %v1648 = vadd.f32 %v1423, %v1585
        %v1649 = vadd.f32 %v1424, %v1588
        %v1650 = vadd.f32 %v1425, %v1590
        %v1651 = vadd.f32 %v1426, %v1593
        %v1652 = vadd.f32 %v1427, %v1595
        %v1653 = vadd.f32 %v1428, %v1598
        %v1654 = vadd.f32 %v1429, %v1600
        %v1655 = vadd.f32 %v1430, %v1603
        %v1656 = vadd.f32 %v1431, %v1605
        %v1657 = vadd.f32 %v1432, %v1608
        %v1658 = vadd.f32 %v1433, %v1610
        %v1659 = vadd.f32 %v1434, %v1613
        %v1660 = vadd.f32 %v1435, %v1615
        %v1661 = vadd.f32 %v1436, %v1618
        %v1662 = vadd.f32 %v1437, %v1620
        %v1663 = vadd.f32 %v1438, %v1623
        %v1664 = vadd.f32 %v1439, %v1625
        %v1665 = vadd.f32 %v1440, %v1628
        %v1666 = vadd.f32 %v1441, %v1630
        %v1667 = vadd.f32 %v1442, %v1633
        %v1668 = vadd.f32 %v1443, %v1635
        %s1669 = scalar_lea.vmem [#allocation2], 48
        %v1670 = vld [vmem:[%s1669] sm:$0xff]
        %v1671 = vld [vmem:[%s1669 + $0x8] sm:$0xff]
        %v1672 = vld [vmem:[%s1669 + $0x18] sm:$0xff]
        %v1673 = vld [vmem:[%s1669 + $0x20] sm:$0xff]
        %v1674 = vld [vmem:[%s1669 + $0x30] sm:$0xff]
        %v1675 = vld [vmem:[%s1669 + $0x38] sm:$0xff]
        %v1676 = vld [vmem:[%s1669 + $0x48] sm:$0xff]
        %v1677 = vld [vmem:[%s1669 + $0x50] sm:$0xff]
        %v1678 = vld [vmem:[%s1669 + $0x60] sm:$0xff]
        %v1679 = vld [vmem:[%s1669 + $0x68] sm:$0xff]
        %v1680 = vld [vmem:[%s1669 + $0x78] sm:$0xff]
        %v1681 = vld [vmem:[%s1669 + $0x80] sm:$0xff]
        %v1682 = vld [vmem:[%s1669 + $0x90] sm:$0xff]
        %v1683 = vld [vmem:[%s1669 + $0x98] sm:$0xff]
        %v1684 = vld [vmem:[%s1669 + $0xa8] sm:$0xff]
        %v1685 = vld [vmem:[%s1669 + $0xb0] sm:$0xff]
        %v1686 = vld [vmem:[%s1669 + $0xc0] sm:$0xff]
        %v1687 = vld [vmem:[%s1669 + $0xc8] sm:$0xff]
        %v1688 = vld [vmem:[%s1669 + $0xd8] sm:$0xff]
        %v1689 = vld [vmem:[%s1669 + $0xe0] sm:$0xff]
        %v1690 = vld [vmem:[%s1669 + $0xf0] sm:$0xff]
        %v1691 = vld [vmem:[%s1669 + $0xf8] sm:$0xff]
        %v1692 = vld [vmem:[%s1669 + $0x108] sm:$0xff]
        %v1693 = vld [vmem:[%s1669 + $0x110] sm:$0xff]
        %v1694 = vld [vmem:[%s1669 + $0x120] sm:$0xff]
        %v1695 = vld [vmem:[%s1669 + $0x128] sm:$0xff]
        %v1696 = vld [vmem:[%s1669 + $0x138] sm:$0xff]
        %v1697 = vld [vmem:[%s1669 + $0x140] sm:$0xff]
        %v1698 = vld [vmem:[%s1669 + $0x150] sm:$0xff]
        %v1699 = vld [vmem:[%s1669 + $0x158] sm:$0xff]
        %v1700 = vld [vmem:[%s1669 + $0x168] sm:$0xff]
        %v1701 = vld [vmem:[%s1669 + $0x170] sm:$0xff]
        %v1702 = vpack.c.bf16 %v1671, %v1670
        %v1703 = vpack.c.bf16 %v1673, %v1672
        %v1704 = vpack.c.bf16 %v1675, %v1674
        %v1705 = vpack.c.bf16 %v1677, %v1676
        %v1706 = vpack.c.bf16 %v1679, %v1678
        %v1707 = vpack.c.bf16 %v1681, %v1680
        %v1708 = vpack.c.bf16 %v1683, %v1682
        %v1709 = vpack.c.bf16 %v1685, %v1684
        %v1710 = vpack.c.bf16 %v1687, %v1686
        %v1711 = vpack.c.bf16 %v1689, %v1688
        %v1712 = vpack.c.bf16 %v1691, %v1690
        %v1713 = vpack.c.bf16 %v1693, %v1692
        %v1714 = vpack.c.bf16 %v1695, %v1694
        %v1715 = vpack.c.bf16 %v1697, %v1696
        %v1716 = vpack.c.bf16 %v1699, %v1698
        %v1717 = vpack.c.bf16 %v1701, %v1700
        %v1718 = vld [vmem:[%s1 + $0xc] sm:$0x3]
        %v1720 = vsel %vm241, %v1702, 0
        %v1723 = vsel %vm241, %v1703, 0
        %v1726 = vsel %vm241, %v1704, 0
        %v1729 = vsel %vm241, %v1705, 0
        %v1732 = vsel %vm241, %v1706, 0
        %v1735 = vsel %vm241, %v1707, 0
        %v1738 = vsel %vm241, %v1708, 0
        %v1741 = vsel %vm241, %v1709, 0
        %v1744 = vsel %vm241, %v1710, 0
        %v1747 = vsel %vm241, %v1711, 0
        %v1750 = vsel %vm241, %v1712, 0
        %v1753 = vsel %vm241, %v1713, 0
        %v1756 = vsel %vm241, %v1714, 0
        %v1759 = vsel %vm241, %v1715, 0
        %v1762 = vsel %vm241, %v1716, 0
        %v1765 = vsel %vm241, %v1717, 0
        %v1768 = vsel %vm544, %v1718, 0
        %1770 = vmatpush.bf16.msra.mxu0 0
        %1771 = vmatpush.bf16.msra.mxu0 0
        %1772 = vmatpush.bf16.msra.mxu0 0
        %1773 = vmatpush.bf16.msra.mxu0 0
        %1774 = vmatpush.bf16.msra.mxu0 0
        %1775 = vmatpush.bf16.msra.mxu0 0
        %1776 = vmatpush.bf16.msra.mxu0 0
        %1777 = vmatpush.bf16.msra.mxu0 %v1768
        %1778 = vmatmul.bf16.gmra.mxu0 %v1720
        %v1779 = vpop.f32.mrf.mxu0
        %v1780 = vadd.f32 0.0, %v1779
        %v1781 = vpop.f32.mrf.mxu0
        %v1782 = vadd.f32 0.0, %v1781
        %1783 = vmatmul.bf16.gmra.mxu0 %v1723
        %v1784 = vpop.f32.mrf.mxu0
        %v1785 = vadd.f32 0.0, %v1784
        %v1786 = vpop.f32.mrf.mxu0
        %v1787 = vadd.f32 0.0, %v1786
        %1788 = vmatmul.bf16.gmra.mxu0 %v1726
        %v1789 = vpop.f32.mrf.mxu0
        %v1790 = vadd.f32 0.0, %v1789
        %v1791 = vpop.f32.mrf.mxu0
        %v1792 = vadd.f32 0.0, %v1791
        %1793 = vmatmul.bf16.gmra.mxu0 %v1729
        %v1794 = vpop.f32.mrf.mxu0
        %v1795 = vadd.f32 0.0, %v1794
        %v1796 = vpop.f32.mrf.mxu0
        %v1797 = vadd.f32 0.0, %v1796
        %1798 = vmatmul.bf16.gmra.mxu0 %v1732
        %v1799 = vpop.f32.mrf.mxu0
        %v1800 = vadd.f32 0.0, %v1799
        %v1801 = vpop.f32.mrf.mxu0
        %v1802 = vadd.f32 0.0, %v1801
        %1803 = vmatmul.bf16.gmra.mxu0 %v1735
        %v1804 = vpop.f32.mrf.mxu0
        %v1805 = vadd.f32 0.0, %v1804
        %v1806 = vpop.f32.mrf.mxu0
        %v1807 = vadd.f32 0.0, %v1806
        %1808 = vmatmul.bf16.gmra.mxu0 %v1738
        %v1809 = vpop.f32.mrf.mxu0
        %v1810 = vadd.f32 0.0, %v1809
        %v1811 = vpop.f32.mrf.mxu0
        %v1812 = vadd.f32 0.0, %v1811
        %1813 = vmatmul.bf16.gmra.mxu0 %v1741
        %v1814 = vpop.f32.mrf.mxu0
        %v1815 = vadd.f32 0.0, %v1814
        %v1816 = vpop.f32.mrf.mxu0
        %v1817 = vadd.f32 0.0, %v1816
        %1818 = vmatmul.bf16.gmra.mxu0 %v1744
        %v1819 = vpop.f32.mrf.mxu0
        %v1820 = vadd.f32 0.0, %v1819
        %v1821 = vpop.f32.mrf.mxu0
        %v1822 = vadd.f32 0.0, %v1821
        %1823 = vmatmul.bf16.gmra.mxu0 %v1747
        %v1824 = vpop.f32.mrf.mxu0
        %v1825 = vadd.f32 0.0, %v1824
        %v1826 = vpop.f32.mrf.mxu0
        %v1827 = vadd.f32 0.0, %v1826
        %1828 = vmatmul.bf16.gmra.mxu0 %v1750
        %v1829 = vpop.f32.mrf.mxu0
        %v1830 = vadd.f32 0.0, %v1829
        %v1831 = vpop.f32.mrf.mxu0
        %v1832 = vadd.f32 0.0, %v1831
        %1833 = vmatmul.bf16.gmra.mxu0 %v1753
        %v1834 = vpop.f32.mrf.mxu0
        %v1835 = vadd.f32 0.0, %v1834
        %v1836 = vpop.f32.mrf.mxu0
        %v1837 = vadd.f32 0.0, %v1836
        %1838 = vmatmul.bf16.gmra.mxu0 %v1756
        %v1839 = vpop.f32.mrf.mxu0
        %v1840 = vadd.f32 0.0, %v1839
        %v1841 = vpop.f32.mrf.mxu0
        %v1842 = vadd.f32 0.0, %v1841
        %1843 = vmatmul.bf16.gmra.mxu0 %v1759
        %v1844 = vpop.f32.mrf.mxu0
        %v1845 = vadd.f32 0.0, %v1844
        %v1846 = vpop.f32.mrf.mxu0
        %v1847 = vadd.f32 0.0, %v1846
        %1848 = vmatmul.bf16.gmra.mxu0 %v1762
        %v1849 = vpop.f32.mrf.mxu0
        %v1850 = vadd.f32 0.0, %v1849
        %v1851 = vpop.f32.mrf.mxu0
        %v1852 = vadd.f32 0.0, %v1851
        %1853 = vmatmul.bf16.gmra.mxu0 %v1765
        %v1854 = vpop.f32.mrf.mxu0
        %v1855 = vadd.f32 0.0, %v1854
        %v1856 = vpop.f32.mrf.mxu0
        %v1857 = vadd.f32 0.0, %v1856
        %1858 = vdwg.mxu0
        %v1859 = vadd.f32 %v1637, %v1780
        %v1860 = vadd.f32 %v1638, %v1782
        %v1861 = vadd.f32 %v1639, %v1785
        %v1862 = vadd.f32 %v1640, %v1787
        %v1863 = vadd.f32 %v1641, %v1790
        %v1864 = vadd.f32 %v1642, %v1792
        %v1865 = vadd.f32 %v1643, %v1795
        %v1866 = vadd.f32 %v1644, %v1797
        %v1867 = vadd.f32 %v1645, %v1800
        %v1868 = vadd.f32 %v1646, %v1802
        %v1869 = vadd.f32 %v1647, %v1805
        %v1870 = vadd.f32 %v1648, %v1807
        %v1871 = vadd.f32 %v1649, %v1810
        %v1872 = vadd.f32 %v1650, %v1812
        %v1873 = vadd.f32 %v1651, %v1815
        %v1874 = vadd.f32 %v1652, %v1817
        %v1875 = vadd.f32 %v1653, %v1820
        %v1876 = vadd.f32 %v1654, %v1822
        %v1877 = vadd.f32 %v1655, %v1825
        %v1878 = vadd.f32 %v1656, %v1827
        %v1879 = vadd.f32 %v1657, %v1830
        %v1880 = vadd.f32 %v1658, %v1832
        %v1881 = vadd.f32 %v1659, %v1835
        %v1882 = vadd.f32 %v1660, %v1837
        %v1883 = vadd.f32 %v1661, %v1840
        %v1884 = vadd.f32 %v1662, %v1842
        %v1885 = vadd.f32 %v1663, %v1845
        %v1886 = vadd.f32 %v1664, %v1847
        %v1887 = vadd.f32 %v1665, %v1850
        %v1888 = vadd.f32 %v1666, %v1852
        %v1889 = vadd.f32 %v1667, %v1855
        %v1890 = vadd.f32 %v1668, %v1857
        %v1891 = vld [vmem:[%s1669 + $0x1] sm:$0xff]
        %v1892 = vld [vmem:[%s1669 + $0x9] sm:$0xff]
        %v1893 = vld [vmem:[%s1669 + $0x19] sm:$0xff]
        %v1894 = vld [vmem:[%s1669 + $0x21] sm:$0xff]
        %v1895 = vld [vmem:[%s1669 + $0x31] sm:$0xff]
        %v1896 = vld [vmem:[%s1669 + $0x39] sm:$0xff]
        %v1897 = vld [vmem:[%s1669 + $0x49] sm:$0xff]
        %v1898 = vld [vmem:[%s1669 + $0x51] sm:$0xff]
        %v1899 = vld [vmem:[%s1669 + $0x61] sm:$0xff]
        %v1900 = vld [vmem:[%s1669 + $0x69] sm:$0xff]
        %v1901 = vld [vmem:[%s1669 + $0x79] sm:$0xff]
        %v1902 = vld [vmem:[%s1669 + $0x81] sm:$0xff]
        %v1903 = vld [vmem:[%s1669 + $0x91] sm:$0xff]
        %v1904 = vld [vmem:[%s1669 + $0x99] sm:$0xff]
        %v1905 = vld [vmem:[%s1669 + $0xa9] sm:$0xff]
        %v1906 = vld [vmem:[%s1669 + $0xb1] sm:$0xff]
        %v1907 = vld [vmem:[%s1669 + $0xc1] sm:$0xff]
        %v1908 = vld [vmem:[%s1669 + $0xc9] sm:$0xff]
        %v1909 = vld [vmem:[%s1669 + $0xd9] sm:$0xff]
        %v1910 = vld [vmem:[%s1669 + $0xe1] sm:$0xff]
        %v1911 = vld [vmem:[%s1669 + $0xf1] sm:$0xff]
        %v1912 = vld [vmem:[%s1669 + $0xf9] sm:$0xff]
        %v1913 = vld [vmem:[%s1669 + $0x109] sm:$0xff]
        %v1914 = vld [vmem:[%s1669 + $0x111] sm:$0xff]
        %v1915 = vld [vmem:[%s1669 + $0x121] sm:$0xff]
        %v1916 = vld [vmem:[%s1669 + $0x129] sm:$0xff]
        %v1917 = vld [vmem:[%s1669 + $0x139] sm:$0xff]
        %v1918 = vld [vmem:[%s1669 + $0x141] sm:$0xff]
        %v1919 = vld [vmem:[%s1669 + $0x151] sm:$0xff]
        %v1920 = vld [vmem:[%s1669 + $0x159] sm:$0xff]
        %v1921 = vld [vmem:[%s1669 + $0x169] sm:$0xff]
        %v1922 = vld [vmem:[%s1669 + $0x171] sm:$0xff]
        %v1923 = vpack.c.bf16 %v1892, %v1891
        %v1924 = vpack.c.bf16 %v1894, %v1893
        %v1925 = vpack.c.bf16 %v1896, %v1895
        %v1926 = vpack.c.bf16 %v1898, %v1897
        %v1927 = vpack.c.bf16 %v1900, %v1899
        %v1928 = vpack.c.bf16 %v1902, %v1901
        %v1929 = vpack.c.bf16 %v1904, %v1903
        %v1930 = vpack.c.bf16 %v1906, %v1905
        %v1931 = vpack.c.bf16 %v1908, %v1907
        %v1932 = vpack.c.bf16 %v1910, %v1909
        %v1933 = vpack.c.bf16 %v1912, %v1911
        %v1934 = vpack.c.bf16 %v1914, %v1913
        %v1935 = vpack.c.bf16 %v1916, %v1915
        %v1936 = vpack.c.bf16 %v1918, %v1917
        %v1937 = vpack.c.bf16 %v1920, %v1919
        %v1938 = vpack.c.bf16 %v1922, %v1921
        %v1939 = vld [vmem:[%s1 + $0xc] sm:$0xc]
        %v1941 = vunpack.c.l.b16 %v1939
        %v1942 = vpack.c.b16 %v1941, %v1941
        %v1943 = vrot.slane %v1942, 2
        %v1945 = vsel %vm241, %v1923, 0
        %v1948 = vsel %vm241, %v1924, 0
        %v1951 = vsel %vm241, %v1925, 0
        %v1954 = vsel %vm241, %v1926, 0
        %v1957 = vsel %vm241, %v1927, 0
        %v1960 = vsel %vm241, %v1928, 0
        %v1963 = vsel %vm241, %v1929, 0
        %v1966 = vsel %vm241, %v1930, 0
        %v1969 = vsel %vm241, %v1931, 0
        %v1972 = vsel %vm241, %v1932, 0
        %v1975 = vsel %vm241, %v1933, 0
        %v1978 = vsel %vm241, %v1934, 0
        %v1981 = vsel %vm241, %v1935, 0
        %v1984 = vsel %vm241, %v1936, 0
        %v1987 = vsel %vm241, %v1937, 0
        %v1990 = vsel %vm241, %v1938, 0
        %v1993 = vsel %vm544, %v1943, 0
        %1995 = vmatpush.bf16.msra.mxu0 0
        %1996 = vmatpush.bf16.msra.mxu0 0
        %1997 = vmatpush.bf16.msra.mxu0 0
        %1998 = vmatpush.bf16.msra.mxu0 0
        %1999 = vmatpush.bf16.msra.mxu0 0
        %2000 = vmatpush.bf16.msra.mxu0 0
        %2001 = vmatpush.bf16.msra.mxu0 0
        %2002 = vmatpush.bf16.msra.mxu0 %v1993
        %2003 = vmatmul.bf16.gmra.mxu0 %v1945
        %v2004 = vpop.f32.mrf.mxu0
        %v2005 = vadd.f32 0.0, %v2004
        %v2006 = vpop.f32.mrf.mxu0
        %v2007 = vadd.f32 0.0, %v2006
        %2008 = vmatmul.bf16.gmra.mxu0 %v1948
        %v2009 = vpop.f32.mrf.mxu0
        %v2010 = vadd.f32 0.0, %v2009
        %v2011 = vpop.f32.mrf.mxu0
        %v2012 = vadd.f32 0.0, %v2011
        %2013 = vmatmul.bf16.gmra.mxu0 %v1951
        %v2014 = vpop.f32.mrf.mxu0
        %v2015 = vadd.f32 0.0, %v2014
        %v2016 = vpop.f32.mrf.mxu0
        %v2017 = vadd.f32 0.0, %v2016
        %2018 = vmatmul.bf16.gmra.mxu0 %v1954
        %v2019 = vpop.f32.mrf.mxu0
        %v2020 = vadd.f32 0.0, %v2019
        %v2021 = vpop.f32.mrf.mxu0
        %v2022 = vadd.f32 0.0, %v2021
        %2023 = vmatmul.bf16.gmra.mxu0 %v1957
        %v2024 = vpop.f32.mrf.mxu0
        %v2025 = vadd.f32 0.0, %v2024
        %v2026 = vpop.f32.mrf.mxu0
        %v2027 = vadd.f32 0.0, %v2026
        %2028 = vmatmul.bf16.gmra.mxu0 %v1960
        %v2029 = vpop.f32.mrf.mxu0
        %v2030 = vadd.f32 0.0, %v2029
        %v2031 = vpop.f32.mrf.mxu0
        %v2032 = vadd.f32 0.0, %v2031
        %2033 = vmatmul.bf16.gmra.mxu0 %v1963
        %v2034 = vpop.f32.mrf.mxu0
        %v2035 = vadd.f32 0.0, %v2034
        %v2036 = vpop.f32.mrf.mxu0
        %v2037 = vadd.f32 0.0, %v2036
        %2038 = vmatmul.bf16.gmra.mxu0 %v1966
        %v2039 = vpop.f32.mrf.mxu0
        %v2040 = vadd.f32 0.0, %v2039
        %v2041 = vpop.f32.mrf.mxu0
        %v2042 = vadd.f32 0.0, %v2041
        %2043 = vmatmul.bf16.gmra.mxu0 %v1969
        %v2044 = vpop.f32.mrf.mxu0
        %v2045 = vadd.f32 0.0, %v2044
        %v2046 = vpop.f32.mrf.mxu0
        %v2047 = vadd.f32 0.0, %v2046
        %2048 = vmatmul.bf16.gmra.mxu0 %v1972
        %v2049 = vpop.f32.mrf.mxu0
        %v2050 = vadd.f32 0.0, %v2049
        %v2051 = vpop.f32.mrf.mxu0
        %v2052 = vadd.f32 0.0, %v2051
        %2053 = vmatmul.bf16.gmra.mxu0 %v1975
        %v2054 = vpop.f32.mrf.mxu0
        %v2055 = vadd.f32 0.0, %v2054
        %v2056 = vpop.f32.mrf.mxu0
        %v2057 = vadd.f32 0.0, %v2056
        %2058 = vmatmul.bf16.gmra.mxu0 %v1978
        %v2059 = vpop.f32.mrf.mxu0
        %v2060 = vadd.f32 0.0, %v2059
        %v2061 = vpop.f32.mrf.mxu0
        %v2062 = vadd.f32 0.0, %v2061
        %2063 = vmatmul.bf16.gmra.mxu0 %v1981
        %v2064 = vpop.f32.mrf.mxu0
        %v2065 = vadd.f32 0.0, %v2064
        %v2066 = vpop.f32.mrf.mxu0
        %v2067 = vadd.f32 0.0, %v2066
        %2068 = vmatmul.bf16.gmra.mxu0 %v1984
        %v2069 = vpop.f32.mrf.mxu0
        %v2070 = vadd.f32 0.0, %v2069
        %v2071 = vpop.f32.mrf.mxu0
        %v2072 = vadd.f32 0.0, %v2071
        %2073 = vmatmul.bf16.gmra.mxu0 %v1987
        %v2074 = vpop.f32.mrf.mxu0
        %v2075 = vadd.f32 0.0, %v2074
        %v2076 = vpop.f32.mrf.mxu0
        %v2077 = vadd.f32 0.0, %v2076
        %2078 = vmatmul.bf16.gmra.mxu0 %v1990
        %v2079 = vpop.f32.mrf.mxu0
        %v2080 = vadd.f32 0.0, %v2079
        %v2081 = vpop.f32.mrf.mxu0
        %v2082 = vadd.f32 0.0, %v2081
        %2083 = vdwg.mxu0
        %v2084 = vadd.f32 %v1859, %v2005
        %v2085 = vadd.f32 %v1860, %v2007
        %v2086 = vadd.f32 %v1861, %v2010
        %v2087 = vadd.f32 %v1862, %v2012
        %v2088 = vadd.f32 %v1863, %v2015
        %v2089 = vadd.f32 %v1864, %v2017
        %v2090 = vadd.f32 %v1865, %v2020
        %v2091 = vadd.f32 %v1866, %v2022
        %v2092 = vadd.f32 %v1867, %v2025
        %v2093 = vadd.f32 %v1868, %v2027
        %v2094 = vadd.f32 %v1869, %v2030
        %v2095 = vadd.f32 %v1870, %v2032
        %v2096 = vadd.f32 %v1871, %v2035
        %v2097 = vadd.f32 %v1872, %v2037
        %v2098 = vadd.f32 %v1873, %v2040
        %v2099 = vadd.f32 %v1874, %v2042
        %v2100 = vadd.f32 %v1875, %v2045
        %v2101 = vadd.f32 %v1876, %v2047
        %v2102 = vadd.f32 %v1877, %v2050
        %v2103 = vadd.f32 %v1878, %v2052
        %v2104 = vadd.f32 %v1879, %v2055
        %v2105 = vadd.f32 %v1880, %v2057
        %v2106 = vadd.f32 %v1881, %v2060
        %v2107 = vadd.f32 %v1882, %v2062
        %v2108 = vadd.f32 %v1883, %v2065
        %v2109 = vadd.f32 %v1884, %v2067
        %v2110 = vadd.f32 %v1885, %v2070
        %v2111 = vadd.f32 %v1886, %v2072
        %v2112 = vadd.f32 %v1887, %v2075
        %v2113 = vadd.f32 %v1888, %v2077
        %v2114 = vadd.f32 %v1889, %v2080
        %v2115 = vadd.f32 %v1890, %v2082
        %v2116 = vld [vmem:[%s1669 + $0x2] sm:$0xff]
        %v2117 = vld [vmem:[%s1669 + $0xa] sm:$0xff]
        %v2118 = vld [vmem:[%s1669 + $0x1a] sm:$0xff]
        %v2119 = vld [vmem:[%s1669 + $0x22] sm:$0xff]
        %v2120 = vld [vmem:[%s1669 + $0x32] sm:$0xff]
        %v2121 = vld [vmem:[%s1669 + $0x3a] sm:$0xff]
        %v2122 = vld [vmem:[%s1669 + $0x4a] sm:$0xff]
        %v2123 = vld [vmem:[%s1669 + $0x52] sm:$0xff]
        %v2124 = vld [vmem:[%s1669 + $0x62] sm:$0xff]
        %v2125 = vld [vmem:[%s1669 + $0x6a] sm:$0xff]
        %v2126 = vld [vmem:[%s1669 + $0x7a] sm:$0xff]
        %v2127 = vld [vmem:[%s1669 + $0x82] sm:$0xff]
        %v2128 = vld [vmem:[%s1669 + $0x92] sm:$0xff]
        %v2129 = vld [vmem:[%s1669 + $0x9a] sm:$0xff]
        %v2130 = vld [vmem:[%s1669 + $0xaa] sm:$0xff]
        %v2131 = vld [vmem:[%s1669 + $0xb2] sm:$0xff]
        %v2132 = vld [vmem:[%s1669 + $0xc2] sm:$0xff]
        %v2133 = vld [vmem:[%s1669 + $0xca] sm:$0xff]
        %v2134 = vld [vmem:[%s1669 + $0xda] sm:$0xff]
        %v2135 = vld [vmem:[%s1669 + $0xe2] sm:$0xff]
        %v2136 = vld [vmem:[%s1669 + $0xf2] sm:$0xff]
        %v2137 = vld [vmem:[%s1669 + $0xfa] sm:$0xff]
        %v2138 = vld [vmem:[%s1669 + $0x10a] sm:$0xff]
        %v2139 = vld [vmem:[%s1669 + $0x112] sm:$0xff]
        %v2140 = vld [vmem:[%s1669 + $0x122] sm:$0xff]
        %v2141 = vld [vmem:[%s1669 + $0x12a] sm:$0xff]
        %v2142 = vld [vmem:[%s1669 + $0x13a] sm:$0xff]
        %v2143 = vld [vmem:[%s1669 + $0x142] sm:$0xff]
        %v2144 = vld [vmem:[%s1669 + $0x152] sm:$0xff]
        %v2145 = vld [vmem:[%s1669 + $0x15a] sm:$0xff]
        %v2146 = vld [vmem:[%s1669 + $0x16a] sm:$0xff]
        %v2147 = vld [vmem:[%s1669 + $0x172] sm:$0xff]
        %v2148 = vpack.c.bf16 %v2117, %v2116
        %v2149 = vpack.c.bf16 %v2119, %v2118
        %v2150 = vpack.c.bf16 %v2121, %v2120
        %v2151 = vpack.c.bf16 %v2123, %v2122
        %v2152 = vpack.c.bf16 %v2125, %v2124
        %v2153 = vpack.c.bf16 %v2127, %v2126
        %v2154 = vpack.c.bf16 %v2129, %v2128
        %v2155 = vpack.c.bf16 %v2131, %v2130
        %v2156 = vpack.c.bf16 %v2133, %v2132
        %v2157 = vpack.c.bf16 %v2135, %v2134
        %v2158 = vpack.c.bf16 %v2137, %v2136
        %v2159 = vpack.c.bf16 %v2139, %v2138
        %v2160 = vpack.c.bf16 %v2141, %v2140
        %v2161 = vpack.c.bf16 %v2143, %v2142
        %v2162 = vpack.c.bf16 %v2145, %v2144
        %v2163 = vpack.c.bf16 %v2147, %v2146
        %v2164 = vld [vmem:[%s1 + $0x10] sm:$0x3]
        %v2166 = vsel %vm241, %v2148, 0
        %v2169 = vsel %vm241, %v2149, 0
        %v2172 = vsel %vm241, %v2150, 0
        %v2175 = vsel %vm241, %v2151, 0
        %v2178 = vsel %vm241, %v2152, 0
        %v2181 = vsel %vm241, %v2153, 0
        %v2184 = vsel %vm241, %v2154, 0
        %v2187 = vsel %vm241, %v2155, 0
        %v2190 = vsel %vm241, %v2156, 0
        %v2193 = vsel %vm241, %v2157, 0
        %v2196 = vsel %vm241, %v2158, 0
        %v2199 = vsel %vm241, %v2159, 0
        %v2202 = vsel %vm241, %v2160, 0
        %v2205 = vsel %vm241, %v2161, 0
        %v2208 = vsel %vm241, %v2162, 0
        %v2211 = vsel %vm241, %v2163, 0
        %v2214 = vsel %vm544, %v2164, 0
        %2216 = vmatpush.bf16.msra.mxu0 0
        %2217 = vmatpush.bf16.msra.mxu0 0
        %2218 = vmatpush.bf16.msra.mxu0 0
        %2219 = vmatpush.bf16.msra.mxu0 0
        %2220 = vmatpush.bf16.msra.mxu0 0
        %2221 = vmatpush.bf16.msra.mxu0 0
        %2222 = vmatpush.bf16.msra.mxu0 0
        %2223 = vmatpush.bf16.msra.mxu0 %v2214
        %2224 = vmatmul.bf16.gmra.mxu0 %v2166
        %v2225 = vpop.f32.mrf.mxu0
        %v2226 = vadd.f32 0.0, %v2225
        %v2227 = vpop.f32.mrf.mxu0
        %v2228 = vadd.f32 0.0, %v2227
        %2229 = vmatmul.bf16.gmra.mxu0 %v2169
        %v2230 = vpop.f32.mrf.mxu0
        %v2231 = vadd.f32 0.0, %v2230
        %v2232 = vpop.f32.mrf.mxu0
        %v2233 = vadd.f32 0.0, %v2232
        %2234 = vmatmul.bf16.gmra.mxu0 %v2172
        %v2235 = vpop.f32.mrf.mxu0
        %v2236 = vadd.f32 0.0, %v2235
        %v2237 = vpop.f32.mrf.mxu0
        %v2238 = vadd.f32 0.0, %v2237
        %2239 = vmatmul.bf16.gmra.mxu0 %v2175
        %v2240 = vpop.f32.mrf.mxu0
        %v2241 = vadd.f32 0.0, %v2240
        %v2242 = vpop.f32.mrf.mxu0
        %v2243 = vadd.f32 0.0, %v2242
        %2244 = vmatmul.bf16.gmra.mxu0 %v2178
        %v2245 = vpop.f32.mrf.mxu0
        %v2246 = vadd.f32 0.0, %v2245
        %v2247 = vpop.f32.mrf.mxu0
        %v2248 = vadd.f32 0.0, %v2247
        %2249 = vmatmul.bf16.gmra.mxu0 %v2181
        %v2250 = vpop.f32.mrf.mxu0
        %v2251 = vadd.f32 0.0, %v2250
        %v2252 = vpop.f32.mrf.mxu0
        %v2253 = vadd.f32 0.0, %v2252
        %2254 = vmatmul.bf16.gmra.mxu0 %v2184
        %v2255 = vpop.f32.mrf.mxu0
        %v2256 = vadd.f32 0.0, %v2255
        %v2257 = vpop.f32.mrf.mxu0
        %v2258 = vadd.f32 0.0, %v2257
        %2259 = vmatmul.bf16.gmra.mxu0 %v2187
        %v2260 = vpop.f32.mrf.mxu0
        %v2261 = vadd.f32 0.0, %v2260
        %v2262 = vpop.f32.mrf.mxu0
        %v2263 = vadd.f32 0.0, %v2262
        %2264 = vmatmul.bf16.gmra.mxu0 %v2190
        %v2265 = vpop.f32.mrf.mxu0
        %v2266 = vadd.f32 0.0, %v2265
        %v2267 = vpop.f32.mrf.mxu0
        %v2268 = vadd.f32 0.0, %v2267
        %2269 = vmatmul.bf16.gmra.mxu0 %v2193
        %v2270 = vpop.f32.mrf.mxu0
        %v2271 = vadd.f32 0.0, %v2270
        %v2272 = vpop.f32.mrf.mxu0
        %v2273 = vadd.f32 0.0, %v2272
        %2274 = vmatmul.bf16.gmra.mxu0 %v2196
        %v2275 = vpop.f32.mrf.mxu0
        %v2276 = vadd.f32 0.0, %v2275
        %v2277 = vpop.f32.mrf.mxu0
        %v2278 = vadd.f32 0.0, %v2277
        %2279 = vmatmul.bf16.gmra.mxu0 %v2199
        %v2280 = vpop.f32.mrf.mxu0
        %v2281 = vadd.f32 0.0, %v2280
        %v2282 = vpop.f32.mrf.mxu0
        %v2283 = vadd.f32 0.0, %v2282
        %2284 = vmatmul.bf16.gmra.mxu0 %v2202
        %v2285 = vpop.f32.mrf.mxu0
        %v2286 = vadd.f32 0.0, %v2285
        %v2287 = vpop.f32.mrf.mxu0
        %v2288 = vadd.f32 0.0, %v2287
        %2289 = vmatmul.bf16.gmra.mxu0 %v2205
        %v2290 = vpop.f32.mrf.mxu0
        %v2291 = vadd.f32 0.0, %v2290
        %v2292 = vpop.f32.mrf.mxu0
        %v2293 = vadd.f32 0.0, %v2292
        %2294 = vmatmul.bf16.gmra.mxu0 %v2208
        %v2295 = vpop.f32.mrf.mxu0
        %v2296 = vadd.f32 0.0, %v2295
        %v2297 = vpop.f32.mrf.mxu0
        %v2298 = vadd.f32 0.0, %v2297
        %2299 = vmatmul.bf16.gmra.mxu0 %v2211
        %v2300 = vpop.f32.mrf.mxu0
        %v2301 = vadd.f32 0.0, %v2300
        %v2302 = vpop.f32.mrf.mxu0
        %v2303 = vadd.f32 0.0, %v2302
        %2304 = vdwg.mxu0
        %v2305 = vadd.f32 %v2084, %v2226
        %v2306 = vadd.f32 %v2085, %v2228
        %v2307 = vadd.f32 %v2086, %v2231
        %v2308 = vadd.f32 %v2087, %v2233
        %v2309 = vadd.f32 %v2088, %v2236
        %v2310 = vadd.f32 %v2089, %v2238
        %v2311 = vadd.f32 %v2090, %v2241
        %v2312 = vadd.f32 %v2091, %v2243
        %v2313 = vadd.f32 %v2092, %v2246
        %v2314 = vadd.f32 %v2093, %v2248
        %v2315 = vadd.f32 %v2094, %v2251
        %v2316 = vadd.f32 %v2095, %v2253
        %v2317 = vadd.f32 %v2096, %v2256
        %v2318 = vadd.f32 %v2097, %v2258
        %v2319 = vadd.f32 %v2098, %v2261
        %v2320 = vadd.f32 %v2099, %v2263
        %v2321 = vadd.f32 %v2100, %v2266
        %v2322 = vadd.f32 %v2101, %v2268
        %v2323 = vadd.f32 %v2102, %v2271
        %v2324 = vadd.f32 %v2103, %v2273
        %v2325 = vadd.f32 %v2104, %v2276
        %v2326 = vadd.f32 %v2105, %v2278
        %v2327 = vadd.f32 %v2106, %v2281
        %v2328 = vadd.f32 %v2107, %v2283
        %v2329 = vadd.f32 %v2108, %v2286
        %v2330 = vadd.f32 %v2109, %v2288
        %v2331 = vadd.f32 %v2110, %v2291
        %v2332 = vadd.f32 %v2111, %v2293
        %v2333 = vadd.f32 %v2112, %v2296
        %v2334 = vadd.f32 %v2113, %v2298
        %v2335 = vadd.f32 %v2114, %v2301
        %v2336 = vadd.f32 %v2115, %v2303
        %v2337 = vld [vmem:[%s2] sm:$0x1]
        %v2339 = vperm.slane %v2337, 0
        %v2341 = vadd.f32 %v2305, %v2339
        %v2342 = vadd.f32 %v2306, %v2339
        %v2343 = vadd.f32 %v2307, %v2339
        %v2344 = vadd.f32 %v2308, %v2339
        %v2345 = vadd.f32 %v2309, %v2339
        %v2346 = vadd.f32 %v2310, %v2339
        %v2347 = vadd.f32 %v2311, %v2339
        %v2348 = vadd.f32 %v2312, %v2339
        %v2349 = vadd.f32 %v2313, %v2339
        %v2350 = vadd.f32 %v2314, %v2339
        %v2351 = vadd.f32 %v2315, %v2339
        %v2352 = vadd.f32 %v2316, %v2339
        %v2353 = vadd.f32 %v2317, %v2339
        %v2354 = vadd.f32 %v2318, %v2339
        %v2355 = vadd.f32 %v2319, %v2339
        %v2356 = vadd.f32 %v2320, %v2339
        %v2357 = vadd.f32 %v2321, %v2339
        %v2358 = vadd.f32 %v2322, %v2339
        %v2359 = vadd.f32 %v2323, %v2339
        %v2360 = vadd.f32 %v2324, %v2339
        %v2361 = vadd.f32 %v2325, %v2339
        %v2362 = vadd.f32 %v2326, %v2339
        %v2363 = vadd.f32 %v2327, %v2339
        %v2364 = vadd.f32 %v2328, %v2339
        %v2365 = vadd.f32 %v2329, %v2339
        %v2366 = vadd.f32 %v2330, %v2339
        %v2367 = vadd.f32 %v2331, %v2339
        %v2368 = vadd.f32 %v2332, %v2339
        %v2369 = vadd.f32 %v2333, %v2339
        %v2370 = vadd.f32 %v2334, %v2339
        %v2371 = vadd.f32 %v2335, %v2339
        %v2372 = vadd.f32 %v2336, %v2339
        %v2373 = vmax.f32 %v2341, 0.0
        %v2374 = vmax.f32 %v2342, 0.0
        %v2375 = vmax.f32 %v2343, 0.0
        %v2376 = vmax.f32 %v2344, 0.0
        %v2377 = vmax.f32 %v2345, 0.0
        %v2378 = vmax.f32 %v2346, 0.0
        %v2379 = vmax.f32 %v2347, 0.0
        %v2380 = vmax.f32 %v2348, 0.0
        %v2381 = vmax.f32 %v2349, 0.0
        %v2382 = vmax.f32 %v2350, 0.0
        %v2383 = vmax.f32 %v2351, 0.0
        %v2384 = vmax.f32 %v2352, 0.0
        %v2385 = vmax.f32 %v2353, 0.0
        %v2386 = vmax.f32 %v2354, 0.0
        %v2387 = vmax.f32 %v2355, 0.0
        %v2388 = vmax.f32 %v2356, 0.0
        %v2389 = vmax.f32 %v2357, 0.0
        %v2390 = vmax.f32 %v2358, 0.0
        %v2391 = vmax.f32 %v2359, 0.0
        %v2392 = vmax.f32 %v2360, 0.0
        %v2393 = vmax.f32 %v2361, 0.0
        %v2394 = vmax.f32 %v2362, 0.0
        %v2395 = vmax.f32 %v2363, 0.0
        %v2396 = vmax.f32 %v2364, 0.0
        %v2397 = vmax.f32 %v2365, 0.0
        %v2398 = vmax.f32 %v2366, 0.0
        %v2399 = vmax.f32 %v2367, 0.0
        %v2400 = vmax.f32 %v2368, 0.0
        %v2401 = vmax.f32 %v2369, 0.0
        %v2402 = vmax.f32 %v2370, 0.0
        %v2403 = vmax.f32 %v2371, 0.0
        %v2404 = vmax.f32 %v2372, 0.0
        %2405 = vst [vmem:[#allocation3] sm:$0xff] 0.0
        %2406 = vst [vmem:[#allocation3 + $0x8] sm:$0xff] 0.0
        %2407 = vst [vmem:[#allocation3 + $0x10] sm:$0x3] 0.0
        %2408 = vst [vmem:[#allocation3 + $0x18] sm:$0xff] 0.0
        %2409 = vst [vmem:[#allocation3 + $0x20] sm:$0xff] 0.0
        %2410 = vst [vmem:[#allocation3 + $0x28] sm:$0x3] 0.0
        %2411 = vst [vmem:[#allocation3 + $0x30] sm:$0xff] 0.0
        %2412 = vst [vmem:[#allocation3 + $0x38] sm:$0xff] 0.0
        %2413 = vst [vmem:[#allocation3 + $0x40] sm:$0x3] 0.0
        %2414 = vst [vmem:[#allocation3 + $0x48] sm:$0xff] 0.0
        %2415 = vst [vmem:[#allocation3 + $0x50] sm:$0xff] 0.0
        %2416 = vst [vmem:[#allocation3 + $0x58] sm:$0x3] 0.0
        %2417 = vst [vmem:[#allocation3 + $0x60] sm:$0xff] 0.0
        %2418 = vst [vmem:[#allocation3 + $0x68] sm:$0xff] 0.0
        %2419 = vst [vmem:[#allocation3 + $0x70] sm:$0x3] 0.0
        %2420 = vst [vmem:[#allocation3 + $0x78] sm:$0xff] 0.0
        %2421 = vst [vmem:[#allocation3 + $0x80] sm:$0xff] 0.0
        %2422 = vst [vmem:[#allocation3 + $0x88] sm:$0x3] 0.0
        %2423 = vst [vmem:[#allocation3 + $0x90] sm:$0xff] 0.0
        %2424 = vst [vmem:[#allocation3 + $0x98] sm:$0xff] 0.0
        %2425 = vst [vmem:[#allocation3 + $0xa0] sm:$0x3] 0.0
        %2426 = vst [vmem:[#allocation3 + $0xa8] sm:$0xff] 0.0
        %2427 = vst [vmem:[#allocation3 + $0xb0] sm:$0xff] 0.0
        %2428 = vst [vmem:[#allocation3 + $0xb8] sm:$0x3] 0.0
        %2429 = vst [vmem:[#allocation3 + $0xc0] sm:$0xff] 0.0
        %2430 = vst [vmem:[#allocation3 + $0xc8] sm:$0xff] 0.0
        %2431 = vst [vmem:[#allocation3 + $0xd0] sm:$0x3] 0.0
        %2432 = vst [vmem:[#allocation3 + $0xd8] sm:$0xff] 0.0
        %2433 = vst [vmem:[#allocation3 + $0xe0] sm:$0xff] 0.0
        %2434 = vst [vmem:[#allocation3 + $0xe8] sm:$0x3] 0.0
        %2435 = vst [vmem:[#allocation3 + $0xf0] sm:$0xff] 0.0
        %2436 = vst [vmem:[#allocation3 + $0xf8] sm:$0xff] 0.0
        %2437 = vst [vmem:[#allocation3 + $0x100] sm:$0x3] 0.0
        %2438 = vst [vmem:[#allocation3 + $0x108] sm:$0xff] 0.0
        %2439 = vst [vmem:[#allocation3 + $0x110] sm:$0xff] 0.0
        %2440 = vst [vmem:[#allocation3 + $0x118] sm:$0x3] 0.0
        %2441 = vst [vmem:[#allocation3 + $0x120] sm:$0xff] 0.0
        %2442 = vst [vmem:[#allocation3 + $0x128] sm:$0xff] 0.0
        %2443 = vst [vmem:[#allocation3 + $0x130] sm:$0x3] 0.0
        %2444 = vst [vmem:[#allocation3 + $0x138] sm:$0xff] 0.0
        %2445 = vst [vmem:[#allocation3 + $0x140] sm:$0xff] 0.0
        %2446 = vst [vmem:[#allocation3 + $0x148] sm:$0x3] 0.0
        %2447 = vst [vmem:[#allocation3 + $0x150] sm:$0xff] 0.0
        %2448 = vst [vmem:[#allocation3 + $0x158] sm:$0xff] 0.0
        %2449 = vst [vmem:[#allocation3 + $0x160] sm:$0x3] 0.0
        %2450 = vst [vmem:[#allocation3 + $0x168] sm:$0xff] 0.0
        %2451 = vst [vmem:[#allocation3 + $0x170] sm:$0xff] 0.0
        %2452 = vst [vmem:[#allocation3 + $0x178] sm:$0x3] 0.0
        %2453 = vst [vmem:[#allocation3 + $0x180] sm:$0xff] 0.0
        %2454 = vst [vmem:[#allocation3 + $0x188] sm:$0xff] 0.0
        %2455 = vst [vmem:[#allocation3 + $0x190] sm:$0x3] 0.0
        %2456 = vst [vmem:[#allocation3 + $0x198] sm:$0xff] 0.0
        %2457 = vst [vmem:[#allocation3 + $0x1a0] sm:$0xff] 0.0
        %2458 = vst [vmem:[#allocation3 + $0x1a8] sm:$0x3] 0.0
        %s2459 = scalar_lea.vmem [#allocation3], 24
        %2460 = vst [vmem:[%s2459 + $0x1] sm:$0xff] %v2373
        %2461 = vst [vmem:[%s2459 + $0x9] sm:$0xff] %v2374
        %2462 = vst [vmem:[%s2459 + $0x19] sm:$0xff] %v2375
        %2463 = vst [vmem:[%s2459 + $0x21] sm:$0xff] %v2376
        %2464 = vst [vmem:[%s2459 + $0x31] sm:$0xff] %v2377
        %2465 = vst [vmem:[%s2459 + $0x39] sm:$0xff] %v2378
        %2466 = vst [vmem:[%s2459 + $0x49] sm:$0xff] %v2379
        %2467 = vst [vmem:[%s2459 + $0x51] sm:$0xff] %v2380
        %2468 = vst [vmem:[%s2459 + $0x61] sm:$0xff] %v2381
        %2469 = vst [vmem:[%s2459 + $0x69] sm:$0xff] %v2382
        %2470 = vst [vmem:[%s2459 + $0x79] sm:$0xff] %v2383
        %2471 = vst [vmem:[%s2459 + $0x81] sm:$0xff] %v2384
        %2472 = vst [vmem:[%s2459 + $0x91] sm:$0xff] %v2385
        %2473 = vst [vmem:[%s2459 + $0x99] sm:$0xff] %v2386
        %2474 = vst [vmem:[%s2459 + $0xa9] sm:$0xff] %v2387
        %2475 = vst [vmem:[%s2459 + $0xb1] sm:$0xff] %v2388
        %2476 = vst [vmem:[%s2459 + $0xc1] sm:$0xff] %v2389
        %2477 = vst [vmem:[%s2459 + $0xc9] sm:$0xff] %v2390
        %2478 = vst [vmem:[%s2459 + $0xd9] sm:$0xff] %v2391
        %2479 = vst [vmem:[%s2459 + $0xe1] sm:$0xff] %v2392
        %2480 = vst [vmem:[%s2459 + $0xf1] sm:$0xff] %v2393
        %2481 = vst [vmem:[%s2459 + $0xf9] sm:$0xff] %v2394
        %2482 = vst [vmem:[%s2459 + $0x109] sm:$0xff] %v2395
        %2483 = vst [vmem:[%s2459 + $0x111] sm:$0xff] %v2396
        %2484 = vst [vmem:[%s2459 + $0x121] sm:$0xff] %v2397
        %2485 = vst [vmem:[%s2459 + $0x129] sm:$0xff] %v2398
        %2486 = vst [vmem:[%s2459 + $0x139] sm:$0xff] %v2399
        %2487 = vst [vmem:[%s2459 + $0x141] sm:$0xff] %v2400
        %2488 = vst [vmem:[%s2459 + $0x151] sm:$0xff] %v2401
        %2489 = vst [vmem:[%s2459 + $0x159] sm:$0xff] %v2402
        %2490 = vst [vmem:[%s2459 + $0x169] sm:$0xff] %v2403
        %2491 = vst [vmem:[%s2459 + $0x171] sm:$0xff] %v2404
        %v2492 = vld [vmem:[#allocation3] sm:$0xff]
        %v2493 = vld [vmem:[#allocation3 + $0x8] sm:$0xff]
        %v2494 = vld [vmem:[#allocation3 + $0x18] sm:$0xff]
        %v2495 = vld [vmem:[#allocation3 + $0x20] sm:$0xff]
        %v2496 = vld [vmem:[#allocation3 + $0x30] sm:$0xff]
        %v2497 = vld [vmem:[#allocation3 + $0x38] sm:$0xff]
        %v2498 = vld [vmem:[#allocation3 + $0x48] sm:$0xff]
        %v2499 = vld [vmem:[#allocation3 + $0x50] sm:$0xff]
        %v2500 = vld [vmem:[#allocation3 + $0x60] sm:$0xff]
        %v2501 = vld [vmem:[#allocation3 + $0x68] sm:$0xff]
        %v2502 = vld [vmem:[#allocation3 + $0x78] sm:$0xff]
        %v2503 = vld [vmem:[#allocation3 + $0x80] sm:$0xff]
        %v2504 = vld [vmem:[#allocation3 + $0x90] sm:$0xff]
        %v2505 = vld [vmem:[#allocation3 + $0x98] sm:$0xff]
        %v2506 = vld [vmem:[#allocation3 + $0xa8] sm:$0xff]
        %v2507 = vld [vmem:[#allocation3 + $0xb0] sm:$0xff]
        %v2508 = vld [vmem:[#allocation3 + $0xc0] sm:$0xff]
        %v2509 = vld [vmem:[#allocation3 + $0xc8] sm:$0xff]
        %v2510 = vld [vmem:[#allocation3 + $0xd8] sm:$0xff]
        %v2511 = vld [vmem:[#allocation3 + $0xe0] sm:$0xff]
        %v2512 = vld [vmem:[#allocation3 + $0xf0] sm:$0xff]
        %v2513 = vld [vmem:[#allocation3 + $0xf8] sm:$0xff]
        %v2514 = vld [vmem:[#allocation3 + $0x108] sm:$0xff]
        %v2515 = vld [vmem:[#allocation3 + $0x110] sm:$0xff]
        %v2516 = vld [vmem:[#allocation3 + $0x120] sm:$0xff]
        %v2517 = vld [vmem:[#allocation3 + $0x128] sm:$0xff]
        %v2518 = vld [vmem:[#allocation3 + $0x138] sm:$0xff]
        %v2519 = vld [vmem:[#allocation3 + $0x140] sm:$0xff]
        %v2520 = vld [vmem:[#allocation3 + $0x150] sm:$0xff]
        %v2521 = vld [vmem:[#allocation3 + $0x158] sm:$0xff]
        %v2522 = vld [vmem:[#allocation3 + $0x168] sm:$0xff]
        %v2523 = vld [vmem:[#allocation3 + $0x170] sm:$0xff]
        %v2524 = vpack.c.bf16 %v2493, %v2492
        %v2525 = vpack.c.bf16 %v2495, %v2494
        %v2526 = vpack.c.bf16 %v2497, %v2496
        %v2527 = vpack.c.bf16 %v2499, %v2498
        %v2528 = vpack.c.bf16 %v2501, %v2500
        %v2529 = vpack.c.bf16 %v2503, %v2502
        %v2530 = vpack.c.bf16 %v2505, %v2504
        %v2531 = vpack.c.bf16 %v2507, %v2506
        %v2532 = vpack.c.bf16 %v2509, %v2508
        %v2533 = vpack.c.bf16 %v2511, %v2510
        %v2534 = vpack.c.bf16 %v2513, %v2512
        %v2535 = vpack.c.bf16 %v2515, %v2514
        %v2536 = vpack.c.bf16 %v2517, %v2516
        %v2537 = vpack.c.bf16 %v2519, %v2518
        %v2538 = vpack.c.bf16 %v2521, %v2520
        %v2539 = vpack.c.bf16 %v2523, %v2522
        %v2540 = vld [vmem:[#allocation4] sm:$0xf]
        %v2541 = vld [vmem:[#allocation4 + $0x4] sm:$0xf]
        %v2542 = vld [vmem:[#allocation4 + $0x8] sm:$0xf]
        %v2543 = vld [vmem:[#allocation4 + $0xc] sm:$0xf]
        %v2544 = vld [vmem:[#allocation4 + $0x10] sm:$0xf]
        %v2545 = vld [vmem:[#allocation4 + $0x14] sm:$0xf]
        %v2546 = vld [vmem:[#allocation4 + $0x18] sm:$0xf]
        %v2547 = vld [vmem:[#allocation4 + $0x1c] sm:$0xf]
        %v2548 = vld [vmem:[#allocation4 + $0x20] sm:$0xf]
        %v2549 = vld [vmem:[#allocation4 + $0x24] sm:$0xf]
        %v2550 = vld [vmem:[#allocation4 + $0x28] sm:$0xf]
        %v2551 = vld [vmem:[#allocation4 + $0x2c] sm:$0xf]
        %v2552 = vld [vmem:[#allocation4 + $0x30] sm:$0xf]
        %v2553 = vld [vmem:[#allocation4 + $0x34] sm:$0xf]
        %v2554 = vld [vmem:[#allocation4 + $0x38] sm:$0xf]
        %v2555 = vld [vmem:[#allocation4 + $0x3c] sm:$0xf]
        %v2556 = vld [vmem:[#allocation3 + $0x1] sm:$0xff]
        %v2557 = vld [vmem:[#allocation3 + $0x9] sm:$0xff]
        %v2558 = vld [vmem:[#allocation3 + $0x19] sm:$0xff]
        %v2559 = vld [vmem:[#allocation3 + $0x21] sm:$0xff]
        %v2560 = vld [vmem:[#allocation3 + $0x31] sm:$0xff]
        %v2561 = vld [vmem:[#allocation3 + $0x39] sm:$0xff]
        %v2562 = vld [vmem:[#allocation3 + $0x49] sm:$0xff]
        %v2563 = vld [vmem:[#allocation3 + $0x51] sm:$0xff]
        %v2564 = vld [vmem:[#allocation3 + $0x61] sm:$0xff]
        %v2565 = vld [vmem:[#allocation3 + $0x69] sm:$0xff]
        %v2566 = vld [vmem:[#allocation3 + $0x79] sm:$0xff]
        %v2567 = vld [vmem:[#allocation3 + $0x81] sm:$0xff]
        %v2568 = vld [vmem:[#allocation3 + $0x91] sm:$0xff]
        %v2569 = vld [vmem:[#allocation3 + $0x99] sm:$0xff]
        %v2570 = vld [vmem:[#allocation3 + $0xa9] sm:$0xff]
        %v2571 = vld [vmem:[#allocation3 + $0xb1] sm:$0xff]
        %v2572 = vld [vmem:[#allocation3 + $0xc1] sm:$0xff]
        %v2573 = vld [vmem:[#allocation3 + $0xc9] sm:$0xff]
        %v2574 = vld [vmem:[#allocation3 + $0xd9] sm:$0xff]
        %v2575 = vld [vmem:[#allocation3 + $0xe1] sm:$0xff]
        %v2576 = vld [vmem:[#allocation3 + $0xf1] sm:$0xff]
        %v2577 = vld [vmem:[#allocation3 + $0xf9] sm:$0xff]
        %v2578 = vld [vmem:[#allocation3 + $0x109] sm:$0xff]
        %v2579 = vld [vmem:[#allocation3 + $0x111] sm:$0xff]
        %v2580 = vld [vmem:[#allocation3 + $0x121] sm:$0xff]
        %v2581 = vld [vmem:[#allocation3 + $0x129] sm:$0xff]
        %v2582 = vld [vmem:[#allocation3 + $0x139] sm:$0xff]
        %v2583 = vld [vmem:[#allocation3 + $0x141] sm:$0xff]
        %v2584 = vld [vmem:[#allocation3 + $0x151] sm:$0xff]
        %v2585 = vld [vmem:[#allocation3 + $0x159] sm:$0xff]
        %v2586 = vld [vmem:[#allocation3 + $0x169] sm:$0xff]
        %v2587 = vld [vmem:[#allocation3 + $0x171] sm:$0xff]
        %v2588 = vpack.c.bf16 %v2557, %v2556
        %v2589 = vpack.c.bf16 %v2559, %v2558
        %v2590 = vpack.c.bf16 %v2561, %v2560
        %v2591 = vpack.c.bf16 %v2563, %v2562
        %v2592 = vpack.c.bf16 %v2565, %v2564
        %v2593 = vpack.c.bf16 %v2567, %v2566
        %v2594 = vpack.c.bf16 %v2569, %v2568
        %v2595 = vpack.c.bf16 %v2571, %v2570
        %v2596 = vpack.c.bf16 %v2573, %v2572
        %v2597 = vpack.c.bf16 %v2575, %v2574
        %v2598 = vpack.c.bf16 %v2577, %v2576
        %v2599 = vpack.c.bf16 %v2579, %v2578
        %v2600 = vpack.c.bf16 %v2581, %v2580
        %v2601 = vpack.c.bf16 %v2583, %v2582
        %v2602 = vpack.c.bf16 %v2585, %v2584
        %v2603 = vpack.c.bf16 %v2587, %v2586
        %v2604 = vld [vmem:[#allocation4 + $0x40] sm:$0xf]
        %v2605 = vld [vmem:[#allocation4 + $0x44] sm:$0xf]
        %v2606 = vld [vmem:[#allocation4 + $0x48] sm:$0xf]
        %v2607 = vld [vmem:[#allocation4 + $0x4c] sm:$0xf]
        %v2608 = vld [vmem:[#allocation4 + $0x50] sm:$0xf]
        %v2609 = vld [vmem:[#allocation4 + $0x54] sm:$0xf]
        %v2610 = vld [vmem:[#allocation4 + $0x58] sm:$0xf]
        %v2611 = vld [vmem:[#allocation4 + $0x5c] sm:$0xf]
        %v2612 = vld [vmem:[#allocation4 + $0x60] sm:$0xf]
        %v2613 = vld [vmem:[#allocation4 + $0x64] sm:$0xf]
        %v2614 = vld [vmem:[#allocation4 + $0x68] sm:$0xf]
        %v2615 = vld [vmem:[#allocation4 + $0x6c] sm:$0xf]
        %v2616 = vld [vmem:[#allocation4 + $0x70] sm:$0xf]
        %v2617 = vld [vmem:[#allocation4 + $0x74] sm:$0xf]
        %v2618 = vld [vmem:[#allocation4 + $0x78] sm:$0xf]
        %v2619 = vld [vmem:[#allocation4 + $0x7c] sm:$0xf]
        %v2636 = vunpack.c.l.b16 %v2604
        %v2637 = vunpack.c.l.b16 %v2605
        %v2638 = vunpack.c.l.b16 %v2606
        %v2639 = vunpack.c.l.b16 %v2607
        %v2640 = vunpack.c.l.b16 %v2608
        %v2641 = vunpack.c.l.b16 %v2609
        %v2642 = vunpack.c.l.b16 %v2610
        %v2643 = vunpack.c.l.b16 %v2611
        %v2644 = vunpack.c.l.b16 %v2612
        %v2645 = vunpack.c.l.b16 %v2613
        %v2646 = vunpack.c.l.b16 %v2614
        %v2647 = vunpack.c.l.b16 %v2615
        %v2648 = vunpack.c.l.b16 %v2616
        %v2649 = vunpack.c.l.b16 %v2617
        %v2650 = vunpack.c.l.b16 %v2618
        %v2651 = vunpack.c.l.b16 %v2619
        %v2652 = vpack.c.b16 %v2637, %v2636
        %v2653 = vpack.c.b16 %v2639, %v2638
        %v2654 = vpack.c.b16 %v2641, %v2640
        %v2655 = vpack.c.b16 %v2643, %v2642
        %v2656 = vpack.c.b16 %v2645, %v2644
        %v2657 = vpack.c.b16 %v2647, %v2646
        %v2658 = vpack.c.b16 %v2649, %v2648
        %v2659 = vpack.c.b16 %v2651, %v2650
        %2668 = vmatpush.bf16.msra.mxu0 %v2659
        %2669 = vmatpush.bf16.msra.mxu0 %v2658
        %2670 = vmatpush.bf16.msra.mxu0 %v2657
        %2671 = vmatpush.bf16.msra.mxu0 %v2656
        %2672 = vmatpush.bf16.msra.mxu0 %v2655
        %2673 = vmatpush.bf16.msra.mxu0 %v2654
        %2674 = vmatpush.bf16.msra.mxu0 %v2653
        %2675 = vmatpush.bf16.msra.mxu0 %v2652
        %2676 = vmatmul.bf16.gmra.mxu0 %v2588
        %v2677 = vpop.f32.mrf.mxu0
        %v2678 = vadd.f32 0.0, %v2677
        %v2679 = vpop.f32.mrf.mxu0
        %v2680 = vadd.f32 0.0, %v2679
        %2681 = vmatmul.bf16.gmra.mxu0 %v2589
        %v2682 = vpop.f32.mrf.mxu0
        %v2683 = vadd.f32 0.0, %v2682
        %v2684 = vpop.f32.mrf.mxu0
        %v2685 = vadd.f32 0.0, %v2684
        %2686 = vmatmul.bf16.gmra.mxu0 %v2590
        %v2687 = vpop.f32.mrf.mxu0
        %v2688 = vadd.f32 0.0, %v2687
        %v2689 = vpop.f32.mrf.mxu0
        %v2690 = vadd.f32 0.0, %v2689
        %2691 = vmatmul.bf16.gmra.mxu0 %v2591
        %v2692 = vpop.f32.mrf.mxu0
        %v2693 = vadd.f32 0.0, %v2692
        %v2694 = vpop.f32.mrf.mxu0
        %v2695 = vadd.f32 0.0, %v2694
        %2696 = vmatmul.bf16.gmra.mxu0 %v2592
        %v2697 = vpop.f32.mrf.mxu0
        %v2698 = vadd.f32 0.0, %v2697
        %v2699 = vpop.f32.mrf.mxu0
        %v2700 = vadd.f32 0.0, %v2699
        %2701 = vmatmul.bf16.gmra.mxu0 %v2593
        %v2702 = vpop.f32.mrf.mxu0
        %v2703 = vadd.f32 0.0, %v2702
        %v2704 = vpop.f32.mrf.mxu0
        %v2705 = vadd.f32 0.0, %v2704
        %2706 = vmatmul.bf16.gmra.mxu0 %v2594
        %v2707 = vpop.f32.mrf.mxu0
        %v2708 = vadd.f32 0.0, %v2707
        %v2709 = vpop.f32.mrf.mxu0
        %v2710 = vadd.f32 0.0, %v2709
        %2711 = vmatmul.bf16.gmra.mxu0 %v2595
        %v2712 = vpop.f32.mrf.mxu0
        %v2713 = vadd.f32 0.0, %v2712
        %v2714 = vpop.f32.mrf.mxu0
        %v2715 = vadd.f32 0.0, %v2714
        %2716 = vmatmul.bf16.gmra.mxu0 %v2596
        %v2717 = vpop.f32.mrf.mxu0
        %v2718 = vadd.f32 0.0, %v2717
        %v2719 = vpop.f32.mrf.mxu0
        %v2720 = vadd.f32 0.0, %v2719
        %2721 = vmatmul.bf16.gmra.mxu0 %v2597
        %v2722 = vpop.f32.mrf.mxu0
        %v2723 = vadd.f32 0.0, %v2722
        %v2724 = vpop.f32.mrf.mxu0
        %v2725 = vadd.f32 0.0, %v2724
        %2726 = vmatmul.bf16.gmra.mxu0 %v2598
        %v2727 = vpop.f32.mrf.mxu0
        %v2728 = vadd.f32 0.0, %v2727
        %v2729 = vpop.f32.mrf.mxu0
        %v2730 = vadd.f32 0.0, %v2729
        %2731 = vmatmul.bf16.gmra.mxu0 %v2599
        %v2732 = vpop.f32.mrf.mxu0
        %v2733 = vadd.f32 0.0, %v2732
        %v2734 = vpop.f32.mrf.mxu0
        %v2735 = vadd.f32 0.0, %v2734
        %2736 = vmatmul.bf16.gmra.mxu0 %v2600
        %v2737 = vpop.f32.mrf.mxu0
        %v2738 = vadd.f32 0.0, %v2737
        %v2739 = vpop.f32.mrf.mxu0
        %v2740 = vadd.f32 0.0, %v2739
        %2741 = vmatmul.bf16.gmra.mxu0 %v2601
        %v2742 = vpop.f32.mrf.mxu0
        %v2743 = vadd.f32 0.0, %v2742
        %v2744 = vpop.f32.mrf.mxu0
        %v2745 = vadd.f32 0.0, %v2744
        %2746 = vmatmul.bf16.gmra.mxu0 %v2602
        %v2747 = vpop.f32.mrf.mxu0
        %v2748 = vadd.f32 0.0, %v2747
        %v2749 = vpop.f32.mrf.mxu0
        %v2750 = vadd.f32 0.0, %v2749
        %2751 = vmatmul.bf16.gmra.mxu0 %v2603
        %v2752 = vpop.f32.mrf.mxu0
        %v2753 = vadd.f32 0.0, %v2752
        %v2754 = vpop.f32.mrf.mxu0
        %v2755 = vadd.f32 0.0, %v2754
        %2756 = vdwg.mxu0
        %v2773 = vunpack.c.l.b16 %v2540
        %v2774 = vunpack.c.l.b16 %v2541
        %v2775 = vunpack.c.l.b16 %v2542
        %v2776 = vunpack.c.l.b16 %v2543
        %v2777 = vunpack.c.l.b16 %v2544
        %v2778 = vunpack.c.l.b16 %v2545
        %v2779 = vunpack.c.l.b16 %v2546
        %v2780 = vunpack.c.l.b16 %v2547
        %v2781 = vunpack.c.l.b16 %v2548
        %v2782 = vunpack.c.l.b16 %v2549
        %v2783 = vunpack.c.l.b16 %v2550
        %v2784 = vunpack.c.l.b16 %v2551
        %v2785 = vunpack.c.l.b16 %v2552
        %v2786 = vunpack.c.l.b16 %v2553
        %v2787 = vunpack.c.l.b16 %v2554
        %v2788 = vunpack.c.l.b16 %v2555
        %v2789 = vpack.c.b16 %v2774, %v2773
        %v2790 = vpack.c.b16 %v2776, %v2775
        %v2791 = vpack.c.b16 %v2778, %v2777
        %v2792 = vpack.c.b16 %v2780, %v2779
        %v2793 = vpack.c.b16 %v2782, %v2781
        %v2794 = vpack.c.b16 %v2784, %v2783
        %v2795 = vpack.c.b16 %v2786, %v2785
        %v2796 = vpack.c.b16 %v2788, %v2787
        %2805 = vmatpush.bf16.msra.mxu0 %v2796
        %2806 = vmatpush.bf16.msra.mxu0 %v2795
        %2807 = vmatpush.bf16.msra.mxu0 %v2794
        %2808 = vmatpush.bf16.msra.mxu0 %v2793
        %2809 = vmatpush.bf16.msra.mxu0 %v2792
        %2810 = vmatpush.bf16.msra.mxu0 %v2791
        %2811 = vmatpush.bf16.msra.mxu0 %v2790
        %2812 = vmatpush.bf16.msra.mxu0 %v2789
        %2813 = vmatmul.bf16.gmra.mxu0 %v2524
        %v2814 = vpop.f32.mrf.mxu0
        %v2815 = vadd.f32 %v2678, %v2814
        %v2816 = vpop.f32.mrf.mxu0
        %v2817 = vadd.f32 %v2680, %v2816
        %2818 = vmatmul.bf16.gmra.mxu0 %v2525
        %v2819 = vpop.f32.mrf.mxu0
        %v2820 = vadd.f32 %v2683, %v2819
        %v2821 = vpop.f32.mrf.mxu0
        %v2822 = vadd.f32 %v2685, %v2821
        %2823 = vmatmul.bf16.gmra.mxu0 %v2526
        %v2824 = vpop.f32.mrf.mxu0
        %v2825 = vadd.f32 %v2688, %v2824
        %v2826 = vpop.f32.mrf.mxu0
        %v2827 = vadd.f32 %v2690, %v2826
        %2828 = vmatmul.bf16.gmra.mxu0 %v2527
        %v2829 = vpop.f32.mrf.mxu0
        %v2830 = vadd.f32 %v2693, %v2829
        %v2831 = vpop.f32.mrf.mxu0
        %v2832 = vadd.f32 %v2695, %v2831
        %2833 = vmatmul.bf16.gmra.mxu0 %v2528
        %v2834 = vpop.f32.mrf.mxu0
        %v2835 = vadd.f32 %v2698, %v2834
        %v2836 = vpop.f32.mrf.mxu0
        %v2837 = vadd.f32 %v2700, %v2836
        %2838 = vmatmul.bf16.gmra.mxu0 %v2529
        %v2839 = vpop.f32.mrf.mxu0
        %v2840 = vadd.f32 %v2703, %v2839
        %v2841 = vpop.f32.mrf.mxu0
        %v2842 = vadd.f32 %v2705, %v2841
        %2843 = vmatmul.bf16.gmra.mxu0 %v2530
        %v2844 = vpop.f32.mrf.mxu0
        %v2845 = vadd.f32 %v2708, %v2844
        %v2846 = vpop.f32.mrf.mxu0
        %v2847 = vadd.f32 %v2710, %v2846
        %2848 = vmatmul.bf16.gmra.mxu0 %v2531
        %v2849 = vpop.f32.mrf.mxu0
        %v2850 = vadd.f32 %v2713, %v2849
        %v2851 = vpop.f32.mrf.mxu0
        %v2852 = vadd.f32 %v2715, %v2851
        %2853 = vmatmul.bf16.gmra.mxu0 %v2532
        %v2854 = vpop.f32.mrf.mxu0
        %v2855 = vadd.f32 %v2718, %v2854
        %v2856 = vpop.f32.mrf.mxu0
        %v2857 = vadd.f32 %v2720, %v2856
        %2858 = vmatmul.bf16.gmra.mxu0 %v2533
        %v2859 = vpop.f32.mrf.mxu0
        %v2860 = vadd.f32 %v2723, %v2859
        %v2861 = vpop.f32.mrf.mxu0
        %v2862 = vadd.f32 %v2725, %v2861
        %2863 = vmatmul.bf16.gmra.mxu0 %v2534
        %v2864 = vpop.f32.mrf.mxu0
        %v2865 = vadd.f32 %v2728, %v2864
        %v2866 = vpop.f32.mrf.mxu0
        %v2867 = vadd.f32 %v2730, %v2866
        %2868 = vmatmul.bf16.gmra.mxu0 %v2535
        %v2869 = vpop.f32.mrf.mxu0
        %v2870 = vadd.f32 %v2733, %v2869
        %v2871 = vpop.f32.mrf.mxu0
        %v2872 = vadd.f32 %v2735, %v2871
        %2873 = vmatmul.bf16.gmra.mxu0 %v2536
        %v2874 = vpop.f32.mrf.mxu0
        %v2875 = vadd.f32 %v2738, %v2874
        %v2876 = vpop.f32.mrf.mxu0
        %v2877 = vadd.f32 %v2740, %v2876
        %2878 = vmatmul.bf16.gmra.mxu0 %v2537
        %v2879 = vpop.f32.mrf.mxu0
        %v2880 = vadd.f32 %v2743, %v2879
        %v2881 = vpop.f32.mrf.mxu0
        %v2882 = vadd.f32 %v2745, %v2881
        %2883 = vmatmul.bf16.gmra.mxu0 %v2538
        %v2884 = vpop.f32.mrf.mxu0
        %v2885 = vadd.f32 %v2748, %v2884
        %v2886 = vpop.f32.mrf.mxu0
        %v2887 = vadd.f32 %v2750, %v2886
        %2888 = vmatmul.bf16.gmra.mxu0 %v2539
        %v2889 = vpop.f32.mrf.mxu0
        %v2890 = vadd.f32 %v2753, %v2889
        %v2891 = vpop.f32.mrf.mxu0
        %v2892 = vadd.f32 %v2755, %v2891
        %2893 = vdwg.mxu0
        %v2894 = vld [vmem:[#allocation3 + $0x2] sm:$0xff]
        %v2895 = vld [vmem:[#allocation3 + $0xa] sm:$0xff]
        %v2896 = vld [vmem:[#allocation3 + $0x1a] sm:$0xff]
        %v2897 = vld [vmem:[#allocation3 + $0x22] sm:$0xff]
        %v2898 = vld [vmem:[#allocation3 + $0x32] sm:$0xff]
        %v2899 = vld [vmem:[#allocation3 + $0x3a] sm:$0xff]
        %v2900 = vld [vmem:[#allocation3 + $0x4a] sm:$0xff]
        %v2901 = vld [vmem:[#allocation3 + $0x52] sm:$0xff]
        %v2902 = vld [vmem:[#allocation3 + $0x62] sm:$0xff]
        %v2903 = vld [vmem:[#allocation3 + $0x6a] sm:$0xff]
        %v2904 = vld [vmem:[#allocation3 + $0x7a] sm:$0xff]
        %v2905 = vld [vmem:[#allocation3 + $0x82] sm:$0xff]
        %v2906 = vld [vmem:[#allocation3 + $0x92] sm:$0xff]
        %v2907 = vld [vmem:[#allocation3 + $0x9a] sm:$0xff]
        %v2908 = vld [vmem:[#allocation3 + $0xaa] sm:$0xff]
        %v2909 = vld [vmem:[#allocation3 + $0xb2] sm:$0xff]
        %v2910 = vld [vmem:[#allocation3 + $0xc2] sm:$0xff]
        %v2911 = vld [vmem:[#allocation3 + $0xca] sm:$0xff]
        %v2912 = vld [vmem:[#allocation3 + $0xda] sm:$0xff]
        %v2913 = vld [vmem:[#allocation3 + $0xe2] sm:$0xff]
        %v2914 = vld [vmem:[#allocation3 + $0xf2] sm:$0xff]
        %v2915 = vld [vmem:[#allocation3 + $0xfa] sm:$0xff]
        %v2916 = vld [vmem:[#allocation3 + $0x10a] sm:$0xff]
        %v2917 = vld [vmem:[#allocation3 + $0x112] sm:$0xff]
        %v2918 = vld [vmem:[#allocation3 + $0x122] sm:$0xff]
        %v2919 = vld [vmem:[#allocation3 + $0x12a] sm:$0xff]
        %v2920 = vld [vmem:[#allocation3 + $0x13a] sm:$0xff]
        %v2921 = vld [vmem:[#allocation3 + $0x142] sm:$0xff]
        %v2922 = vld [vmem:[#allocation3 + $0x152] sm:$0xff]
        %v2923 = vld [vmem:[#allocation3 + $0x15a] sm:$0xff]
        %v2924 = vld [vmem:[#allocation3 + $0x16a] sm:$0xff]
        %v2925 = vld [vmem:[#allocation3 + $0x172] sm:$0xff]
        %v2926 = vpack.c.bf16 %v2895, %v2894
        %v2927 = vpack.c.bf16 %v2897, %v2896
        %v2928 = vpack.c.bf16 %v2899, %v2898
        %v2929 = vpack.c.bf16 %v2901, %v2900
        %v2930 = vpack.c.bf16 %v2903, %v2902
        %v2931 = vpack.c.bf16 %v2905, %v2904
        %v2932 = vpack.c.bf16 %v2907, %v2906
        %v2933 = vpack.c.bf16 %v2909, %v2908
        %v2934 = vpack.c.bf16 %v2911, %v2910
        %v2935 = vpack.c.bf16 %v2913, %v2912
        %v2936 = vpack.c.bf16 %v2915, %v2914
        %v2937 = vpack.c.bf16 %v2917, %v2916
        %v2938 = vpack.c.bf16 %v2919, %v2918
        %v2939 = vpack.c.bf16 %v2921, %v2920
        %v2940 = vpack.c.bf16 %v2923, %v2922
        %v2941 = vpack.c.bf16 %v2925, %v2924
        %v2942 = vld [vmem:[#allocation4 + $0x80] sm:$0xf]
        %v2943 = vld [vmem:[#allocation4 + $0x84] sm:$0xf]
        %v2944 = vld [vmem:[#allocation4 + $0x88] sm:$0xf]
        %v2945 = vld [vmem:[#allocation4 + $0x8c] sm:$0xf]
        %v2946 = vld [vmem:[#allocation4 + $0x90] sm:$0xf]
        %v2947 = vld [vmem:[#allocation4 + $0x94] sm:$0xf]
        %v2948 = vld [vmem:[#allocation4 + $0x98] sm:$0xf]
        %v2949 = vld [vmem:[#allocation4 + $0x9c] sm:$0xf]
        %v2950 = vld [vmem:[#allocation4 + $0xa0] sm:$0xf]
        %v2951 = vld [vmem:[#allocation4 + $0xa4] sm:$0xf]
        %v2952 = vld [vmem:[#allocation4 + $0xa8] sm:$0xf]
        %v2953 = vld [vmem:[#allocation4 + $0xac] sm:$0xf]
        %v2954 = vld [vmem:[#allocation4 + $0xb0] sm:$0xf]
        %v2955 = vld [vmem:[#allocation4 + $0xb4] sm:$0xf]
        %v2956 = vld [vmem:[#allocation4 + $0xb8] sm:$0xf]
        %v2957 = vld [vmem:[#allocation4 + $0xbc] sm:$0xf]
        %v2974 = vunpack.c.l.b16 %v2942
        %v2975 = vunpack.c.l.b16 %v2943
        %v2976 = vunpack.c.l.b16 %v2944
        %v2977 = vunpack.c.l.b16 %v2945
        %v2978 = vunpack.c.l.b16 %v2946
        %v2979 = vunpack.c.l.b16 %v2947
        %v2980 = vunpack.c.l.b16 %v2948
        %v2981 = vunpack.c.l.b16 %v2949
        %v2982 = vunpack.c.l.b16 %v2950
        %v2983 = vunpack.c.l.b16 %v2951
        %v2984 = vunpack.c.l.b16 %v2952
        %v2985 = vunpack.c.l.b16 %v2953
        %v2986 = vunpack.c.l.b16 %v2954
        %v2987 = vunpack.c.l.b16 %v2955
        %v2988 = vunpack.c.l.b16 %v2956
        %v2989 = vunpack.c.l.b16 %v2957
        %v2990 = vpack.c.b16 %v2975, %v2974
        %v2991 = vpack.c.b16 %v2977, %v2976
        %v2992 = vpack.c.b16 %v2979, %v2978
        %v2993 = vpack.c.b16 %v2981, %v2980
        %v2994 = vpack.c.b16 %v2983, %v2982
        %v2995 = vpack.c.b16 %v2985, %v2984
        %v2996 = vpack.c.b16 %v2987, %v2986
        %v2997 = vpack.c.b16 %v2989, %v2988
        %3006 = vmatpush.bf16.msra.mxu0 %v2997
        %3007 = vmatpush.bf16.msra.mxu0 %v2996
        %3008 = vmatpush.bf16.msra.mxu0 %v2995
        %3009 = vmatpush.bf16.msra.mxu0 %v2994
        %3010 = vmatpush.bf16.msra.mxu0 %v2993
        %3011 = vmatpush.bf16.msra.mxu0 %v2992
        %3012 = vmatpush.bf16.msra.mxu0 %v2991
        %3013 = vmatpush.bf16.msra.mxu0 %v2990
        %3014 = vmatmul.bf16.gmra.mxu0 %v2926
        %v3015 = vpop.f32.mrf.mxu0
        %v3016 = vadd.f32 0.0, %v3015
        %v3017 = vpop.f32.mrf.mxu0
        %v3018 = vadd.f32 0.0, %v3017
        %3019 = vmatmul.bf16.gmra.mxu0 %v2927
        %v3020 = vpop.f32.mrf.mxu0
        %v3021 = vadd.f32 0.0, %v3020
        %v3022 = vpop.f32.mrf.mxu0
        %v3023 = vadd.f32 0.0, %v3022
        %3024 = vmatmul.bf16.gmra.mxu0 %v2928
        %v3025 = vpop.f32.mrf.mxu0
        %v3026 = vadd.f32 0.0, %v3025
        %v3027 = vpop.f32.mrf.mxu0
        %v3028 = vadd.f32 0.0, %v3027
        %3029 = vmatmul.bf16.gmra.mxu0 %v2929
        %v3030 = vpop.f32.mrf.mxu0
        %v3031 = vadd.f32 0.0, %v3030
        %v3032 = vpop.f32.mrf.mxu0
        %v3033 = vadd.f32 0.0, %v3032
        %3034 = vmatmul.bf16.gmra.mxu0 %v2930
        %v3035 = vpop.f32.mrf.mxu0
        %v3036 = vadd.f32 0.0, %v3035
        %v3037 = vpop.f32.mrf.mxu0
        %v3038 = vadd.f32 0.0, %v3037
        %3039 = vmatmul.bf16.gmra.mxu0 %v2931
        %v3040 = vpop.f32.mrf.mxu0
        %v3041 = vadd.f32 0.0, %v3040
        %v3042 = vpop.f32.mrf.mxu0
        %v3043 = vadd.f32 0.0, %v3042
        %3044 = vmatmul.bf16.gmra.mxu0 %v2932
        %v3045 = vpop.f32.mrf.mxu0
        %v3046 = vadd.f32 0.0, %v3045
        %v3047 = vpop.f32.mrf.mxu0
        %v3048 = vadd.f32 0.0, %v3047
        %3049 = vmatmul.bf16.gmra.mxu0 %v2933
        %v3050 = vpop.f32.mrf.mxu0
        %v3051 = vadd.f32 0.0, %v3050
        %v3052 = vpop.f32.mrf.mxu0
        %v3053 = vadd.f32 0.0, %v3052
        %3054 = vmatmul.bf16.gmra.mxu0 %v2934
        %v3055 = vpop.f32.mrf.mxu0
        %v3056 = vadd.f32 0.0, %v3055
        %v3057 = vpop.f32.mrf.mxu0
        %v3058 = vadd.f32 0.0, %v3057
        %3059 = vmatmul.bf16.gmra.mxu0 %v2935
        %v3060 = vpop.f32.mrf.mxu0
        %v3061 = vadd.f32 0.0, %v3060
        %v3062 = vpop.f32.mrf.mxu0
        %v3063 = vadd.f32 0.0, %v3062
        %3064 = vmatmul.bf16.gmra.mxu0 %v2936
        %v3065 = vpop.f32.mrf.mxu0
        %v3066 = vadd.f32 0.0, %v3065
        %v3067 = vpop.f32.mrf.mxu0
        %v3068 = vadd.f32 0.0, %v3067
        %3069 = vmatmul.bf16.gmra.mxu0 %v2937
        %v3070 = vpop.f32.mrf.mxu0
        %v3071 = vadd.f32 0.0, %v3070
        %v3072 = vpop.f32.mrf.mxu0
        %v3073 = vadd.f32 0.0, %v3072
        %3074 = vmatmul.bf16.gmra.mxu0 %v2938
        %v3075 = vpop.f32.mrf.mxu0
        %v3076 = vadd.f32 0.0, %v3075
        %v3077 = vpop.f32.mrf.mxu0
        %v3078 = vadd.f32 0.0, %v3077
        %3079 = vmatmul.bf16.gmra.mxu0 %v2939
        %v3080 = vpop.f32.mrf.mxu0
        %v3081 = vadd.f32 0.0, %v3080
        %v3082 = vpop.f32.mrf.mxu0
        %v3083 = vadd.f32 0.0, %v3082
        %3084 = vmatmul.bf16.gmra.mxu0 %v2940
        %v3085 = vpop.f32.mrf.mxu0
        %v3086 = vadd.f32 0.0, %v3085
        %v3087 = vpop.f32.mrf.mxu0
        %v3088 = vadd.f32 0.0, %v3087
        %3089 = vmatmul.bf16.gmra.mxu0 %v2941
        %v3090 = vpop.f32.mrf.mxu0
        %v3091 = vadd.f32 0.0, %v3090
        %v3092 = vpop.f32.mrf.mxu0
        %v3093 = vadd.f32 0.0, %v3092
        %3094 = vdwg.mxu0
        %v3095 = vadd.f32 %v2815, %v3016
        %v3096 = vadd.f32 %v2817, %v3018
        %v3097 = vadd.f32 %v2820, %v3021
        %v3098 = vadd.f32 %v2822, %v3023
        %v3099 = vadd.f32 %v2825, %v3026
        %v3100 = vadd.f32 %v2827, %v3028
        %v3101 = vadd.f32 %v2830, %v3031
        %v3102 = vadd.f32 %v2832, %v3033
        %v3103 = vadd.f32 %v2835, %v3036
        %v3104 = vadd.f32 %v2837, %v3038
        %v3105 = vadd.f32 %v2840, %v3041
        %v3106 = vadd.f32 %v2842, %v3043
        %v3107 = vadd.f32 %v2845, %v3046
        %v3108 = vadd.f32 %v2847, %v3048
        %v3109 = vadd.f32 %v2850, %v3051
        %v3110 = vadd.f32 %v2852, %v3053
        %v3111 = vadd.f32 %v2855, %v3056
        %v3112 = vadd.f32 %v2857, %v3058
        %v3113 = vadd.f32 %v2860, %v3061
        %v3114 = vadd.f32 %v2862, %v3063
        %v3115 = vadd.f32 %v2865, %v3066
        %v3116 = vadd.f32 %v2867, %v3068
        %v3117 = vadd.f32 %v2870, %v3071
        %v3118 = vadd.f32 %v2872, %v3073
        %v3119 = vadd.f32 %v2875, %v3076
        %v3120 = vadd.f32 %v2877, %v3078
        %v3121 = vadd.f32 %v2880, %v3081
        %v3122 = vadd.f32 %v2882, %v3083
        %v3123 = vadd.f32 %v2885, %v3086
        %v3124 = vadd.f32 %v2887, %v3088
        %v3125 = vadd.f32 %v2890, %v3091
        %v3126 = vadd.f32 %v2892, %v3093
        %v3127 = vld [vmem:[%s2459] sm:$0xff]
        %v3128 = vld [vmem:[%s2459 + $0x8] sm:$0xff]
        %v3129 = vld [vmem:[%s2459 + $0x18] sm:$0xff]
        %v3130 = vld [vmem:[%s2459 + $0x20] sm:$0xff]
        %v3131 = vld [vmem:[%s2459 + $0x30] sm:$0xff]
        %v3132 = vld [vmem:[%s2459 + $0x38] sm:$0xff]
        %v3133 = vld [vmem:[%s2459 + $0x48] sm:$0xff]
        %v3134 = vld [vmem:[%s2459 + $0x50] sm:$0xff]
        %v3135 = vld [vmem:[%s2459 + $0x60] sm:$0xff]
        %v3136 = vld [vmem:[%s2459 + $0x68] sm:$0xff]
        %v3137 = vld [vmem:[%s2459 + $0x78] sm:$0xff]
        %v3138 = vld [vmem:[%s2459 + $0x80] sm:$0xff]
        %v3139 = vld [vmem:[%s2459 + $0x90] sm:$0xff]
        %v3140 = vld [vmem:[%s2459 + $0x98] sm:$0xff]
        %v3141 = vld [vmem:[%s2459 + $0xa8] sm:$0xff]
        %v3142 = vld [vmem:[%s2459 + $0xb0] sm:$0xff]
        %v3143 = vld [vmem:[%s2459 + $0xc0] sm:$0xff]
        %v3144 = vld [vmem:[%s2459 + $0xc8] sm:$0xff]
        %v3145 = vld [vmem:[%s2459 + $0xd8] sm:$0xff]
        %v3146 = vld [vmem:[%s2459 + $0xe0] sm:$0xff]
        %v3147 = vld [vmem:[%s2459 + $0xf0] sm:$0xff]
        %v3148 = vld [vmem:[%s2459 + $0xf8] sm:$0xff]
        %v3149 = vld [vmem:[%s2459 + $0x108] sm:$0xff]
        %v3150 = vld [vmem:[%s2459 + $0x110] sm:$0xff]
        %v3151 = vld [vmem:[%s2459 + $0x120] sm:$0xff]
        %v3152 = vld [vmem:[%s2459 + $0x128] sm:$0xff]
        %v3153 = vld [vmem:[%s2459 + $0x138] sm:$0xff]
        %v3154 = vld [vmem:[%s2459 + $0x140] sm:$0xff]
        %v3155 = vld [vmem:[%s2459 + $0x150] sm:$0xff]
        %v3156 = vld [vmem:[%s2459 + $0x158] sm:$0xff]
        %v3157 = vld [vmem:[%s2459 + $0x168] sm:$0xff]
        %v3158 = vld [vmem:[%s2459 + $0x170] sm:$0xff]
        %v3159 = vpack.c.bf16 %v3128, %v3127
        %v3160 = vpack.c.bf16 %v3130, %v3129
        %v3161 = vpack.c.bf16 %v3132, %v3131
        %v3162 = vpack.c.bf16 %v3134, %v3133
        %v3163 = vpack.c.bf16 %v3136, %v3135
        %v3164 = vpack.c.bf16 %v3138, %v3137
        %v3165 = vpack.c.bf16 %v3140, %v3139
        %v3166 = vpack.c.bf16 %v3142, %v3141
        %v3167 = vpack.c.bf16 %v3144, %v3143
        %v3168 = vpack.c.bf16 %v3146, %v3145
        %v3169 = vpack.c.bf16 %v3148, %v3147
        %v3170 = vpack.c.bf16 %v3150, %v3149
        %v3171 = vpack.c.bf16 %v3152, %v3151
        %v3172 = vpack.c.bf16 %v3154, %v3153
        %v3173 = vpack.c.bf16 %v3156, %v3155
        %v3174 = vpack.c.bf16 %v3158, %v3157
        %v3175 = vld [vmem:[#allocation4 + $0xc0] sm:$0xf]
        %v3176 = vld [vmem:[#allocation4 + $0xc4] sm:$0xf]
        %v3177 = vld [vmem:[#allocation4 + $0xc8] sm:$0xf]
        %v3178 = vld [vmem:[#allocation4 + $0xcc] sm:$0xf]
        %v3179 = vld [vmem:[#allocation4 + $0xd0] sm:$0xf]
        %v3180 = vld [vmem:[#allocation4 + $0xd4] sm:$0xf]
        %v3181 = vld [vmem:[#allocation4 + $0xd8] sm:$0xf]
        %v3182 = vld [vmem:[#allocation4 + $0xdc] sm:$0xf]
        %v3183 = vld [vmem:[#allocation4 + $0xe0] sm:$0xf]
        %v3184 = vld [vmem:[#allocation4 + $0xe4] sm:$0xf]
        %v3185 = vld [vmem:[#allocation4 + $0xe8] sm:$0xf]
        %v3186 = vld [vmem:[#allocation4 + $0xec] sm:$0xf]
        %v3187 = vld [vmem:[#allocation4 + $0xf0] sm:$0xf]
        %v3188 = vld [vmem:[#allocation4 + $0xf4] sm:$0xf]
        %v3189 = vld [vmem:[#allocation4 + $0xf8] sm:$0xf]
        %v3190 = vld [vmem:[#allocation4 + $0xfc] sm:$0xf]
        %v3207 = vunpack.c.l.b16 %v3175
        %v3208 = vunpack.c.l.b16 %v3176
        %v3209 = vunpack.c.l.b16 %v3177
        %v3210 = vunpack.c.l.b16 %v3178
        %v3211 = vunpack.c.l.b16 %v3179
        %v3212 = vunpack.c.l.b16 %v3180
        %v3213 = vunpack.c.l.b16 %v3181
        %v3214 = vunpack.c.l.b16 %v3182
        %v3215 = vunpack.c.l.b16 %v3183
        %v3216 = vunpack.c.l.b16 %v3184
        %v3217 = vunpack.c.l.b16 %v3185
        %v3218 = vunpack.c.l.b16 %v3186
        %v3219 = vunpack.c.l.b16 %v3187
        %v3220 = vunpack.c.l.b16 %v3188
        %v3221 = vunpack.c.l.b16 %v3189
        %v3222 = vunpack.c.l.b16 %v3190
        %v3223 = vpack.c.b16 %v3208, %v3207
        %v3224 = vpack.c.b16 %v3210, %v3209
        %v3225 = vpack.c.b16 %v3212, %v3211
        %v3226 = vpack.c.b16 %v3214, %v3213
        %v3227 = vpack.c.b16 %v3216, %v3215
        %v3228 = vpack.c.b16 %v3218, %v3217
        %v3229 = vpack.c.b16 %v3220, %v3219
        %v3230 = vpack.c.b16 %v3222, %v3221
        %3239 = vmatpush.bf16.msra.mxu0 %v3230
        %3240 = vmatpush.bf16.msra.mxu0 %v3229
        %3241 = vmatpush.bf16.msra.mxu0 %v3228
        %3242 = vmatpush.bf16.msra.mxu0 %v3227
        %3243 = vmatpush.bf16.msra.mxu0 %v3226
        %3244 = vmatpush.bf16.msra.mxu0 %v3225
        %3245 = vmatpush.bf16.msra.mxu0 %v3224
        %3246 = vmatpush.bf16.msra.mxu0 %v3223
        %3247 = vmatmul.bf16.gmra.mxu0 %v3159
        %v3248 = vpop.f32.mrf.mxu0
        %v3249 = vadd.f32 0.0, %v3248
        %v3250 = vpop.f32.mrf.mxu0
        %v3251 = vadd.f32 0.0, %v3250
        %3252 = vmatmul.bf16.gmra.mxu0 %v3160
        %v3253 = vpop.f32.mrf.mxu0
        %v3254 = vadd.f32 0.0, %v3253
        %v3255 = vpop.f32.mrf.mxu0
        %v3256 = vadd.f32 0.0, %v3255
        %3257 = vmatmul.bf16.gmra.mxu0 %v3161
        %v3258 = vpop.f32.mrf.mxu0
        %v3259 = vadd.f32 0.0, %v3258
        %v3260 = vpop.f32.mrf.mxu0
        %v3261 = vadd.f32 0.0, %v3260
        %3262 = vmatmul.bf16.gmra.mxu0 %v3162
        %v3263 = vpop.f32.mrf.mxu0
        %v3264 = vadd.f32 0.0, %v3263
        %v3265 = vpop.f32.mrf.mxu0
        %v3266 = vadd.f32 0.0, %v3265
        %3267 = vmatmul.bf16.gmra.mxu0 %v3163
        %v3268 = vpop.f32.mrf.mxu0
        %v3269 = vadd.f32 0.0, %v3268
        %v3270 = vpop.f32.mrf.mxu0
        %v3271 = vadd.f32 0.0, %v3270
        %3272 = vmatmul.bf16.gmra.mxu0 %v3164
        %v3273 = vpop.f32.mrf.mxu0
        %v3274 = vadd.f32 0.0, %v3273
        %v3275 = vpop.f32.mrf.mxu0
        %v3276 = vadd.f32 0.0, %v3275
        %3277 = vmatmul.bf16.gmra.mxu0 %v3165
        %v3278 = vpop.f32.mrf.mxu0
        %v3279 = vadd.f32 0.0, %v3278
        %v3280 = vpop.f32.mrf.mxu0
        %v3281 = vadd.f32 0.0, %v3280
        %3282 = vmatmul.bf16.gmra.mxu0 %v3166
        %v3283 = vpop.f32.mrf.mxu0
        %v3284 = vadd.f32 0.0, %v3283
        %v3285 = vpop.f32.mrf.mxu0
        %v3286 = vadd.f32 0.0, %v3285
        %3287 = vmatmul.bf16.gmra.mxu0 %v3167
        %v3288 = vpop.f32.mrf.mxu0
        %v3289 = vadd.f32 0.0, %v3288
        %v3290 = vpop.f32.mrf.mxu0
        %v3291 = vadd.f32 0.0, %v3290
        %3292 = vmatmul.bf16.gmra.mxu0 %v3168
        %v3293 = vpop.f32.mrf.mxu0
        %v3294 = vadd.f32 0.0, %v3293
        %v3295 = vpop.f32.mrf.mxu0
        %v3296 = vadd.f32 0.0, %v3295
        %3297 = vmatmul.bf16.gmra.mxu0 %v3169
        %v3298 = vpop.f32.mrf.mxu0
        %v3299 = vadd.f32 0.0, %v3298
        %v3300 = vpop.f32.mrf.mxu0
        %v3301 = vadd.f32 0.0, %v3300
        %3302 = vmatmul.bf16.gmra.mxu0 %v3170
        %v3303 = vpop.f32.mrf.mxu0
        %v3304 = vadd.f32 0.0, %v3303
        %v3305 = vpop.f32.mrf.mxu0
        %v3306 = vadd.f32 0.0, %v3305
        %3307 = vmatmul.bf16.gmra.mxu0 %v3171
        %v3308 = vpop.f32.mrf.mxu0
        %v3309 = vadd.f32 0.0, %v3308
        %v3310 = vpop.f32.mrf.mxu0
        %v3311 = vadd.f32 0.0, %v3310
        %3312 = vmatmul.bf16.gmra.mxu0 %v3172
        %v3313 = vpop.f32.mrf.mxu0
        %v3314 = vadd.f32 0.0, %v3313
        %v3315 = vpop.f32.mrf.mxu0
        %v3316 = vadd.f32 0.0, %v3315
        %3317 = vmatmul.bf16.gmra.mxu0 %v3173
        %v3318 = vpop.f32.mrf.mxu0
        %v3319 = vadd.f32 0.0, %v3318
        %v3320 = vpop.f32.mrf.mxu0
        %v3321 = vadd.f32 0.0, %v3320
        %3322 = vmatmul.bf16.gmra.mxu0 %v3174
        %v3323 = vpop.f32.mrf.mxu0
        %v3324 = vadd.f32 0.0, %v3323
        %v3325 = vpop.f32.mrf.mxu0
        %v3326 = vadd.f32 0.0, %v3325
        %3327 = vdwg.mxu0
        %v3328 = vadd.f32 %v3095, %v3249
        %v3329 = vadd.f32 %v3096, %v3251
        %v3330 = vadd.f32 %v3097, %v3254
        %v3331 = vadd.f32 %v3098, %v3256
        %v3332 = vadd.f32 %v3099, %v3259
        %v3333 = vadd.f32 %v3100, %v3261
        %v3334 = vadd.f32 %v3101, %v3264
        %v3335 = vadd.f32 %v3102, %v3266
        %v3336 = vadd.f32 %v3103, %v3269
        %v3337 = vadd.f32 %v3104, %v3271
        %v3338 = vadd.f32 %v3105, %v3274
        %v3339 = vadd.f32 %v3106, %v3276
        %v3340 = vadd.f32 %v3107, %v3279
        %v3341 = vadd.f32 %v3108, %v3281
        %v3342 = vadd.f32 %v3109, %v3284
        %v3343 = vadd.f32 %v3110, %v3286
        %v3344 = vadd.f32 %v3111, %v3289
        %v3345 = vadd.f32 %v3112, %v3291
        %v3346 = vadd.f32 %v3113, %v3294
        %v3347 = vadd.f32 %v3114, %v3296
        %v3348 = vadd.f32 %v3115, %v3299
        %v3349 = vadd.f32 %v3116, %v3301
        %v3350 = vadd.f32 %v3117, %v3304
        %v3351 = vadd.f32 %v3118, %v3306
        %v3352 = vadd.f32 %v3119, %v3309
        %v3353 = vadd.f32 %v3120, %v3311
        %v3354 = vadd.f32 %v3121, %v3314
        %v3355 = vadd.f32 %v3122, %v3316
        %v3356 = vadd.f32 %v3123, %v3319
        %v3357 = vadd.f32 %v3124, %v3321
        %v3358 = vadd.f32 %v3125, %v3324
        %v3359 = vadd.f32 %v3126, %v3326
        %v3360 = vld [vmem:[%s2459 + $0x1] sm:$0xff]
        %v3361 = vld [vmem:[%s2459 + $0x9] sm:$0xff]
        %v3362 = vld [vmem:[%s2459 + $0x19] sm:$0xff]
        %v3363 = vld [vmem:[%s2459 + $0x21] sm:$0xff]
        %v3364 = vld [vmem:[%s2459 + $0x31] sm:$0xff]
        %v3365 = vld [vmem:[%s2459 + $0x39] sm:$0xff]
        %v3366 = vld [vmem:[%s2459 + $0x49] sm:$0xff]
        %v3367 = vld [vmem:[%s2459 + $0x51] sm:$0xff]
        %v3368 = vld [vmem:[%s2459 + $0x61] sm:$0xff]
        %v3369 = vld [vmem:[%s2459 + $0x69] sm:$0xff]
        %v3370 = vld [vmem:[%s2459 + $0x79] sm:$0xff]
        %v3371 = vld [vmem:[%s2459 + $0x81] sm:$0xff]
        %v3372 = vld [vmem:[%s2459 + $0x91] sm:$0xff]
        %v3373 = vld [vmem:[%s2459 + $0x99] sm:$0xff]
        %v3374 = vld [vmem:[%s2459 + $0xa9] sm:$0xff]
        %v3375 = vld [vmem:[%s2459 + $0xb1] sm:$0xff]
        %v3376 = vld [vmem:[%s2459 + $0xc1] sm:$0xff]
        %v3377 = vld [vmem:[%s2459 + $0xc9] sm:$0xff]
        %v3378 = vld [vmem:[%s2459 + $0xd9] sm:$0xff]
        %v3379 = vld [vmem:[%s2459 + $0xe1] sm:$0xff]
        %v3380 = vld [vmem:[%s2459 + $0xf1] sm:$0xff]
        %v3381 = vld [vmem:[%s2459 + $0xf9] sm:$0xff]
        %v3382 = vld [vmem:[%s2459 + $0x109] sm:$0xff]
        %v3383 = vld [vmem:[%s2459 + $0x111] sm:$0xff]
        %v3384 = vld [vmem:[%s2459 + $0x121] sm:$0xff]
        %v3385 = vld [vmem:[%s2459 + $0x129] sm:$0xff]
        %v3386 = vld [vmem:[%s2459 + $0x139] sm:$0xff]
        %v3387 = vld [vmem:[%s2459 + $0x141] sm:$0xff]
        %v3388 = vld [vmem:[%s2459 + $0x151] sm:$0xff]
        %v3389 = vld [vmem:[%s2459 + $0x159] sm:$0xff]
        %v3390 = vld [vmem:[%s2459 + $0x169] sm:$0xff]
        %v3391 = vld [vmem:[%s2459 + $0x171] sm:$0xff]
        %v3392 = vpack.c.bf16 %v3361, %v3360
        %v3393 = vpack.c.bf16 %v3363, %v3362
        %v3394 = vpack.c.bf16 %v3365, %v3364
        %v3395 = vpack.c.bf16 %v3367, %v3366
        %v3396 = vpack.c.bf16 %v3369, %v3368
        %v3397 = vpack.c.bf16 %v3371, %v3370
        %v3398 = vpack.c.bf16 %v3373, %v3372
        %v3399 = vpack.c.bf16 %v3375, %v3374
        %v3400 = vpack.c.bf16 %v3377, %v3376
        %v3401 = vpack.c.bf16 %v3379, %v3378
        %v3402 = vpack.c.bf16 %v3381, %v3380
        %v3403 = vpack.c.bf16 %v3383, %v3382
        %v3404 = vpack.c.bf16 %v3385, %v3384
        %v3405 = vpack.c.bf16 %v3387, %v3386
        %v3406 = vpack.c.bf16 %v3389, %v3388
        %v3407 = vpack.c.bf16 %v3391, %v3390
        %v3408 = vld [vmem:[#allocation4 + $0x100] sm:$0xf]
        %v3409 = vld [vmem:[#allocation4 + $0x104] sm:$0xf]
        %v3410 = vld [vmem:[#allocation4 + $0x108] sm:$0xf]
        %v3411 = vld [vmem:[#allocation4 + $0x10c] sm:$0xf]
        %v3412 = vld [vmem:[#allocation4 + $0x110] sm:$0xf]
        %v3413 = vld [vmem:[#allocation4 + $0x114] sm:$0xf]
        %v3414 = vld [vmem:[#allocation4 + $0x118] sm:$0xf]
        %v3415 = vld [vmem:[#allocation4 + $0x11c] sm:$0xf]
        %v3416 = vld [vmem:[#allocation4 + $0x120] sm:$0xf]
        %v3417 = vld [vmem:[#allocation4 + $0x124] sm:$0xf]
        %v3418 = vld [vmem:[#allocation4 + $0x128] sm:$0xf]
        %v3419 = vld [vmem:[#allocation4 + $0x12c] sm:$0xf]
        %v3420 = vld [vmem:[#allocation4 + $0x130] sm:$0xf]
        %v3421 = vld [vmem:[#allocation4 + $0x134] sm:$0xf]
        %v3422 = vld [vmem:[#allocation4 + $0x138] sm:$0xf]
        %v3423 = vld [vmem:[#allocation4 + $0x13c] sm:$0xf]
        %v3440 = vunpack.c.l.b16 %v3408
        %v3441 = vunpack.c.l.b16 %v3409
        %v3442 = vunpack.c.l.b16 %v3410
        %v3443 = vunpack.c.l.b16 %v3411
        %v3444 = vunpack.c.l.b16 %v3412
        %v3445 = vunpack.c.l.b16 %v3413
        %v3446 = vunpack.c.l.b16 %v3414
        %v3447 = vunpack.c.l.b16 %v3415
        %v3448 = vunpack.c.l.b16 %v3416
        %v3449 = vunpack.c.l.b16 %v3417
        %v3450 = vunpack.c.l.b16 %v3418
        %v3451 = vunpack.c.l.b16 %v3419
        %v3452 = vunpack.c.l.b16 %v3420
        %v3453 = vunpack.c.l.b16 %v3421
        %v3454 = vunpack.c.l.b16 %v3422
        %v3455 = vunpack.c.l.b16 %v3423
        %v3456 = vpack.c.b16 %v3441, %v3440
        %v3457 = vpack.c.b16 %v3443, %v3442
        %v3458 = vpack.c.b16 %v3445, %v3444
        %v3459 = vpack.c.b16 %v3447, %v3446
        %v3460 = vpack.c.b16 %v3449, %v3448
        %v3461 = vpack.c.b16 %v3451, %v3450
        %v3462 = vpack.c.b16 %v3453, %v3452
        %v3463 = vpack.c.b16 %v3455, %v3454
        %3472 = vmatpush.bf16.msra.mxu0 %v3463
        %3473 = vmatpush.bf16.msra.mxu0 %v3462
        %3474 = vmatpush.bf16.msra.mxu0 %v3461
        %3475 = vmatpush.bf16.msra.mxu0 %v3460
        %3476 = vmatpush.bf16.msra.mxu0 %v3459
        %3477 = vmatpush.bf16.msra.mxu0 %v3458
        %3478 = vmatpush.bf16.msra.mxu0 %v3457
        %3479 = vmatpush.bf16.msra.mxu0 %v3456
        %3480 = vmatmul.bf16.gmra.mxu0 %v3392
        %v3481 = vpop.f32.mrf.mxu0
        %v3482 = vadd.f32 0.0, %v3481
        %v3483 = vpop.f32.mrf.mxu0
        %v3484 = vadd.f32 0.0, %v3483
        %3485 = vmatmul.bf16.gmra.mxu0 %v3393
        %v3486 = vpop.f32.mrf.mxu0
        %v3487 = vadd.f32 0.0, %v3486
        %v3488 = vpop.f32.mrf.mxu0
        %v3489 = vadd.f32 0.0, %v3488
        %3490 = vmatmul.bf16.gmra.mxu0 %v3394
        %v3491 = vpop.f32.mrf.mxu0
        %v3492 = vadd.f32 0.0, %v3491
        %v3493 = vpop.f32.mrf.mxu0
        %v3494 = vadd.f32 0.0, %v3493
        %3495 = vmatmul.bf16.gmra.mxu0 %v3395
        %v3496 = vpop.f32.mrf.mxu0
        %v3497 = vadd.f32 0.0, %v3496
        %v3498 = vpop.f32.mrf.mxu0
        %v3499 = vadd.f32 0.0, %v3498
        %3500 = vmatmul.bf16.gmra.mxu0 %v3396
        %v3501 = vpop.f32.mrf.mxu0
        %v3502 = vadd.f32 0.0, %v3501
        %v3503 = vpop.f32.mrf.mxu0
        %v3504 = vadd.f32 0.0, %v3503
        %3505 = vmatmul.bf16.gmra.mxu0 %v3397
        %v3506 = vpop.f32.mrf.mxu0
        %v3507 = vadd.f32 0.0, %v3506
        %v3508 = vpop.f32.mrf.mxu0
        %v3509 = vadd.f32 0.0, %v3508
        %3510 = vmatmul.bf16.gmra.mxu0 %v3398
        %v3511 = vpop.f32.mrf.mxu0
        %v3512 = vadd.f32 0.0, %v3511
        %v3513 = vpop.f32.mrf.mxu0
        %v3514 = vadd.f32 0.0, %v3513
        %3515 = vmatmul.bf16.gmra.mxu0 %v3399
        %v3516 = vpop.f32.mrf.mxu0
        %v3517 = vadd.f32 0.0, %v3516
        %v3518 = vpop.f32.mrf.mxu0
        %v3519 = vadd.f32 0.0, %v3518
        %3520 = vmatmul.bf16.gmra.mxu0 %v3400
        %v3521 = vpop.f32.mrf.mxu0
        %v3522 = vadd.f32 0.0, %v3521
        %v3523 = vpop.f32.mrf.mxu0
        %v3524 = vadd.f32 0.0, %v3523
        %3525 = vmatmul.bf16.gmra.mxu0 %v3401
        %v3526 = vpop.f32.mrf.mxu0
        %v3527 = vadd.f32 0.0, %v3526
        %v3528 = vpop.f32.mrf.mxu0
        %v3529 = vadd.f32 0.0, %v3528
        %3530 = vmatmul.bf16.gmra.mxu0 %v3402
        %v3531 = vpop.f32.mrf.mxu0
        %v3532 = vadd.f32 0.0, %v3531
        %v3533 = vpop.f32.mrf.mxu0
        %v3534 = vadd.f32 0.0, %v3533
        %3535 = vmatmul.bf16.gmra.mxu0 %v3403
        %v3536 = vpop.f32.mrf.mxu0
        %v3537 = vadd.f32 0.0, %v3536
        %v3538 = vpop.f32.mrf.mxu0
        %v3539 = vadd.f32 0.0, %v3538
        %3540 = vmatmul.bf16.gmra.mxu0 %v3404
        %v3541 = vpop.f32.mrf.mxu0
        %v3542 = vadd.f32 0.0, %v3541
        %v3543 = vpop.f32.mrf.mxu0
        %v3544 = vadd.f32 0.0, %v3543
        %3545 = vmatmul.bf16.gmra.mxu0 %v3405
        %v3546 = vpop.f32.mrf.mxu0
        %v3547 = vadd.f32 0.0, %v3546
        %v3548 = vpop.f32.mrf.mxu0
        %v3549 = vadd.f32 0.0, %v3548
        %3550 = vmatmul.bf16.gmra.mxu0 %v3406
        %v3551 = vpop.f32.mrf.mxu0
        %v3552 = vadd.f32 0.0, %v3551
        %v3553 = vpop.f32.mrf.mxu0
        %v3554 = vadd.f32 0.0, %v3553
        %3555 = vmatmul.bf16.gmra.mxu0 %v3407
        %v3556 = vpop.f32.mrf.mxu0
        %v3557 = vadd.f32 0.0, %v3556
        %v3558 = vpop.f32.mrf.mxu0
        %v3559 = vadd.f32 0.0, %v3558
        %3560 = vdwg.mxu0
        %v3561 = vadd.f32 %v3328, %v3482
        %v3562 = vadd.f32 %v3329, %v3484
        %v3563 = vadd.f32 %v3330, %v3487
        %v3564 = vadd.f32 %v3331, %v3489
        %v3565 = vadd.f32 %v3332, %v3492
        %v3566 = vadd.f32 %v3333, %v3494
        %v3567 = vadd.f32 %v3334, %v3497
        %v3568 = vadd.f32 %v3335, %v3499
        %v3569 = vadd.f32 %v3336, %v3502
        %v3570 = vadd.f32 %v3337, %v3504
        %v3571 = vadd.f32 %v3338, %v3507
        %v3572 = vadd.f32 %v3339, %v3509
        %v3573 = vadd.f32 %v3340, %v3512
        %v3574 = vadd.f32 %v3341, %v3514
        %v3575 = vadd.f32 %v3342, %v3517
        %v3576 = vadd.f32 %v3343, %v3519
        %v3577 = vadd.f32 %v3344, %v3522
        %v3578 = vadd.f32 %v3345, %v3524
        %v3579 = vadd.f32 %v3346, %v3527
        %v3580 = vadd.f32 %v3347, %v3529
        %v3581 = vadd.f32 %v3348, %v3532
        %v3582 = vadd.f32 %v3349, %v3534
        %v3583 = vadd.f32 %v3350, %v3537
        %v3584 = vadd.f32 %v3351, %v3539
        %v3585 = vadd.f32 %v3352, %v3542
        %v3586 = vadd.f32 %v3353, %v3544
        %v3587 = vadd.f32 %v3354, %v3547
        %v3588 = vadd.f32 %v3355, %v3549
        %v3589 = vadd.f32 %v3356, %v3552
        %v3590 = vadd.f32 %v3357, %v3554
        %v3591 = vadd.f32 %v3358, %v3557
        %v3592 = vadd.f32 %v3359, %v3559
        %v3593 = vld [vmem:[%s2459 + $0x2] sm:$0xff]
        %v3594 = vld [vmem:[%s2459 + $0xa] sm:$0xff]
        %v3595 = vld [vmem:[%s2459 + $0x1a] sm:$0xff]
        %v3596 = vld [vmem:[%s2459 + $0x22] sm:$0xff]
        %v3597 = vld [vmem:[%s2459 + $0x32] sm:$0xff]
        %v3598 = vld [vmem:[%s2459 + $0x3a] sm:$0xff]
        %v3599 = vld [vmem:[%s2459 + $0x4a] sm:$0xff]
        %v3600 = vld [vmem:[%s2459 + $0x52] sm:$0xff]
        %v3601 = vld [vmem:[%s2459 + $0x62] sm:$0xff]
        %v3602 = vld [vmem:[%s2459 + $0x6a] sm:$0xff]
        %v3603 = vld [vmem:[%s2459 + $0x7a] sm:$0xff]
        %v3604 = vld [vmem:[%s2459 + $0x82] sm:$0xff]
        %v3605 = vld [vmem:[%s2459 + $0x92] sm:$0xff]
        %v3606 = vld [vmem:[%s2459 + $0x9a] sm:$0xff]
        %v3607 = vld [vmem:[%s2459 + $0xaa] sm:$0xff]
        %v3608 = vld [vmem:[%s2459 + $0xb2] sm:$0xff]
        %v3609 = vld [vmem:[%s2459 + $0xc2] sm:$0xff]
        %v3610 = vld [vmem:[%s2459 + $0xca] sm:$0xff]
        %v3611 = vld [vmem:[%s2459 + $0xda] sm:$0xff]
        %v3612 = vld [vmem:[%s2459 + $0xe2] sm:$0xff]
        %v3613 = vld [vmem:[%s2459 + $0xf2] sm:$0xff]
        %v3614 = vld [vmem:[%s2459 + $0xfa] sm:$0xff]
        %v3615 = vld [vmem:[%s2459 + $0x10a] sm:$0xff]
        %v3616 = vld [vmem:[%s2459 + $0x112] sm:$0xff]
        %v3617 = vld [vmem:[%s2459 + $0x122] sm:$0xff]
        %v3618 = vld [vmem:[%s2459 + $0x12a] sm:$0xff]
        %v3619 = vld [vmem:[%s2459 + $0x13a] sm:$0xff]
        %v3620 = vld [vmem:[%s2459 + $0x142] sm:$0xff]
        %v3621 = vld [vmem:[%s2459 + $0x152] sm:$0xff]
        %v3622 = vld [vmem:[%s2459 + $0x15a] sm:$0xff]
        %v3623 = vld [vmem:[%s2459 + $0x16a] sm:$0xff]
        %v3624 = vld [vmem:[%s2459 + $0x172] sm:$0xff]
        %v3625 = vpack.c.bf16 %v3594, %v3593
        %v3626 = vpack.c.bf16 %v3596, %v3595
        %v3627 = vpack.c.bf16 %v3598, %v3597
        %v3628 = vpack.c.bf16 %v3600, %v3599
        %v3629 = vpack.c.bf16 %v3602, %v3601
        %v3630 = vpack.c.bf16 %v3604, %v3603
        %v3631 = vpack.c.bf16 %v3606, %v3605
        %v3632 = vpack.c.bf16 %v3608, %v3607
        %v3633 = vpack.c.bf16 %v3610, %v3609
        %v3634 = vpack.c.bf16 %v3612, %v3611
        %v3635 = vpack.c.bf16 %v3614, %v3613
        %v3636 = vpack.c.bf16 %v3616, %v3615
        %v3637 = vpack.c.bf16 %v3618, %v3617
        %v3638 = vpack.c.bf16 %v3620, %v3619
        %v3639 = vpack.c.bf16 %v3622, %v3621
        %v3640 = vpack.c.bf16 %v3624, %v3623
        %v3641 = vld [vmem:[#allocation4 + $0x140] sm:$0xf]
        %v3642 = vld [vmem:[#allocation4 + $0x144] sm:$0xf]
        %v3643 = vld [vmem:[#allocation4 + $0x148] sm:$0xf]
        %v3644 = vld [vmem:[#allocation4 + $0x14c] sm:$0xf]
        %v3645 = vld [vmem:[#allocation4 + $0x150] sm:$0xf]
        %v3646 = vld [vmem:[#allocation4 + $0x154] sm:$0xf]
        %v3647 = vld [vmem:[#allocation4 + $0x158] sm:$0xf]
        %v3648 = vld [vmem:[#allocation4 + $0x15c] sm:$0xf]
        %v3649 = vld [vmem:[#allocation4 + $0x160] sm:$0xf]
        %v3650 = vld [vmem:[#allocation4 + $0x164] sm:$0xf]
        %v3651 = vld [vmem:[#allocation4 + $0x168] sm:$0xf]
        %v3652 = vld [vmem:[#allocation4 + $0x16c] sm:$0xf]
        %v3653 = vld [vmem:[#allocation4 + $0x170] sm:$0xf]
        %v3654 = vld [vmem:[#allocation4 + $0x174] sm:$0xf]
        %v3655 = vld [vmem:[#allocation4 + $0x178] sm:$0xf]
        %v3656 = vld [vmem:[#allocation4 + $0x17c] sm:$0xf]
        %v3673 = vunpack.c.l.b16 %v3641
        %v3674 = vunpack.c.l.b16 %v3642
        %v3675 = vunpack.c.l.b16 %v3643
        %v3676 = vunpack.c.l.b16 %v3644
        %v3677 = vunpack.c.l.b16 %v3645
        %v3678 = vunpack.c.l.b16 %v3646
        %v3679 = vunpack.c.l.b16 %v3647
        %v3680 = vunpack.c.l.b16 %v3648
        %v3681 = vunpack.c.l.b16 %v3649
        %v3682 = vunpack.c.l.b16 %v3650
        %v3683 = vunpack.c.l.b16 %v3651
        %v3684 = vunpack.c.l.b16 %v3652
        %v3685 = vunpack.c.l.b16 %v3653
        %v3686 = vunpack.c.l.b16 %v3654
        %v3687 = vunpack.c.l.b16 %v3655
        %v3688 = vunpack.c.l.b16 %v3656
        %v3689 = vpack.c.b16 %v3674, %v3673
        %v3690 = vpack.c.b16 %v3676, %v3675
        %v3691 = vpack.c.b16 %v3678, %v3677
        %v3692 = vpack.c.b16 %v3680, %v3679
        %v3693 = vpack.c.b16 %v3682, %v3681
        %v3694 = vpack.c.b16 %v3684, %v3683
        %v3695 = vpack.c.b16 %v3686, %v3685
        %v3696 = vpack.c.b16 %v3688, %v3687
        %3705 = vmatpush.bf16.msra.mxu0 %v3696
        %3706 = vmatpush.bf16.msra.mxu0 %v3695
        %3707 = vmatpush.bf16.msra.mxu0 %v3694
        %3708 = vmatpush.bf16.msra.mxu0 %v3693
        %3709 = vmatpush.bf16.msra.mxu0 %v3692
        %3710 = vmatpush.bf16.msra.mxu0 %v3691
        %3711 = vmatpush.bf16.msra.mxu0 %v3690
        %3712 = vmatpush.bf16.msra.mxu0 %v3689
        %3713 = vmatmul.bf16.gmra.mxu0 %v3625
        %v3714 = vpop.f32.mrf.mxu0
        %v3715 = vadd.f32 0.0, %v3714
        %v3716 = vpop.f32.mrf.mxu0
        %v3717 = vadd.f32 0.0, %v3716
        %3718 = vmatmul.bf16.gmra.mxu0 %v3626
        %v3719 = vpop.f32.mrf.mxu0
        %v3720 = vadd.f32 0.0, %v3719
        %v3721 = vpop.f32.mrf.mxu0
        %v3722 = vadd.f32 0.0, %v3721
        %3723 = vmatmul.bf16.gmra.mxu0 %v3627
        %v3724 = vpop.f32.mrf.mxu0
        %v3725 = vadd.f32 0.0, %v3724
        %v3726 = vpop.f32.mrf.mxu0
        %v3727 = vadd.f32 0.0, %v3726
        %3728 = vmatmul.bf16.gmra.mxu0 %v3628
        %v3729 = vpop.f32.mrf.mxu0
        %v3730 = vadd.f32 0.0, %v3729
        %v3731 = vpop.f32.mrf.mxu0
        %v3732 = vadd.f32 0.0, %v3731
        %3733 = vmatmul.bf16.gmra.mxu0 %v3629
        %v3734 = vpop.f32.mrf.mxu0
        %v3735 = vadd.f32 0.0, %v3734
        %v3736 = vpop.f32.mrf.mxu0
        %v3737 = vadd.f32 0.0, %v3736
        %3738 = vmatmul.bf16.gmra.mxu0 %v3630
        %v3739 = vpop.f32.mrf.mxu0
        %v3740 = vadd.f32 0.0, %v3739
        %v3741 = vpop.f32.mrf.mxu0
        %v3742 = vadd.f32 0.0, %v3741
        %3743 = vmatmul.bf16.gmra.mxu0 %v3631
        %v3744 = vpop.f32.mrf.mxu0
        %v3745 = vadd.f32 0.0, %v3744
        %v3746 = vpop.f32.mrf.mxu0
        %v3747 = vadd.f32 0.0, %v3746
        %3748 = vmatmul.bf16.gmra.mxu0 %v3632
        %v3749 = vpop.f32.mrf.mxu0
        %v3750 = vadd.f32 0.0, %v3749
        %v3751 = vpop.f32.mrf.mxu0
        %v3752 = vadd.f32 0.0, %v3751
        %3753 = vmatmul.bf16.gmra.mxu0 %v3633
        %v3754 = vpop.f32.mrf.mxu0
        %v3755 = vadd.f32 0.0, %v3754
        %v3756 = vpop.f32.mrf.mxu0
        %v3757 = vadd.f32 0.0, %v3756
        %3758 = vmatmul.bf16.gmra.mxu0 %v3634
        %v3759 = vpop.f32.mrf.mxu0
        %v3760 = vadd.f32 0.0, %v3759
        %v3761 = vpop.f32.mrf.mxu0
        %v3762 = vadd.f32 0.0, %v3761
        %3763 = vmatmul.bf16.gmra.mxu0 %v3635
        %v3764 = vpop.f32.mrf.mxu0
        %v3765 = vadd.f32 0.0, %v3764
        %v3766 = vpop.f32.mrf.mxu0
        %v3767 = vadd.f32 0.0, %v3766
        %3768 = vmatmul.bf16.gmra.mxu0 %v3636
        %v3769 = vpop.f32.mrf.mxu0
        %v3770 = vadd.f32 0.0, %v3769
        %v3771 = vpop.f32.mrf.mxu0
        %v3772 = vadd.f32 0.0, %v3771
        %3773 = vmatmul.bf16.gmra.mxu0 %v3637
        %v3774 = vpop.f32.mrf.mxu0
        %v3775 = vadd.f32 0.0, %v3774
        %v3776 = vpop.f32.mrf.mxu0
        %v3777 = vadd.f32 0.0, %v3776
        %3778 = vmatmul.bf16.gmra.mxu0 %v3638
        %v3779 = vpop.f32.mrf.mxu0
        %v3780 = vadd.f32 0.0, %v3779
        %v3781 = vpop.f32.mrf.mxu0
        %v3782 = vadd.f32 0.0, %v3781
        %3783 = vmatmul.bf16.gmra.mxu0 %v3639
        %v3784 = vpop.f32.mrf.mxu0
        %v3785 = vadd.f32 0.0, %v3784
        %v3786 = vpop.f32.mrf.mxu0
        %v3787 = vadd.f32 0.0, %v3786
        %3788 = vmatmul.bf16.gmra.mxu0 %v3640
        %v3789 = vpop.f32.mrf.mxu0
        %v3790 = vadd.f32 0.0, %v3789
        %v3791 = vpop.f32.mrf.mxu0
        %v3792 = vadd.f32 0.0, %v3791
        %3793 = vdwg.mxu0
        %v3794 = vadd.f32 %v3561, %v3715
        %v3795 = vadd.f32 %v3562, %v3717
        %v3796 = vadd.f32 %v3563, %v3720
        %v3797 = vadd.f32 %v3564, %v3722
        %v3798 = vadd.f32 %v3565, %v3725
        %v3799 = vadd.f32 %v3566, %v3727
        %v3800 = vadd.f32 %v3567, %v3730
        %v3801 = vadd.f32 %v3568, %v3732
        %v3802 = vadd.f32 %v3569, %v3735
        %v3803 = vadd.f32 %v3570, %v3737
        %v3804 = vadd.f32 %v3571, %v3740
        %v3805 = vadd.f32 %v3572, %v3742
        %v3806 = vadd.f32 %v3573, %v3745
        %v3807 = vadd.f32 %v3574, %v3747
        %v3808 = vadd.f32 %v3575, %v3750
        %v3809 = vadd.f32 %v3576, %v3752
        %v3810 = vadd.f32 %v3577, %v3755
        %v3811 = vadd.f32 %v3578, %v3757
        %v3812 = vadd.f32 %v3579, %v3760
        %v3813 = vadd.f32 %v3580, %v3762
        %v3814 = vadd.f32 %v3581, %v3765
        %v3815 = vadd.f32 %v3582, %v3767
        %v3816 = vadd.f32 %v3583, %v3770
        %v3817 = vadd.f32 %v3584, %v3772
        %v3818 = vadd.f32 %v3585, %v3775
        %v3819 = vadd.f32 %v3586, %v3777
        %v3820 = vadd.f32 %v3587, %v3780
        %v3821 = vadd.f32 %v3588, %v3782
        %v3822 = vadd.f32 %v3589, %v3785
        %v3823 = vadd.f32 %v3590, %v3787
        %v3824 = vadd.f32 %v3591, %v3790
        %v3825 = vadd.f32 %v3592, %v3792
        %s3826 = scalar_lea.vmem [#allocation3], 48
        %v3827 = vld [vmem:[%s3826] sm:$0xff]
        %v3828 = vld [vmem:[%s3826 + $0x8] sm:$0xff]
        %v3829 = vld [vmem:[%s3826 + $0x18] sm:$0xff]
        %v3830 = vld [vmem:[%s3826 + $0x20] sm:$0xff]
        %v3831 = vld [vmem:[%s3826 + $0x30] sm:$0xff]
        %v3832 = vld [vmem:[%s3826 + $0x38] sm:$0xff]
        %v3833 = vld [vmem:[%s3826 + $0x48] sm:$0xff]
        %v3834 = vld [vmem:[%s3826 + $0x50] sm:$0xff]
        %v3835 = vld [vmem:[%s3826 + $0x60] sm:$0xff]
        %v3836 = vld [vmem:[%s3826 + $0x68] sm:$0xff]
        %v3837 = vld [vmem:[%s3826 + $0x78] sm:$0xff]
        %v3838 = vld [vmem:[%s3826 + $0x80] sm:$0xff]
        %v3839 = vld [vmem:[%s3826 + $0x90] sm:$0xff]
        %v3840 = vld [vmem:[%s3826 + $0x98] sm:$0xff]
        %v3841 = vld [vmem:[%s3826 + $0xa8] sm:$0xff]
        %v3842 = vld [vmem:[%s3826 + $0xb0] sm:$0xff]
        %v3843 = vld [vmem:[%s3826 + $0xc0] sm:$0xff]
        %v3844 = vld [vmem:[%s3826 + $0xc8] sm:$0xff]
        %v3845 = vld [vmem:[%s3826 + $0xd8] sm:$0xff]
        %v3846 = vld [vmem:[%s3826 + $0xe0] sm:$0xff]
        %v3847 = vld [vmem:[%s3826 + $0xf0] sm:$0xff]
        %v3848 = vld [vmem:[%s3826 + $0xf8] sm:$0xff]
        %v3849 = vld [vmem:[%s3826 + $0x108] sm:$0xff]
        %v3850 = vld [vmem:[%s3826 + $0x110] sm:$0xff]
        %v3851 = vld [vmem:[%s3826 + $0x120] sm:$0xff]
        %v3852 = vld [vmem:[%s3826 + $0x128] sm:$0xff]
        %v3853 = vld [vmem:[%s3826 + $0x138] sm:$0xff]
        %v3854 = vld [vmem:[%s3826 + $0x140] sm:$0xff]
        %v3855 = vld [vmem:[%s3826 + $0x150] sm:$0xff]
        %v3856 = vld [vmem:[%s3826 + $0x158] sm:$0xff]
        %v3857 = vld [vmem:[%s3826 + $0x168] sm:$0xff]
        %v3858 = vld [vmem:[%s3826 + $0x170] sm:$0xff]
        %v3859 = vpack.c.bf16 %v3828, %v3827
        %v3860 = vpack.c.bf16 %v3830, %v3829
        %v3861 = vpack.c.bf16 %v3832, %v3831
        %v3862 = vpack.c.bf16 %v3834, %v3833
        %v3863 = vpack.c.bf16 %v3836, %v3835
        %v3864 = vpack.c.bf16 %v3838, %v3837
        %v3865 = vpack.c.bf16 %v3840, %v3839
        %v3866 = vpack.c.bf16 %v3842, %v3841
        %v3867 = vpack.c.bf16 %v3844, %v3843
        %v3868 = vpack.c.bf16 %v3846, %v3845
        %v3869 = vpack.c.bf16 %v3848, %v3847
        %v3870 = vpack.c.bf16 %v3850, %v3849
        %v3871 = vpack.c.bf16 %v3852, %v3851
        %v3872 = vpack.c.bf16 %v3854, %v3853
        %v3873 = vpack.c.bf16 %v3856, %v3855
        %v3874 = vpack.c.bf16 %v3858, %v3857
        %v3875 = vld [vmem:[#allocation4 + $0x180] sm:$0xf]
        %v3876 = vld [vmem:[#allocation4 + $0x184] sm:$0xf]
        %v3877 = vld [vmem:[#allocation4 + $0x188] sm:$0xf]
        %v3878 = vld [vmem:[#allocation4 + $0x18c] sm:$0xf]
        %v3879 = vld [vmem:[#allocation4 + $0x190] sm:$0xf]
        %v3880 = vld [vmem:[#allocation4 + $0x194] sm:$0xf]
        %v3881 = vld [vmem:[#allocation4 + $0x198] sm:$0xf]
        %v3882 = vld [vmem:[#allocation4 + $0x19c] sm:$0xf]
        %v3883 = vld [vmem:[#allocation4 + $0x1a0] sm:$0xf]
        %v3884 = vld [vmem:[#allocation4 + $0x1a4] sm:$0xf]
        %v3885 = vld [vmem:[#allocation4 + $0x1a8] sm:$0xf]
        %v3886 = vld [vmem:[#allocation4 + $0x1ac] sm:$0xf]
        %v3887 = vld [vmem:[#allocation4 + $0x1b0] sm:$0xf]
        %v3888 = vld [vmem:[#allocation4 + $0x1b4] sm:$0xf]
        %v3889 = vld [vmem:[#allocation4 + $0x1b8] sm:$0xf]
        %v3890 = vld [vmem:[#allocation4 + $0x1bc] sm:$0xf]
        %v3907 = vunpack.c.l.b16 %v3875
        %v3908 = vunpack.c.l.b16 %v3876
        %v3909 = vunpack.c.l.b16 %v3877
        %v3910 = vunpack.c.l.b16 %v3878
        %v3911 = vunpack.c.l.b16 %v3879
        %v3912 = vunpack.c.l.b16 %v3880
        %v3913 = vunpack.c.l.b16 %v3881
        %v3914 = vunpack.c.l.b16 %v3882
        %v3915 = vunpack.c.l.b16 %v3883
        %v3916 = vunpack.c.l.b16 %v3884
        %v3917 = vunpack.c.l.b16 %v3885
        %v3918 = vunpack.c.l.b16 %v3886
        %v3919 = vunpack.c.l.b16 %v3887
        %v3920 = vunpack.c.l.b16 %v3888
        %v3921 = vunpack.c.l.b16 %v3889
        %v3922 = vunpack.c.l.b16 %v3890
        %v3923 = vpack.c.b16 %v3908, %v3907
        %v3924 = vpack.c.b16 %v3910, %v3909
        %v3925 = vpack.c.b16 %v3912, %v3911
        %v3926 = vpack.c.b16 %v3914, %v3913
        %v3927 = vpack.c.b16 %v3916, %v3915
        %v3928 = vpack.c.b16 %v3918, %v3917
        %v3929 = vpack.c.b16 %v3920, %v3919
        %v3930 = vpack.c.b16 %v3922, %v3921
        %3939 = vmatpush.bf16.msra.mxu0 %v3930
        %3940 = vmatpush.bf16.msra.mxu0 %v3929
        %3941 = vmatpush.bf16.msra.mxu0 %v3928
        %3942 = vmatpush.bf16.msra.mxu0 %v3927
        %3943 = vmatpush.bf16.msra.mxu0 %v3926
        %3944 = vmatpush.bf16.msra.mxu0 %v3925
        %3945 = vmatpush.bf16.msra.mxu0 %v3924
        %3946 = vmatpush.bf16.msra.mxu0 %v3923
        %3947 = vmatmul.bf16.gmra.mxu0 %v3859
        %v3948 = vpop.f32.mrf.mxu0
        %v3949 = vadd.f32 0.0, %v3948
        %v3950 = vpop.f32.mrf.mxu0
        %v3951 = vadd.f32 0.0, %v3950
        %3952 = vmatmul.bf16.gmra.mxu0 %v3860
        %v3953 = vpop.f32.mrf.mxu0
        %v3954 = vadd.f32 0.0, %v3953
        %v3955 = vpop.f32.mrf.mxu0
        %v3956 = vadd.f32 0.0, %v3955
        %3957 = vmatmul.bf16.gmra.mxu0 %v3861
        %v3958 = vpop.f32.mrf.mxu0
        %v3959 = vadd.f32 0.0, %v3958
        %v3960 = vpop.f32.mrf.mxu0
        %v3961 = vadd.f32 0.0, %v3960
        %3962 = vmatmul.bf16.gmra.mxu0 %v3862
        %v3963 = vpop.f32.mrf.mxu0
        %v3964 = vadd.f32 0.0, %v3963
        %v3965 = vpop.f32.mrf.mxu0
        %v3966 = vadd.f32 0.0, %v3965
        %3967 = vmatmul.bf16.gmra.mxu0 %v3863
        %v3968 = vpop.f32.mrf.mxu0
        %v3969 = vadd.f32 0.0, %v3968
        %v3970 = vpop.f32.mrf.mxu0
        %v3971 = vadd.f32 0.0, %v3970
        %3972 = vmatmul.bf16.gmra.mxu0 %v3864
        %v3973 = vpop.f32.mrf.mxu0
        %v3974 = vadd.f32 0.0, %v3973
        %v3975 = vpop.f32.mrf.mxu0
        %v3976 = vadd.f32 0.0, %v3975
        %3977 = vmatmul.bf16.gmra.mxu0 %v3865
        %v3978 = vpop.f32.mrf.mxu0
        %v3979 = vadd.f32 0.0, %v3978
        %v3980 = vpop.f32.mrf.mxu0
        %v3981 = vadd.f32 0.0, %v3980
        %3982 = vmatmul.bf16.gmra.mxu0 %v3866
        %v3983 = vpop.f32.mrf.mxu0
        %v3984 = vadd.f32 0.0, %v3983
        %v3985 = vpop.f32.mrf.mxu0
        %v3986 = vadd.f32 0.0, %v3985
        %3987 = vmatmul.bf16.gmra.mxu0 %v3867
        %v3988 = vpop.f32.mrf.mxu0
        %v3989 = vadd.f32 0.0, %v3988
        %v3990 = vpop.f32.mrf.mxu0
        %v3991 = vadd.f32 0.0, %v3990
        %3992 = vmatmul.bf16.gmra.mxu0 %v3868
        %v3993 = vpop.f32.mrf.mxu0
        %v3994 = vadd.f32 0.0, %v3993
        %v3995 = vpop.f32.mrf.mxu0
        %v3996 = vadd.f32 0.0, %v3995
        %3997 = vmatmul.bf16.gmra.mxu0 %v3869
        %v3998 = vpop.f32.mrf.mxu0
        %v3999 = vadd.f32 0.0, %v3998
        %v4000 = vpop.f32.mrf.mxu0
        %v4001 = vadd.f32 0.0, %v4000
        %4002 = vmatmul.bf16.gmra.mxu0 %v3870
        %v4003 = vpop.f32.mrf.mxu0
        %v4004 = vadd.f32 0.0, %v4003
        %v4005 = vpop.f32.mrf.mxu0
        %v4006 = vadd.f32 0.0, %v4005
        %4007 = vmatmul.bf16.gmra.mxu0 %v3871
        %v4008 = vpop.f32.mrf.mxu0
        %v4009 = vadd.f32 0.0, %v4008
        %v4010 = vpop.f32.mrf.mxu0
        %v4011 = vadd.f32 0.0, %v4010
        %4012 = vmatmul.bf16.gmra.mxu0 %v3872
        %v4013 = vpop.f32.mrf.mxu0
        %v4014 = vadd.f32 0.0, %v4013
        %v4015 = vpop.f32.mrf.mxu0
        %v4016 = vadd.f32 0.0, %v4015
        %4017 = vmatmul.bf16.gmra.mxu0 %v3873
        %v4018 = vpop.f32.mrf.mxu0
        %v4019 = vadd.f32 0.0, %v4018
        %v4020 = vpop.f32.mrf.mxu0
        %v4021 = vadd.f32 0.0, %v4020
        %4022 = vmatmul.bf16.gmra.mxu0 %v3874
        %v4023 = vpop.f32.mrf.mxu0
        %v4024 = vadd.f32 0.0, %v4023
        %v4025 = vpop.f32.mrf.mxu0
        %v4026 = vadd.f32 0.0, %v4025
        %4027 = vdwg.mxu0
        %v4028 = vadd.f32 %v3794, %v3949
        %v4029 = vadd.f32 %v3795, %v3951
        %v4030 = vadd.f32 %v3796, %v3954
        %v4031 = vadd.f32 %v3797, %v3956
        %v4032 = vadd.f32 %v3798, %v3959
        %v4033 = vadd.f32 %v3799, %v3961
        %v4034 = vadd.f32 %v3800, %v3964
        %v4035 = vadd.f32 %v3801, %v3966
        %v4036 = vadd.f32 %v3802, %v3969
        %v4037 = vadd.f32 %v3803, %v3971
        %v4038 = vadd.f32 %v3804, %v3974
        %v4039 = vadd.f32 %v3805, %v3976
        %v4040 = vadd.f32 %v3806, %v3979
        %v4041 = vadd.f32 %v3807, %v3981
        %v4042 = vadd.f32 %v3808, %v3984
        %v4043 = vadd.f32 %v3809, %v3986
        %v4044 = vadd.f32 %v3810, %v3989
        %v4045 = vadd.f32 %v3811, %v3991
        %v4046 = vadd.f32 %v3812, %v3994
        %v4047 = vadd.f32 %v3813, %v3996
        %v4048 = vadd.f32 %v3814, %v3999
        %v4049 = vadd.f32 %v3815, %v4001
        %v4050 = vadd.f32 %v3816, %v4004
        %v4051 = vadd.f32 %v3817, %v4006
        %v4052 = vadd.f32 %v3818, %v4009
        %v4053 = vadd.f32 %v3819, %v4011
        %v4054 = vadd.f32 %v3820, %v4014
        %v4055 = vadd.f32 %v3821, %v4016
        %v4056 = vadd.f32 %v3822, %v4019
        %v4057 = vadd.f32 %v3823, %v4021
        %v4058 = vadd.f32 %v3824, %v4024
        %v4059 = vadd.f32 %v3825, %v4026
        %v4060 = vld [vmem:[%s3826 + $0x1] sm:$0xff]
        %v4061 = vld [vmem:[%s3826 + $0x9] sm:$0xff]
        %v4062 = vld [vmem:[%s3826 + $0x19] sm:$0xff]
        %v4063 = vld [vmem:[%s3826 + $0x21] sm:$0xff]
        %v4064 = vld [vmem:[%s3826 + $0x31] sm:$0xff]
        %v4065 = vld [vmem:[%s3826 + $0x39] sm:$0xff]
        %v4066 = vld [vmem:[%s3826 + $0x49] sm:$0xff]
        %v4067 = vld [vmem:[%s3826 + $0x51] sm:$0xff]
        %v4068 = vld [vmem:[%s3826 + $0x61] sm:$0xff]
        %v4069 = vld [vmem:[%s3826 + $0x69] sm:$0xff]
        %v4070 = vld [vmem:[%s3826 + $0x79] sm:$0xff]
        %v4071 = vld [vmem:[%s3826 + $0x81] sm:$0xff]
        %v4072 = vld [vmem:[%s3826 + $0x91] sm:$0xff]
        %v4073 = vld [vmem:[%s3826 + $0x99] sm:$0xff]
        %v4074 = vld [vmem:[%s3826 + $0xa9] sm:$0xff]
        %v4075 = vld [vmem:[%s3826 + $0xb1] sm:$0xff]
        %v4076 = vld [vmem:[%s3826 + $0xc1] sm:$0xff]
        %v4077 = vld [vmem:[%s3826 + $0xc9] sm:$0xff]
        %v4078 = vld [vmem:[%s3826 + $0xd9] sm:$0xff]
        %v4079 = vld [vmem:[%s3826 + $0xe1] sm:$0xff]
        %v4080 = vld [vmem:[%s3826 + $0xf1] sm:$0xff]
        %v4081 = vld [vmem:[%s3826 + $0xf9] sm:$0xff]
        %v4082 = vld [vmem:[%s3826 + $0x109] sm:$0xff]
        %v4083 = vld [vmem:[%s3826 + $0x111] sm:$0xff]
        %v4084 = vld [vmem:[%s3826 + $0x121] sm:$0xff]
        %v4085 = vld [vmem:[%s3826 + $0x129] sm:$0xff]
        %v4086 = vld [vmem:[%s3826 + $0x139] sm:$0xff]
        %v4087 = vld [vmem:[%s3826 + $0x141] sm:$0xff]
        %v4088 = vld [vmem:[%s3826 + $0x151] sm:$0xff]
        %v4089 = vld [vmem:[%s3826 + $0x159] sm:$0xff]
        %v4090 = vld [vmem:[%s3826 + $0x169] sm:$0xff]
        %v4091 = vld [vmem:[%s3826 + $0x171] sm:$0xff]
        %v4092 = vpack.c.bf16 %v4061, %v4060
        %v4093 = vpack.c.bf16 %v4063, %v4062
        %v4094 = vpack.c.bf16 %v4065, %v4064
        %v4095 = vpack.c.bf16 %v4067, %v4066
        %v4096 = vpack.c.bf16 %v4069, %v4068
        %v4097 = vpack.c.bf16 %v4071, %v4070
        %v4098 = vpack.c.bf16 %v4073, %v4072
        %v4099 = vpack.c.bf16 %v4075, %v4074
        %v4100 = vpack.c.bf16 %v4077, %v4076
        %v4101 = vpack.c.bf16 %v4079, %v4078
        %v4102 = vpack.c.bf16 %v4081, %v4080
        %v4103 = vpack.c.bf16 %v4083, %v4082
        %v4104 = vpack.c.bf16 %v4085, %v4084
        %v4105 = vpack.c.bf16 %v4087, %v4086
        %v4106 = vpack.c.bf16 %v4089, %v4088
        %v4107 = vpack.c.bf16 %v4091, %v4090
        %v4108 = vld [vmem:[#allocation4 + $0x1c0] sm:$0xf]
        %v4109 = vld [vmem:[#allocation4 + $0x1c4] sm:$0xf]
        %v4110 = vld [vmem:[#allocation4 + $0x1c8] sm:$0xf]
        %v4111 = vld [vmem:[#allocation4 + $0x1cc] sm:$0xf]
        %v4112 = vld [vmem:[#allocation4 + $0x1d0] sm:$0xf]
        %v4113 = vld [vmem:[#allocation4 + $0x1d4] sm:$0xf]
        %v4114 = vld [vmem:[#allocation4 + $0x1d8] sm:$0xf]
        %v4115 = vld [vmem:[#allocation4 + $0x1dc] sm:$0xf]
        %v4116 = vld [vmem:[#allocation4 + $0x1e0] sm:$0xf]
        %v4117 = vld [vmem:[#allocation4 + $0x1e4] sm:$0xf]
        %v4118 = vld [vmem:[#allocation4 + $0x1e8] sm:$0xf]
        %v4119 = vld [vmem:[#allocation4 + $0x1ec] sm:$0xf]
        %v4120 = vld [vmem:[#allocation4 + $0x1f0] sm:$0xf]
        %v4121 = vld [vmem:[#allocation4 + $0x1f4] sm:$0xf]
        %v4122 = vld [vmem:[#allocation4 + $0x1f8] sm:$0xf]
        %v4123 = vld [vmem:[#allocation4 + $0x1fc] sm:$0xf]
        %v4140 = vunpack.c.l.b16 %v4108
        %v4141 = vunpack.c.l.b16 %v4109
        %v4142 = vunpack.c.l.b16 %v4110
        %v4143 = vunpack.c.l.b16 %v4111
        %v4144 = vunpack.c.l.b16 %v4112
        %v4145 = vunpack.c.l.b16 %v4113
        %v4146 = vunpack.c.l.b16 %v4114
        %v4147 = vunpack.c.l.b16 %v4115
        %v4148 = vunpack.c.l.b16 %v4116
        %v4149 = vunpack.c.l.b16 %v4117
        %v4150 = vunpack.c.l.b16 %v4118
        %v4151 = vunpack.c.l.b16 %v4119
        %v4152 = vunpack.c.l.b16 %v4120
        %v4153 = vunpack.c.l.b16 %v4121
        %v4154 = vunpack.c.l.b16 %v4122
        %v4155 = vunpack.c.l.b16 %v4123
        %v4156 = vpack.c.b16 %v4141, %v4140
        %v4157 = vpack.c.b16 %v4143, %v4142
        %v4158 = vpack.c.b16 %v4145, %v4144
        %v4159 = vpack.c.b16 %v4147, %v4146
        %v4160 = vpack.c.b16 %v4149, %v4148
        %v4161 = vpack.c.b16 %v4151, %v4150
        %v4162 = vpack.c.b16 %v4153, %v4152
        %v4163 = vpack.c.b16 %v4155, %v4154
        %4172 = vmatpush.bf16.msra.mxu0 %v4163
        %4173 = vmatpush.bf16.msra.mxu0 %v4162
        %4174 = vmatpush.bf16.msra.mxu0 %v4161
        %4175 = vmatpush.bf16.msra.mxu0 %v4160
        %4176 = vmatpush.bf16.msra.mxu0 %v4159
        %4177 = vmatpush.bf16.msra.mxu0 %v4158
        %4178 = vmatpush.bf16.msra.mxu0 %v4157
        %4179 = vmatpush.bf16.msra.mxu0 %v4156
        %4180 = vmatmul.bf16.gmra.mxu0 %v4092
        %v4181 = vpop.f32.mrf.mxu0
        %v4182 = vadd.f32 0.0, %v4181
        %v4183 = vpop.f32.mrf.mxu0
        %v4184 = vadd.f32 0.0, %v4183
        %4185 = vmatmul.bf16.gmra.mxu0 %v4093
        %v4186 = vpop.f32.mrf.mxu0
        %v4187 = vadd.f32 0.0, %v4186
        %v4188 = vpop.f32.mrf.mxu0
        %v4189 = vadd.f32 0.0, %v4188
        %4190 = vmatmul.bf16.gmra.mxu0 %v4094
        %v4191 = vpop.f32.mrf.mxu0
        %v4192 = vadd.f32 0.0, %v4191
        %v4193 = vpop.f32.mrf.mxu0
        %v4194 = vadd.f32 0.0, %v4193
        %4195 = vmatmul.bf16.gmra.mxu0 %v4095
        %v4196 = vpop.f32.mrf.mxu0
        %v4197 = vadd.f32 0.0, %v4196
        %v4198 = vpop.f32.mrf.mxu0
        %v4199 = vadd.f32 0.0, %v4198
        %4200 = vmatmul.bf16.gmra.mxu0 %v4096
        %v4201 = vpop.f32.mrf.mxu0
        %v4202 = vadd.f32 0.0, %v4201
        %v4203 = vpop.f32.mrf.mxu0
        %v4204 = vadd.f32 0.0, %v4203
        %4205 = vmatmul.bf16.gmra.mxu0 %v4097
        %v4206 = vpop.f32.mrf.mxu0
        %v4207 = vadd.f32 0.0, %v4206
        %v4208 = vpop.f32.mrf.mxu0
        %v4209 = vadd.f32 0.0, %v4208
        %4210 = vmatmul.bf16.gmra.mxu0 %v4098
        %v4211 = vpop.f32.mrf.mxu0
        %v4212 = vadd.f32 0.0, %v4211
        %v4213 = vpop.f32.mrf.mxu0
        %v4214 = vadd.f32 0.0, %v4213
        %4215 = vmatmul.bf16.gmra.mxu0 %v4099
        %v4216 = vpop.f32.mrf.mxu0
        %v4217 = vadd.f32 0.0, %v4216
        %v4218 = vpop.f32.mrf.mxu0
        %v4219 = vadd.f32 0.0, %v4218
        %4220 = vmatmul.bf16.gmra.mxu0 %v4100
        %v4221 = vpop.f32.mrf.mxu0
        %v4222 = vadd.f32 0.0, %v4221
        %v4223 = vpop.f32.mrf.mxu0
        %v4224 = vadd.f32 0.0, %v4223
        %4225 = vmatmul.bf16.gmra.mxu0 %v4101
        %v4226 = vpop.f32.mrf.mxu0
        %v4227 = vadd.f32 0.0, %v4226
        %v4228 = vpop.f32.mrf.mxu0
        %v4229 = vadd.f32 0.0, %v4228
        %4230 = vmatmul.bf16.gmra.mxu0 %v4102
        %v4231 = vpop.f32.mrf.mxu0
        %v4232 = vadd.f32 0.0, %v4231
        %v4233 = vpop.f32.mrf.mxu0
        %v4234 = vadd.f32 0.0, %v4233
        %4235 = vmatmul.bf16.gmra.mxu0 %v4103
        %v4236 = vpop.f32.mrf.mxu0
        %v4237 = vadd.f32 0.0, %v4236
        %v4238 = vpop.f32.mrf.mxu0
        %v4239 = vadd.f32 0.0, %v4238
        %4240 = vmatmul.bf16.gmra.mxu0 %v4104
        %v4241 = vpop.f32.mrf.mxu0
        %v4242 = vadd.f32 0.0, %v4241
        %v4243 = vpop.f32.mrf.mxu0
        %v4244 = vadd.f32 0.0, %v4243
        %4245 = vmatmul.bf16.gmra.mxu0 %v4105
        %v4246 = vpop.f32.mrf.mxu0
        %v4247 = vadd.f32 0.0, %v4246
        %v4248 = vpop.f32.mrf.mxu0
        %v4249 = vadd.f32 0.0, %v4248
        %4250 = vmatmul.bf16.gmra.mxu0 %v4106
        %v4251 = vpop.f32.mrf.mxu0
        %v4252 = vadd.f32 0.0, %v4251
        %v4253 = vpop.f32.mrf.mxu0
        %v4254 = vadd.f32 0.0, %v4253
        %4255 = vmatmul.bf16.gmra.mxu0 %v4107
        %v4256 = vpop.f32.mrf.mxu0
        %v4257 = vadd.f32 0.0, %v4256
        %v4258 = vpop.f32.mrf.mxu0
        %v4259 = vadd.f32 0.0, %v4258
        %4260 = vdwg.mxu0
        %v4261 = vadd.f32 %v4028, %v4182
        %v4262 = vadd.f32 %v4029, %v4184
        %v4263 = vadd.f32 %v4030, %v4187
        %v4264 = vadd.f32 %v4031, %v4189
        %v4265 = vadd.f32 %v4032, %v4192
        %v4266 = vadd.f32 %v4033, %v4194
        %v4267 = vadd.f32 %v4034, %v4197
        %v4268 = vadd.f32 %v4035, %v4199
        %v4269 = vadd.f32 %v4036, %v4202
        %v4270 = vadd.f32 %v4037, %v4204
        %v4271 = vadd.f32 %v4038, %v4207
        %v4272 = vadd.f32 %v4039, %v4209
        %v4273 = vadd.f32 %v4040, %v4212
        %v4274 = vadd.f32 %v4041, %v4214
        %v4275 = vadd.f32 %v4042, %v4217
        %v4276 = vadd.f32 %v4043, %v4219
        %v4277 = vadd.f32 %v4044, %v4222
        %v4278 = vadd.f32 %v4045, %v4224
        %v4279 = vadd.f32 %v4046, %v4227
        %v4280 = vadd.f32 %v4047, %v4229
        %v4281 = vadd.f32 %v4048, %v4232
        %v4282 = vadd.f32 %v4049, %v4234
        %v4283 = vadd.f32 %v4050, %v4237
        %v4284 = vadd.f32 %v4051, %v4239
        %v4285 = vadd.f32 %v4052, %v4242
        %v4286 = vadd.f32 %v4053, %v4244
        %v4287 = vadd.f32 %v4054, %v4247
        %v4288 = vadd.f32 %v4055, %v4249
        %v4289 = vadd.f32 %v4056, %v4252
        %v4290 = vadd.f32 %v4057, %v4254
        %v4291 = vadd.f32 %v4058, %v4257
        %v4292 = vadd.f32 %v4059, %v4259
        %v4293 = vld [vmem:[%s3826 + $0x2] sm:$0xff]
        %v4294 = vld [vmem:[%s3826 + $0xa] sm:$0xff]
        %v4295 = vld [vmem:[%s3826 + $0x1a] sm:$0xff]
        %v4296 = vld [vmem:[%s3826 + $0x22] sm:$0xff]
        %v4297 = vld [vmem:[%s3826 + $0x32] sm:$0xff]
        %v4298 = vld [vmem:[%s3826 + $0x3a] sm:$0xff]
        %v4299 = vld [vmem:[%s3826 + $0x4a] sm:$0xff]
        %v4300 = vld [vmem:[%s3826 + $0x52] sm:$0xff]
        %v4301 = vld [vmem:[%s3826 + $0x62] sm:$0xff]
        %v4302 = vld [vmem:[%s3826 + $0x6a] sm:$0xff]
        %v4303 = vld [vmem:[%s3826 + $0x7a] sm:$0xff]
        %v4304 = vld [vmem:[%s3826 + $0x82] sm:$0xff]
        %v4305 = vld [vmem:[%s3826 + $0x92] sm:$0xff]
        %v4306 = vld [vmem:[%s3826 + $0x9a] sm:$0xff]
        %v4307 = vld [vmem:[%s3826 + $0xaa] sm:$0xff]
        %v4308 = vld [vmem:[%s3826 + $0xb2] sm:$0xff]
        %v4309 = vld [vmem:[%s3826 + $0xc2] sm:$0xff]
        %v4310 = vld [vmem:[%s3826 + $0xca] sm:$0xff]
        %v4311 = vld [vmem:[%s3826 + $0xda] sm:$0xff]
        %v4312 = vld [vmem:[%s3826 + $0xe2] sm:$0xff]
        %v4313 = vld [vmem:[%s3826 + $0xf2] sm:$0xff]
        %v4314 = vld [vmem:[%s3826 + $0xfa] sm:$0xff]
        %v4315 = vld [vmem:[%s3826 + $0x10a] sm:$0xff]
        %v4316 = vld [vmem:[%s3826 + $0x112] sm:$0xff]
        %v4317 = vld [vmem:[%s3826 + $0x122] sm:$0xff]
        %v4318 = vld [vmem:[%s3826 + $0x12a] sm:$0xff]
        %v4319 = vld [vmem:[%s3826 + $0x13a] sm:$0xff]
        %v4320 = vld [vmem:[%s3826 + $0x142] sm:$0xff]
        %v4321 = vld [vmem:[%s3826 + $0x152] sm:$0xff]
        %v4322 = vld [vmem:[%s3826 + $0x15a] sm:$0xff]
        %v4323 = vld [vmem:[%s3826 + $0x16a] sm:$0xff]
        %v4324 = vld [vmem:[%s3826 + $0x172] sm:$0xff]
        %v4325 = vpack.c.bf16 %v4294, %v4293
        %v4326 = vpack.c.bf16 %v4296, %v4295
        %v4327 = vpack.c.bf16 %v4298, %v4297
        %v4328 = vpack.c.bf16 %v4300, %v4299
        %v4329 = vpack.c.bf16 %v4302, %v4301
        %v4330 = vpack.c.bf16 %v4304, %v4303
        %v4331 = vpack.c.bf16 %v4306, %v4305
        %v4332 = vpack.c.bf16 %v4308, %v4307
        %v4333 = vpack.c.bf16 %v4310, %v4309
        %v4334 = vpack.c.bf16 %v4312, %v4311
        %v4335 = vpack.c.bf16 %v4314, %v4313
        %v4336 = vpack.c.bf16 %v4316, %v4315
        %v4337 = vpack.c.bf16 %v4318, %v4317
        %v4338 = vpack.c.bf16 %v4320, %v4319
        %v4339 = vpack.c.bf16 %v4322, %v4321
        %v4340 = vpack.c.bf16 %v4324, %v4323
        %v4341 = vld [vmem:[#allocation4 + $0x200] sm:$0xf]
        %v4342 = vld [vmem:[#allocation4 + $0x204] sm:$0xf]
        %v4343 = vld [vmem:[#allocation4 + $0x208] sm:$0xf]
        %v4344 = vld [vmem:[#allocation4 + $0x20c] sm:$0xf]
        %v4345 = vld [vmem:[#allocation4 + $0x210] sm:$0xf]
        %v4346 = vld [vmem:[#allocation4 + $0x214] sm:$0xf]
        %v4347 = vld [vmem:[#allocation4 + $0x218] sm:$0xf]
        %v4348 = vld [vmem:[#allocation4 + $0x21c] sm:$0xf]
        %v4349 = vld [vmem:[#allocation4 + $0x220] sm:$0xf]
        %v4350 = vld [vmem:[#allocation4 + $0x224] sm:$0xf]
        %v4351 = vld [vmem:[#allocation4 + $0x228] sm:$0xf]
        %v4352 = vld [vmem:[#allocation4 + $0x22c] sm:$0xf]
        %v4353 = vld [vmem:[#allocation4 + $0x230] sm:$0xf]
        %v4354 = vld [vmem:[#allocation4 + $0x234] sm:$0xf]
        %v4355 = vld [vmem:[#allocation4 + $0x238] sm:$0xf]
        %v4356 = vld [vmem:[#allocation4 + $0x23c] sm:$0xf]
        %v4373 = vunpack.c.l.b16 %v4341
        %v4374 = vunpack.c.l.b16 %v4342
        %v4375 = vunpack.c.l.b16 %v4343
        %v4376 = vunpack.c.l.b16 %v4344
        %v4377 = vunpack.c.l.b16 %v4345
        %v4378 = vunpack.c.l.b16 %v4346
        %v4379 = vunpack.c.l.b16 %v4347
        %v4380 = vunpack.c.l.b16 %v4348
        %v4381 = vunpack.c.l.b16 %v4349
        %v4382 = vunpack.c.l.b16 %v4350
        %v4383 = vunpack.c.l.b16 %v4351
        %v4384 = vunpack.c.l.b16 %v4352
        %v4385 = vunpack.c.l.b16 %v4353
        %v4386 = vunpack.c.l.b16 %v4354
        %v4387 = vunpack.c.l.b16 %v4355
        %v4388 = vunpack.c.l.b16 %v4356
        %v4389 = vpack.c.b16 %v4374, %v4373
        %v4390 = vpack.c.b16 %v4376, %v4375
        %v4391 = vpack.c.b16 %v4378, %v4377
        %v4392 = vpack.c.b16 %v4380, %v4379
        %v4393 = vpack.c.b16 %v4382, %v4381
        %v4394 = vpack.c.b16 %v4384, %v4383
        %v4395 = vpack.c.b16 %v4386, %v4385
        %v4396 = vpack.c.b16 %v4388, %v4387
        %4405 = vmatpush.bf16.msra.mxu0 %v4396
        %4406 = vmatpush.bf16.msra.mxu0 %v4395
        %4407 = vmatpush.bf16.msra.mxu0 %v4394
        %4408 = vmatpush.bf16.msra.mxu0 %v4393
        %4409 = vmatpush.bf16.msra.mxu0 %v4392
        %4410 = vmatpush.bf16.msra.mxu0 %v4391
        %4411 = vmatpush.bf16.msra.mxu0 %v4390
        %4412 = vmatpush.bf16.msra.mxu0 %v4389
        %4413 = vmatmul.bf16.gmra.mxu0 %v4325
        %v4414 = vpop.f32.mrf.mxu0
        %v4415 = vadd.f32 0.0, %v4414
        %v4416 = vpop.f32.mrf.mxu0
        %v4417 = vadd.f32 0.0, %v4416
        %4418 = vmatmul.bf16.gmra.mxu0 %v4326
        %v4419 = vpop.f32.mrf.mxu0
        %v4420 = vadd.f32 0.0, %v4419
        %v4421 = vpop.f32.mrf.mxu0
        %v4422 = vadd.f32 0.0, %v4421
        %4423 = vmatmul.bf16.gmra.mxu0 %v4327
        %v4424 = vpop.f32.mrf.mxu0
        %v4425 = vadd.f32 0.0, %v4424
        %v4426 = vpop.f32.mrf.mxu0
        %v4427 = vadd.f32 0.0, %v4426
        %4428 = vmatmul.bf16.gmra.mxu0 %v4328
        %v4429 = vpop.f32.mrf.mxu0
        %v4430 = vadd.f32 0.0, %v4429
        %v4431 = vpop.f32.mrf.mxu0
        %v4432 = vadd.f32 0.0, %v4431
        %4433 = vmatmul.bf16.gmra.mxu0 %v4329
        %v4434 = vpop.f32.mrf.mxu0
        %v4435 = vadd.f32 0.0, %v4434
        %v4436 = vpop.f32.mrf.mxu0
        %v4437 = vadd.f32 0.0, %v4436
        %4438 = vmatmul.bf16.gmra.mxu0 %v4330
        %v4439 = vpop.f32.mrf.mxu0
        %v4440 = vadd.f32 0.0, %v4439
        %v4441 = vpop.f32.mrf.mxu0
        %v4442 = vadd.f32 0.0, %v4441
        %4443 = vmatmul.bf16.gmra.mxu0 %v4331
        %v4444 = vpop.f32.mrf.mxu0
        %v4445 = vadd.f32 0.0, %v4444
        %v4446 = vpop.f32.mrf.mxu0
        %v4447 = vadd.f32 0.0, %v4446
        %4448 = vmatmul.bf16.gmra.mxu0 %v4332
        %v4449 = vpop.f32.mrf.mxu0
        %v4450 = vadd.f32 0.0, %v4449
        %v4451 = vpop.f32.mrf.mxu0
        %v4452 = vadd.f32 0.0, %v4451
        %4453 = vmatmul.bf16.gmra.mxu0 %v4333
        %v4454 = vpop.f32.mrf.mxu0
        %v4455 = vadd.f32 0.0, %v4454
        %v4456 = vpop.f32.mrf.mxu0
        %v4457 = vadd.f32 0.0, %v4456
        %4458 = vmatmul.bf16.gmra.mxu0 %v4334
        %v4459 = vpop.f32.mrf.mxu0
        %v4460 = vadd.f32 0.0, %v4459
        %v4461 = vpop.f32.mrf.mxu0
        %v4462 = vadd.f32 0.0, %v4461
        %4463 = vmatmul.bf16.gmra.mxu0 %v4335
        %v4464 = vpop.f32.mrf.mxu0
        %v4465 = vadd.f32 0.0, %v4464
        %v4466 = vpop.f32.mrf.mxu0
        %v4467 = vadd.f32 0.0, %v4466
        %4468 = vmatmul.bf16.gmra.mxu0 %v4336
        %v4469 = vpop.f32.mrf.mxu0
        %v4470 = vadd.f32 0.0, %v4469
        %v4471 = vpop.f32.mrf.mxu0
        %v4472 = vadd.f32 0.0, %v4471
        %4473 = vmatmul.bf16.gmra.mxu0 %v4337
        %v4474 = vpop.f32.mrf.mxu0
        %v4475 = vadd.f32 0.0, %v4474
        %v4476 = vpop.f32.mrf.mxu0
        %v4477 = vadd.f32 0.0, %v4476
        %4478 = vmatmul.bf16.gmra.mxu0 %v4338
        %v4479 = vpop.f32.mrf.mxu0
        %v4480 = vadd.f32 0.0, %v4479
        %v4481 = vpop.f32.mrf.mxu0
        %v4482 = vadd.f32 0.0, %v4481
        %4483 = vmatmul.bf16.gmra.mxu0 %v4339
        %v4484 = vpop.f32.mrf.mxu0
        %v4485 = vadd.f32 0.0, %v4484
        %v4486 = vpop.f32.mrf.mxu0
        %v4487 = vadd.f32 0.0, %v4486
        %4488 = vmatmul.bf16.gmra.mxu0 %v4340
        %v4489 = vpop.f32.mrf.mxu0
        %v4490 = vadd.f32 0.0, %v4489
        %v4491 = vpop.f32.mrf.mxu0
        %v4492 = vadd.f32 0.0, %v4491
        %4493 = vdwg.mxu0
        %v4494 = vadd.f32 %v4261, %v4415
        %v4495 = vadd.f32 %v4262, %v4417
        %v4496 = vadd.f32 %v4263, %v4420
        %v4497 = vadd.f32 %v4264, %v4422
        %v4498 = vadd.f32 %v4265, %v4425
        %v4499 = vadd.f32 %v4266, %v4427
        %v4500 = vadd.f32 %v4267, %v4430
        %v4501 = vadd.f32 %v4268, %v4432
        %v4502 = vadd.f32 %v4269, %v4435
        %v4503 = vadd.f32 %v4270, %v4437
        %v4504 = vadd.f32 %v4271, %v4440
        %v4505 = vadd.f32 %v4272, %v4442
        %v4506 = vadd.f32 %v4273, %v4445
        %v4507 = vadd.f32 %v4274, %v4447
        %v4508 = vadd.f32 %v4275, %v4450
        %v4509 = vadd.f32 %v4276, %v4452
        %v4510 = vadd.f32 %v4277, %v4455
        %v4511 = vadd.f32 %v4278, %v4457
        %v4512 = vadd.f32 %v4279, %v4460
        %v4513 = vadd.f32 %v4280, %v4462
        %v4514 = vadd.f32 %v4281, %v4465
        %v4515 = vadd.f32 %v4282, %v4467
        %v4516 = vadd.f32 %v4283, %v4470
        %v4517 = vadd.f32 %v4284, %v4472
        %v4518 = vadd.f32 %v4285, %v4475
        %v4519 = vadd.f32 %v4286, %v4477
        %v4520 = vadd.f32 %v4287, %v4480
        %v4521 = vadd.f32 %v4288, %v4482
        %v4522 = vadd.f32 %v4289, %v4485
        %v4523 = vadd.f32 %v4290, %v4487
        %v4524 = vadd.f32 %v4291, %v4490
        %v4525 = vadd.f32 %v4292, %v4492
        %v4526 = vld [vmem:[%s4] sm:$0x1]
        %v4528 = vperm.slane %v4526, 0
        %v4530 = vadd.f32 %v4494, %v4528
        %v4531 = vadd.f32 %v4495, %v4528
        %v4532 = vadd.f32 %v4496, %v4528
        %v4533 = vadd.f32 %v4497, %v4528
        %v4534 = vadd.f32 %v4498, %v4528
        %v4535 = vadd.f32 %v4499, %v4528
        %v4536 = vadd.f32 %v4500, %v4528
        %v4537 = vadd.f32 %v4501, %v4528
        %v4538 = vadd.f32 %v4502, %v4528
        %v4539 = vadd.f32 %v4503, %v4528
        %v4540 = vadd.f32 %v4504, %v4528
        %v4541 = vadd.f32 %v4505, %v4528
        %v4542 = vadd.f32 %v4506, %v4528
        %v4543 = vadd.f32 %v4507, %v4528
        %v4544 = vadd.f32 %v4508, %v4528
        %v4545 = vadd.f32 %v4509, %v4528
        %v4546 = vadd.f32 %v4510, %v4528
        %v4547 = vadd.f32 %v4511, %v4528
        %v4548 = vadd.f32 %v4512, %v4528
        %v4549 = vadd.f32 %v4513, %v4528
        %v4550 = vadd.f32 %v4514, %v4528
        %v4551 = vadd.f32 %v4515, %v4528
        %v4552 = vadd.f32 %v4516, %v4528
        %v4553 = vadd.f32 %v4517, %v4528
        %v4554 = vadd.f32 %v4518, %v4528
        %v4555 = vadd.f32 %v4519, %v4528
        %v4556 = vadd.f32 %v4520, %v4528
        %v4557 = vadd.f32 %v4521, %v4528
        %v4558 = vadd.f32 %v4522, %v4528
        %v4559 = vadd.f32 %v4523, %v4528
        %v4560 = vadd.f32 %v4524, %v4528
        %v4561 = vadd.f32 %v4525, %v4528
        %v4562 = vmax.f32 %v4530, 0.0
        %v4563 = vmax.f32 %v4531, 0.0
        %v4564 = vmax.f32 %v4532, 0.0
        %v4565 = vmax.f32 %v4533, 0.0
        %v4566 = vmax.f32 %v4534, 0.0
        %v4567 = vmax.f32 %v4535, 0.0
        %v4568 = vmax.f32 %v4536, 0.0
        %v4569 = vmax.f32 %v4537, 0.0
        %v4570 = vmax.f32 %v4538, 0.0
        %v4571 = vmax.f32 %v4539, 0.0
        %v4572 = vmax.f32 %v4540, 0.0
        %v4573 = vmax.f32 %v4541, 0.0
        %v4574 = vmax.f32 %v4542, 0.0
        %v4575 = vmax.f32 %v4543, 0.0
        %v4576 = vmax.f32 %v4544, 0.0
        %v4577 = vmax.f32 %v4545, 0.0
        %v4578 = vmax.f32 %v4546, 0.0
        %v4579 = vmax.f32 %v4547, 0.0
        %v4580 = vmax.f32 %v4548, 0.0
        %v4581 = vmax.f32 %v4549, 0.0
        %v4582 = vmax.f32 %v4550, 0.0
        %v4583 = vmax.f32 %v4551, 0.0
        %v4584 = vmax.f32 %v4552, 0.0
        %v4585 = vmax.f32 %v4553, 0.0
        %v4586 = vmax.f32 %v4554, 0.0
        %v4587 = vmax.f32 %v4555, 0.0
        %v4588 = vmax.f32 %v4556, 0.0
        %v4589 = vmax.f32 %v4557, 0.0
        %v4590 = vmax.f32 %v4558, 0.0
        %v4591 = vmax.f32 %v4559, 0.0
        %v4592 = vmax.f32 %v4560, 0.0
        %v4593 = vmax.f32 %v4561, 0.0
        %4594 = vst [vmem:[%s234] sm:$0xff] %v4562
        %4595 = vst [vmem:[%s234 + $0x8] sm:$0xff] %v4563
        %4596 = vst [vmem:[%s234 + $0x10] sm:$0xff] %v4564
        %4597 = vst [vmem:[%s234 + $0x18] sm:$0xff] %v4565
        %4598 = vst [vmem:[%s234 + $0x20] sm:$0xff] %v4566
        %4599 = vst [vmem:[%s234 + $0x28] sm:$0xff] %v4567
        %4600 = vst [vmem:[%s234 + $0x30] sm:$0xff] %v4568
        %4601 = vst [vmem:[%s234 + $0x38] sm:$0xff] %v4569
        %4602 = vst [vmem:[%s234 + $0x40] sm:$0xff] %v4570
        %4603 = vst [vmem:[%s234 + $0x48] sm:$0xff] %v4571
        %4604 = vst [vmem:[%s234 + $0x50] sm:$0xff] %v4572
        %4605 = vst [vmem:[%s234 + $0x58] sm:$0xff] %v4573
        %4606 = vst [vmem:[%s234 + $0x60] sm:$0xff] %v4574
        %4607 = vst [vmem:[%s234 + $0x68] sm:$0xff] %v4575
        %4608 = vst [vmem:[%s234 + $0x70] sm:$0xff] %v4576
        %4609 = vst [vmem:[%s234 + $0x78] sm:$0xff] %v4577
        %4610 = vst [vmem:[%s234 + $0x80] sm:$0xff] %v4578
        %4611 = vst [vmem:[%s234 + $0x88] sm:$0xff] %v4579
        %4612 = vst [vmem:[%s234 + $0x90] sm:$0xff] %v4580
        %4613 = vst [vmem:[%s234 + $0x98] sm:$0xff] %v4581
        %4614 = vst [vmem:[%s234 + $0xa0] sm:$0xff] %v4582
        %4615 = vst [vmem:[%s234 + $0xa8] sm:$0xff] %v4583
        %4616 = vst [vmem:[%s234 + $0xb0] sm:$0xff] %v4584
        %4617 = vst [vmem:[%s234 + $0xb8] sm:$0xff] %v4585
        %4618 = vst [vmem:[%s234 + $0xc0] sm:$0xff] %v4586
        %4619 = vst [vmem:[%s234 + $0xc8] sm:$0xff] %v4587
        %4620 = vst [vmem:[%s234 + $0xd0] sm:$0xff] %v4588
        %4621 = vst [vmem:[%s234 + $0xd8] sm:$0xff] %v4589
        %4622 = vst [vmem:[%s234 + $0xe0] sm:$0xff] %v4590
        %4623 = vst [vmem:[%s234 + $0xe8] sm:$0xff] %v4591
        %4624 = vst [vmem:[%s234 + $0xf0] sm:$0xff] %v4592
        %4625 = vst [vmem:[%s234 + $0xf8] sm:$0xff] %v4593
        %s4626 = sand.u32 %s138, 1
        %s4627 = scalar_lea.sflag [#allocation6], %s4626
        %s4628 = sand.u32 %s138, 1
        %s4629 = smul.addr %s4628, 256
        %s4630 = scalar_lea.vmem [#allocation7], %s4629
        // Predicated region
        $region45: #{tpu_custom_call.1} parent=39 // pred_check
          %p4631 = pneg %p148
        $region46: #{tpu_custom_call.1} parent=39 // pred_check_branch
          %4633 = sbr.rel (%p4631) target = $region48
        $region47: #{tpu_custom_call.1} parent=39 // pred_region
          %4635 = vsyncadd %s4627, 0
          %s4636 = smul.addr %s20, 32
          %s4637 = smul.addr %s4636, 8
          %s4638 = scalar_lea.hbm %s5, %s4637
          %s4639 = sshll.u32 %s4630, 4
          %s4640 = int_to_ptr.vmem [resolvable:$true] %s4639
          %s4641 = sshll.u32 %s4638, 4
          %s4642 = int_to_ptr.hbm [resolvable:$true] %s4641
          %4647 = dma.vmem_to_hbm [thread:$0]  %s4640, 4096, %s4642, %s4627, 128, 128, 8
        $region48: #{tpu_custom_call.1} parent=39 // pred_fallthru
          _
      $region40: #{tpu_custom_call.1} parent=5 // pred_fallthru
        _
      %p4648 = scmp.le.s32.totalorder 2, %s15
      // Predicated region
      $region49: #{tpu_custom_call.1} parent=5 // pred_check
        %p4649 = pneg %p4648
      $region50: #{tpu_custom_call.1} parent=5 // pred_check_branch
        %4651 = sbr.rel (%p4649) target = $region52
      $region51: #{tpu_custom_call.1} parent=5 // pred_region
        %s4652 = ssub.s32 %s15, 2
        // Predicated region
        $region53: #{tpu_custom_call.1} parent=51 // pred_check
          %p4653 = pneg %p154
        $region54: #{tpu_custom_call.1} parent=51 // pred_check_branch
          %4655 = sbr.rel (%p4653) target = $region56
        $region55: #{tpu_custom_call.1} parent=51 // pred_region
          %s4656 = sand.u32 %s139, 1
          %s4657 = scalar_lea.sflag [#allocation6], %s4656
          %s4658 = sand.u32 %s139, 1
          %s4659 = smul.addr %s4658, 256
          %s4660 = scalar_lea.vmem [#allocation7], %s4659
          %4662 = dma.done %s4657, 4096
        $region56: #{tpu_custom_call.1} parent=51 // pred_fallthru
          _
      $region52: #{tpu_custom_call.1} parent=5 // pred_fallthru
        _
    $region6: #{tpu_custom_call.1} parent=1 // loop_footer
      %s19 = sadd.s32 1, %s15
    $region7: #{tpu_custom_call.1} parent=1 // loop_footer_branch
      %14 = sbr.rel target = $region3
    $region8: #{tpu_custom_call.1} parent=1 // loop_exit
      _
    %4663 = vsyncpa [#allocation5], 1
    %s4664 = scalar_lea.sflag [#allocation5], 1
    %4665 = vsyncpa %s4664, 1
    %4666 = vsyncpa [#allocation6], 1
    %s4667 = scalar_lea.sflag [#allocation6], 1
    %4668 = vsyncpa %s4667, 1

</llo_original>
